<compile_context>
chip_gen: v7x
topology: tpu7x:2x2x1
jax: 0.10.0
libtpu: 0.0.40
codegen_flags: <defaults>
</compile_context>

<pallas_src>
import functools
import math

import jax
import jax.numpy as jnp
from jax.experimental import pallas as pl
from jax.experimental.pallas import tpu as pltpu


# ----------------------------- in-kernel helpers -----------------------------

def _ln(x, g, b, eps):
    mu = jnp.mean(x, axis=-1, keepdims=True)
    var = jnp.mean(jnp.square(x - mu), axis=-1, keepdims=True)
    return (x - mu) * jax.lax.rsqrt(var + eps) * g + b


# ----------------------------- fused encoder kernel -----------------------------
# grid = (B, L).  axis 0 (batch) is parallel, axis 1 (layer) is the carried loop.
# The per-batch activation [S, D] lives in a VMEM scratch across layer steps.

def _encoder_kernel(x0_ref, maskb_ref, embg_ref, embb_ref,
                    wqkv_ref, bqkv_ref, wo_ref, bo_ref, ln1g_ref, ln1b_ref,
                    w1_ref, b1_ref, w2_ref, b2_ref, ln2g_ref, ln2b_ref,
                    out_ref, h_sc, ctx_sc, *, H, Dh, eps):
    D = H * Dh
    l = pl.program_id(1)
    L = pl.num_programs(1)

    # layer 0: embedding LayerNorm fused here (initializes the carried activation)
    @pl.when(l == 0)
    def _():
        h_sc[...] = _ln(x0_ref[...].astype(jnp.float32),
                        embg_ref[...], embb_ref[...], eps)

    h = h_sc[...]                       # (S, D) f32, carried across layers
    bias = maskb_ref[0]                 # (1, S) additive mask bias

    # ---- fused QKV projection (bf16 MXU, f32 accumulate) ----
    qkv = jnp.dot(h.astype(jnp.bfloat16), wqkv_ref[0],
                  preferred_element_type=jnp.float32) + bqkv_ref[0]   # (S, 3D)

    # ---- multi-head attention, all heads in-kernel (no host transposes) ----
    scale = 1.0 / math.sqrt(Dh)
    for hh in range(H):
        qh = qkv[:, hh * Dh:(hh + 1) * Dh]
        kh = qkv[:, D + hh * Dh:D + (hh + 1) * Dh]
        vh = qkv[:, 2 * D + hh * Dh:2 * D + (hh + 1) * Dh]
        s = jnp.dot(qh, kh.T, preferred_element_type=jnp.float32) * scale + bias
        m = jnp.max(s, axis=-1, keepdims=True)
        p = jnp.exp(s - m)
        p = p * pl.reciprocal(jnp.sum(p, axis=-1, keepdims=True), approx=True)
        ctx_sc[:, hh * Dh:(hh + 1) * Dh] = jnp.dot(
            p, vh, preferred_element_type=jnp.float32)

    # ---- output projection + residual + LN (fused epilogue) ----
    attn = jnp.dot(ctx_sc[...].astype(jnp.bfloat16), wo_ref[0],
                   preferred_element_type=jnp.float32) + bo_ref[0]
    h1 = _ln(attn + h, ln1g_ref[0], ln1b_ref[0], eps)

    # ---- FFN (gelu) + residual + LN (fused epilogue) ----
    f = jnp.dot(h1.astype(jnp.bfloat16), w1_ref[0],
                preferred_element_type=jnp.float32) + b1_ref[0]
    # TODO(synk): DistilBERT uses exact-erf GELU; tanh approx differs by ~1e-3.
    f = jax.nn.gelu(f, approximate=True)
    f = jnp.dot(f.astype(jnp.bfloat16), w2_ref[0],
                preferred_element_type=jnp.float32) + b2_ref[0]
    h2 = _ln(f + h1, ln2g_ref[0], ln2b_ref[0], eps)

    h_sc[...] = h2                      # carry to next layer

    @pl.when(l == L - 1)
    def _():
        out_ref[...] = h2.astype(out_ref.dtype)


def encoder_pallas(x0, mask_bias, packed, *, B, S, cfg):
    D, F, L, H = cfg["hidden"], cfg["ffn"], cfg["layers"], cfg["heads"]
    Dh = D // H
    kernel = functools.partial(_encoder_kernel, H=H, Dh=Dh, eps=1e-12)
    lmap = lambda b, l: (l, 0, 0)       # per-layer stacked weights
    return pl.pallas_call(
        kernel,
        out_shape=jax.ShapeDtypeStruct((B * S, D), jnp.float32),
        grid=(B, L),
        in_specs=[
            pl.BlockSpec((S, D), lambda b, l: (b, 0)),          # x0 (embeddings)
            pl.BlockSpec((1, 1, S), lambda b, l: (b, 0, 0)),    # mask bias
            pl.BlockSpec((1, D), lambda b, l: (0, 0)),          # emb LN gamma
            pl.BlockSpec((1, D), lambda b, l: (0, 0)),          # emb LN beta
            pl.BlockSpec((1, D, 3 * D), lmap),                  # wqkv
            pl.BlockSpec((1, 1, 3 * D), lmap),                  # bqkv
            pl.BlockSpec((1, D, D), lmap),                      # wo
            pl.BlockSpec((1, 1, D), lmap),                      # bo
            pl.BlockSpec((1, 1, D), lmap),                      # ln1 gamma
            pl.BlockSpec((1, 1, D), lmap),                      # ln1 beta
            pl.BlockSpec((1, D, F), lmap),                      # w1
            pl.BlockSpec((1, 1, F), lmap),                      # b1
            pl.BlockSpec((1, F, D), lmap),                      # w2
            pl.BlockSpec((1, 1, D), lmap),                      # b2
            pl.BlockSpec((1, 1, D), lmap),                      # ln2 gamma
            pl.BlockSpec((1, 1, D), lmap),                      # ln2 beta
        ],
        out_specs=pl.BlockSpec((S, D), lambda b, l: (b, 0)),
        scratch_shapes=[pltpu.VMEM((S, D), jnp.float32),        # carried activation
                        pltpu.VMEM((S, D), jnp.float32)],       # attention context
        compiler_params=pltpu.CompilerParams(
            dimension_semantics=("parallel", "arbitrary")),
    )(x0, mask_bias, packed["emb_ln_g"], packed["emb_ln_b"],
      packed["wqkv"], packed["bqkv"], packed["wo"], packed["bo"],
      packed["ln1_g"], packed["ln1_b"], packed["w1"], packed["b1"],
      packed["w2"], packed["b2"], packed["ln2_g"], packed["ln2_b"])


# ----------------------------- fused classifier head -----------------------------
# pooled(CLS) -> pre_classifier -> ReLU -> classifier -> fc1 / fc2, all in one
# kernel; label / class dims are zero-padded to 128 so all outputs are lane-dense.

def _head_kernel(pooled_ref, prew_ref, preb_ref, clsw_ref, clsb_ref,
                 fc1w_ref, fc1b_ref, fc2w_ref, fc2b_ref, o1_ref, o2_ref):
    x = pooled_ref[...].astype(jnp.float32)
    x = jnp.dot(x.astype(jnp.bfloat16), prew_ref[...],
                preferred_element_type=jnp.float32) + preb_ref[...]
    x = jnp.maximum(x, 0.0)                                         # ReLU
    logits = jnp.dot(x.astype(jnp.bfloat16), clsw_ref[...],
                     preferred_element_type=jnp.float32) + clsb_ref[...]
    lb = logits.astype(jnp.bfloat16)
    o1_ref[...] = (jnp.dot(lb, fc1w_ref[...],
                           preferred_element_type=jnp.float32) + fc1b_ref[...]
                   ).astype(o1_ref.dtype)
    o2_ref[...] = (jnp.dot(lb, fc2w_ref[...],
                           preferred_element_type=jnp.float32) + fc2b_ref[...]
                   ).astype(o2_ref.dtype)


def head_pallas(pooled, packed):
    B, D = pooled.shape
    NLP = packed["cls_w"].shape[1]
    O1 = packed["fc1_w"].shape[1]
    O2 = packed["fc2_w"].shape[1]

    def full(shape):
        return pl.BlockSpec(shape, lambda i, _s=shape: tuple(0 for _ in _s))

    return pl.pallas_call(
        _head_kernel,
        out_shape=(jax.ShapeDtypeStruct((B, O1), jnp.float32),
                   jax.ShapeDtypeStruct((B, O2), jnp.float32)),
        grid=(1,),
        in_specs=[
            full((B, D)),
            full((D, D)), full((1, D)),
            full((D, NLP)), full((1, NLP)),
            full((NLP, O1)), full((1, O1)),
            full((NLP, O2)), full((1, O2)),
        ],
        out_specs=(full((B, O1)), full((B, O2))),
    )(pooled, packed["pre_w"], packed["pre_b"],
      packed["cls_w"], packed["cls_b"],
      packed["fc1_w"], packed["fc1_b"],
      packed["fc2_w"], packed["fc2_b"])


# ----------------------------- model definition -----------------------------

CFG = dict(
    vocab=100, max_pos=64, hidden=32, heads=4, ffn=64, layers=2,
    num_labels=4, num_classes1=100, num_classes2=90,
)


def _xavier_normal(key, fan_in, fan_out):
    std = math.sqrt(2.0 / (fan_in + fan_out))
    return std * jax.random.normal(key, (fan_in, fan_out), dtype=jnp.float32)


def init_params(key, cfg):
    D, F, L = cfg["hidden"], cfg["ffn"], cfg["layers"]
    ks = iter(jax.random.split(key, 256))

    def nrm(shape, std=0.02):
        return std * jax.random.normal(next(ks), shape, dtype=jnp.float32)

    p = {
        "word_emb": nrm((cfg["vocab"], D)),
        "pos_emb": nrm((cfg["max_pos"], D)),
        "emb_ln_g": jnp.ones((D,), jnp.float32),
        "emb_ln_b": jnp.zeros((D,), jnp.float32),
        "layers": [],
        # classification head (DistilBertForSequenceClassification)
        "pre_w": nrm((D, D)), "pre_b": jnp.zeros((D,), jnp.float32),
        "cls_w": nrm((D, cfg["num_labels"])),
        "cls_b": jnp.zeros((cfg["num_labels"],), jnp.float32),
        # fc1 / fc2 heads: xavier_normal weights, bias filled with 0.01 (init_weights)
        "fc1_w": _xavier_normal(next(ks), cfg["num_labels"], cfg["num_classes1"]),
        "fc1_b": jnp.full((cfg["num_classes1"],), 0.01, jnp.float32),
        "fc2_w": _xavier_normal(next(ks), cfg["num_labels"], cfg["num_classes2"]),
        "fc2_b": jnp.full((cfg["num_classes2"],), 0.01, jnp.float32),
    }
    for _ in range(L):
        p["layers"].append({
            "wq": nrm((D, D)), "bq": jnp.zeros((D,), jnp.float32),
            "wk": nrm((D, D)), "bk": jnp.zeros((D,), jnp.float32),
            "wv": nrm((D, D)), "bv": jnp.zeros((D,), jnp.float32),
            "wo": nrm((D, D)), "bo": jnp.zeros((D,), jnp.float32),
            "ln1_g": jnp.ones((D,), jnp.float32), "ln1_b": jnp.zeros((D,), jnp.float32),
            "w1": nrm((D, F)), "b1": jnp.zeros((F,), jnp.float32),
            "w2": nrm((F, D)), "b2": jnp.zeros((D,), jnp.float32),
            "ln2_g": jnp.ones((D,), jnp.float32), "ln2_b": jnp.zeros((D,), jnp.float32),
        })
    return p


def _round_up(n, m=128):
    return ((n + m - 1) // m) * m


def pack_params(p, cfg):
    """Stack per-layer weights (layer axis indexed by the grid), cast matmul weights
    to bf16, and zero-pad head weights to lane-dense (multiple-of-128) widths."""
    D, F, L = cfg["hidden"], cfg["ffn"], cfg["layers"]
    NL = cfg["num_labels"]
    C1, C2 = cfg["num_classes1"], cfg["num_classes2"]
    NLP, C1P, C2P = _round_up(NL), _round_up(C1), _round_up(C2)

    def stack(name):
        return jnp.stack([lp[name] for lp in p["layers"]], axis=0)

    packed = {
        "word_emb": p["word_emb"],
        "pos_emb": p["pos_emb"],
        "emb_ln_g": p["emb_ln_g"].reshape(1, D),
        "emb_ln_b": p["emb_ln_b"].reshape(1, D),
        # fused QKV weight (L, D, 3D) in bf16; bias (L, 1, 3D) in f32
        "wqkv": jnp.concatenate([stack("wq"), stack("wk"), stack("wv")],
                                axis=-1).astype(jnp.bfloat16),
        "bqkv": jnp.concatenate([stack("bq"), stack("bk"), stack("bv")],
                                axis=-1).reshape(L, 1, 3 * D),
        "wo": stack("wo").astype(jnp.bfloat16),
        "bo": stack("bo").reshape(L, 1, D),
        "ln1_g": stack("ln1_g").reshape(L, 1, D),
        "ln1_b": stack("ln1_b").reshape(L, 1, D),
        "w1": stack("w1").astype(jnp.bfloat16),
        "b1": stack("b1").reshape(L, 1, F),
        "w2": stack("w2").astype(jnp.bfloat16),
        "b2": stack("b2").reshape(L, 1, D),
        "ln2_g": stack("ln2_g").reshape(L, 1, D),
        "ln2_b": stack("ln2_b").reshape(L, 1, D),
        # fused classifier head, padded lane-dense
        "pre_w": p["pre_w"].astype(jnp.bfloat16),
        "pre_b": p["pre_b"].reshape(1, D),
        "cls_w": jnp.zeros((D, NLP), jnp.float32).at[:, :NL]
                     .set(p["cls_w"]).astype(jnp.bfloat16),
        "cls_b": jnp.zeros((1, NLP), jnp.float32).at[0, :NL].set(p["cls_b"]),
        "fc1_w": jnp.zeros((NLP, C1P), jnp.float32).at[:NL, :C1]
                     .set(p["fc1_w"]).astype(jnp.bfloat16),
        "fc1_b": jnp.zeros((1, C1P), jnp.float32).at[0, :C1].set(p["fc1_b"]),
        "fc2_w": jnp.zeros((NLP, C2P), jnp.float32).at[:NL, :C2]
                     .set(p["fc2_w"]).astype(jnp.bfloat16),
        "fc2_b": jnp.zeros((1, C2P), jnp.float32).at[0, :C2].set(p["fc2_b"]),
    }
    return packed


def bert_classifier_forward(packed, input_ids, attention_mask, cfg=CFG):
    """Returns (out1, out2) exactly like BertClassifier.forward (labels=None path)."""
    B, S = input_ids.shape
    D = cfg["hidden"]

    # embeddings (gather stays in plain-JAX glue; trivially small lookup)
    h0 = jnp.take(packed["word_emb"], input_ids, axis=0) + packed["pos_emb"][:S][None]
    x0 = h0.reshape(B * S, D).astype(jnp.float32)
    # additive attention-mask bias, precomputed once per batch
    mask_bias = ((1.0 - attention_mask.astype(jnp.float32)) * -1e30).reshape(B, 1, S)

    h = encoder_pallas(x0, mask_bias, packed, B=B, S=S, cfg=cfg)     # (B*S, D)

    pooled = h.reshape(B, S, D)[:, 0, :]                             # CLS token (B, D)
    out1_p, out2_p = head_pallas(pooled, packed)                     # padded outputs
    return (out1_p[:, :cfg["num_classes1"]],
            out2_p[:, :cfg["num_classes2"]])


# ----------------------------------- main -----------------------------------

if __name__ == "__main__":
    key = jax.random.PRNGKey(0)
    k_param, k_ids = jax.random.split(key)

    B, S = 2, 8
    params = init_params(k_param, CFG)
    packed = pack_params(params, CFG)
    input_ids = jax.random.randint(k_ids, (B, S), 0, CFG["vocab"], dtype=jnp.int32)
    attention_mask = jnp.ones((B, S), dtype=jnp.int32)

    fwd = jax.jit(bert_classifier_forward)
    out1, out2 = fwd(packed, input_ids, attention_mask)
    jax.block_until_ready((out1, out2))

    assert out1.shape == (B, CFG["num_classes1"])
    assert out2.shape == (B, CFG["num_classes2"])
    assert jnp.all(jnp.isfinite(out1)) and jnp.all(jnp.isfinite(out2))
    print("KERNEL_OK")
</pallas_src>

<mosaic_0001>
module attributes {stable_mosaic.version = 11 : i64} {
  func.func @_head_kernel(%arg0: i32, %arg1: memref<2x32xf32, #tpu.memory_space<vmem>>, %arg2: memref<32x32xbf16, #tpu.memory_space<vmem>>, %arg3: memref<1x32xf32, #tpu.memory_space<vmem>>, %arg4: memref<32x128xbf16, #tpu.memory_space<vmem>>, %arg5: memref<1x128xf32, #tpu.memory_space<vmem>>, %arg6: memref<128x128xbf16, #tpu.memory_space<vmem>>, %arg7: memref<1x128xf32, #tpu.memory_space<vmem>>, %arg8: memref<128x128xbf16, #tpu.memory_space<vmem>>, %arg9: memref<1x128xf32, #tpu.memory_space<vmem>>, %arg10: memref<2x128xf32, #tpu.memory_space<vmem>>, %arg11: memref<2x128xf32, #tpu.memory_space<vmem>>) attributes {dimension_semantics = [#tpu.dimension_semantics<arbitrary>], iteration_bounds = array<i64: 1>, scalar_prefetch = 0 : i64, scratch_operands = 0 : i64, tpu.core_type = #tpu.core_type<tc>, window_params = [{pipeline_mode = #tpu.pipeline_mode<synchronous>, transform_indices = @transform_0, window_bounds = array<i64: 2, 32>}, {pipeline_mode = #tpu.pipeline_mode<synchronous>, transform_indices = @transform_1, window_bounds = array<i64: 32, 32>}, {pipeline_mode = #tpu.pipeline_mode<synchronous>, transform_indices = @transform_2, window_bounds = array<i64: 1, 32>}, {pipeline_mode = #tpu.pipeline_mode<synchronous>, transform_indices = @transform_3, window_bounds = array<i64: 32, 128>}, {pipeline_mode = #tpu.pipeline_mode<synchronous>, transform_indices = @transform_4, window_bounds = array<i64: 1, 128>}, {pipeline_mode = #tpu.pipeline_mode<synchronous>, transform_indices = @transform_5, window_bounds = array<i64: 128, 128>}, {pipeline_mode = #tpu.pipeline_mode<synchronous>, transform_indices = @transform_6, window_bounds = array<i64: 1, 128>}, {pipeline_mode = #tpu.pipeline_mode<synchronous>, transform_indices = @transform_7, window_bounds = array<i64: 128, 128>}, {pipeline_mode = #tpu.pipeline_mode<synchronous>, transform_indices = @transform_8, window_bounds = array<i64: 1, 128>}, {pipeline_mode = #tpu.pipeline_mode<synchronous>, transform_indices = @transform_9, window_bounds = array<i64: 2, 128>}, {pipeline_mode = #tpu.pipeline_mode<synchronous>, transform_indices = @transform_10, window_bounds = array<i64: 2, 128>}]} {
    %c0 = arith.constant 0 : index
    %c0_0 = arith.constant 0 : index
    %0 = vector.load %arg1[%c0, %c0_0] : memref<2x32xf32, #tpu.memory_space<vmem>>, vector<2x32xf32>
    %1 = arith.truncf %0 : vector<2x32xf32> to vector<2x32xbf16>
    %c0_1 = arith.constant 0 : index
    %c0_2 = arith.constant 0 : index
    %2 = vector.load %arg2[%c0_1, %c0_2] : memref<32x32xbf16, #tpu.memory_space<vmem>>, vector<32x32xbf16>
    %cst = arith.constant dense<0.000000e+00> : vector<2x32xf32>
    %3 = tpu.matmul %1, %2, %cst {dimension_numbers = #tpu.dot_dimension_numbers<[1], [0], [0], [1], [0, 0, 1, 1], [], []>} : vector<2x32xbf16>, vector<32x32xbf16>, vector<2x32xf32> -> vector<2x32xf32>
    %c0_3 = arith.constant 0 : index
    %c0_4 = arith.constant 0 : index
    %4 = vector.load %arg3[%c0_3, %c0_4] : memref<1x32xf32, #tpu.memory_space<vmem>>, vector<1x32xf32>
    %5 = vector.broadcast %4 : vector<1x32xf32> to vector<2x32xf32>
    %6 = arith.addf %3, %5 : vector<2x32xf32>
    %cst_5 = arith.constant 0.000000e+00 : f32
    %7 = vector.broadcast %cst_5 : f32 to vector<2x32xf32>
    %8 = arith.maximumf %6, %7 : vector<2x32xf32>
    %9 = arith.truncf %8 : vector<2x32xf32> to vector<2x32xbf16>
    %c0_6 = arith.constant 0 : index
    %c0_7 = arith.constant 0 : index
    %10 = vector.load %arg4[%c0_6, %c0_7] : memref<32x128xbf16, #tpu.memory_space<vmem>>, vector<32x128xbf16>
    %cst_8 = arith.constant dense<0.000000e+00> : vector<2x128xf32>
    %11 = tpu.matmul %9, %10, %cst_8 {dimension_numbers = #tpu.dot_dimension_numbers<[1], [0], [0], [1], [0, 0, 1, 1], [], []>} : vector<2x32xbf16>, vector<32x128xbf16>, vector<2x128xf32> -> vector<2x128xf32>
    %c0_9 = arith.constant 0 : index
    %c0_10 = arith.constant 0 : index
    %12 = vector.load %arg5[%c0_9, %c0_10] : memref<1x128xf32, #tpu.memory_space<vmem>>, vector<1x128xf32>
    %13 = vector.broadcast %12 : vector<1x128xf32> to vector<2x128xf32>
    %14 = arith.addf %11, %13 : vector<2x128xf32>
    %15 = arith.truncf %14 : vector<2x128xf32> to vector<2x128xbf16>
    %c0_11 = arith.constant 0 : index
    %c0_12 = arith.constant 0 : index
    %16 = vector.load %arg6[%c0_11, %c0_12] : memref<128x128xbf16, #tpu.memory_space<vmem>>, vector<128x128xbf16>
    %cst_13 = arith.constant dense<0.000000e+00> : vector<2x128xf32>
    %17 = tpu.matmul %15, %16, %cst_13 {dimension_numbers = #tpu.dot_dimension_numbers<[1], [0], [0], [1], [0, 0, 1, 1], [], []>} : vector<2x128xbf16>, vector<128x128xbf16>, vector<2x128xf32> -> vector<2x128xf32>
    %c0_14 = arith.constant 0 : index
    %c0_15 = arith.constant 0 : index
    %18 = vector.load %arg7[%c0_14, %c0_15] : memref<1x128xf32, #tpu.memory_space<vmem>>, vector<1x128xf32>
    %19 = vector.broadcast %18 : vector<1x128xf32> to vector<2x128xf32>
    %20 = arith.addf %17, %19 : vector<2x128xf32>
    %c0_16 = arith.constant 0 : index
    %c0_17 = arith.constant 0 : index
    %21 = vector.load %arg10[%c0_16, %c0_17] : memref<2x128xf32, #tpu.memory_space<vmem>>, vector<2x128xf32>
    tpu.vector_store %arg10[%c0_16, %c0_17], %20 {strides = array<i32>} : memref<2x128xf32, #tpu.memory_space<vmem>>, vector<2x128xf32>,
    %c0_18 = arith.constant 0 : index
    %c0_19 = arith.constant 0 : index
    %22 = vector.load %arg8[%c0_18, %c0_19] : memref<128x128xbf16, #tpu.memory_space<vmem>>, vector<128x128xbf16>
    %cst_20 = arith.constant dense<0.000000e+00> : vector<2x128xf32>
    %23 = tpu.matmul %15, %22, %cst_20 {dimension_numbers = #tpu.dot_dimension_numbers<[1], [0], [0], [1], [0, 0, 1, 1], [], []>} : vector<2x128xbf16>, vector<128x128xbf16>, vector<2x128xf32> -> vector<2x128xf32>
    %c0_21 = arith.constant 0 : index
    %c0_22 = arith.constant 0 : index
    %24 = vector.load %arg9[%c0_21, %c0_22] : memref<1x128xf32, #tpu.memory_space<vmem>>, vector<1x128xf32>
    %25 = vector.broadcast %24 : vector<1x128xf32> to vector<2x128xf32>
    %26 = arith.addf %23, %25 : vector<2x128xf32>
    %c0_23 = arith.constant 0 : index
    %c0_24 = arith.constant 0 : index
    %27 = vector.load %arg11[%c0_23, %c0_24] : memref<2x128xf32, #tpu.memory_space<vmem>>, vector<2x128xf32>
    tpu.vector_store %arg11[%c0_23, %c0_24], %26 {strides = array<i32>} : memref<2x128xf32, #tpu.memory_space<vmem>>, vector<2x128xf32>,
    return
  }
  func.func @transform_0(%arg0: i32) -> (i32, i32) {
    %c0_i32 = arith.constant 0 : i32
    %c0_i32_0 = arith.constant 0 : i32
    %c0_i32_1 = arith.constant 0 : i32
    return %c0_i32, %c0_i32_0 : i32, i32
  }
  func.func @transform_1(%arg0: i32) -> (i32, i32) {
    %c0_i32 = arith.constant 0 : i32
    %c0_i32_0 = arith.constant 0 : i32
    %c0_i32_1 = arith.constant 0 : i32
    return %c0_i32, %c0_i32_0 : i32, i32
  }
  func.func @transform_2(%arg0: i32) -> (i32, i32) {
    %c0_i32 = arith.constant 0 : i32
    %c0_i32_0 = arith.constant 0 : i32
    %c0_i32_1 = arith.constant 0 : i32
    return %c0_i32, %c0_i32_0 : i32, i32
  }
  func.func @transform_3(%arg0: i32) -> (i32, i32) {
    %c0_i32 = arith.constant 0 : i32
    %c0_i32_0 = arith.constant 0 : i32
    %c0_i32_1 = arith.constant 0 : i32
    return %c0_i32, %c0_i32_0 : i32, i32
  }
  func.func @transform_4(%arg0: i32) -> (i32, i32) {
    %c0_i32 = arith.constant 0 : i32
    %c0_i32_0 = arith.constant 0 : i32
    %c0_i32_1 = arith.constant 0 : i32
    return %c0_i32, %c0_i32_0 : i32, i32
  }
  func.func @transform_5(%arg0: i32) -> (i32, i32) {
    %c0_i32 = arith.constant 0 : i32
    %c0_i32_0 = arith.constant 0 : i32
    %c0_i32_1 = arith.constant 0 : i32
    return %c0_i32, %c0_i32_0 : i32, i32
  }
  func.func @transform_6(%arg0: i32) -> (i32, i32) {
    %c0_i32 = arith.constant 0 : i32
    %c0_i32_0 = arith.constant 0 : i32
    %c0_i32_1 = arith.constant 0 : i32
    return %c0_i32, %c0_i32_0 : i32, i32
  }
  func.func @transform_7(%arg0: i32) -> (i32, i32) {
    %c0_i32 = arith.constant 0 : i32
    %c0_i32_0 = arith.constant 0 : i32
    %c0_i32_1 = arith.constant 0 : i32
    return %c0_i32, %c0_i32_0 : i32, i32
  }
  func.func @transform_8(%arg0: i32) -> (i32, i32) {
    %c0_i32 = arith.constant 0 : i32
    %c0_i32_0 = arith.constant 0 : i32
    %c0_i32_1 = arith.constant 0 : i32
    return %c0_i32, %c0_i32_0 : i32, i32
  }
  func.func @transform_9(%arg0: i32) -> (i32, i32) {
    %c0_i32 = arith.constant 0 : i32
    %c0_i32_0 = arith.constant 0 : i32
    %c0_i32_1 = arith.constant 0 : i32
    return %c0_i32, %c0_i32_0 : i32, i32
  }
  func.func @transform_10(%arg0: i32) -> (i32, i32) {
    %c0_i32 = arith.constant 0 : i32
    %c0_i32_0 = arith.constant 0 : i32
    %c0_i32_1 = arith.constant 0 : i32
    return %c0_i32, %c0_i32_0 : i32, i32
  }
}

module attributes {stable_mosaic.version = 11 : i64} {
  func.func @_encoder_kernel(%arg0: i32, %arg1: i32, %arg2: memref<8x32xf32, #tpu.memory_space<vmem>>, %arg3: memref<1x1x8xf32, #tpu.memory_space<vmem>>, %arg4: memref<1x32xf32, #tpu.memory_space<vmem>>, %arg5: memref<1x32xf32, #tpu.memory_space<vmem>>, %arg6: memref<1x32x96xbf16, #tpu.memory_space<vmem>>, %arg7: memref<1x1x96xf32, #tpu.memory_space<vmem>>, %arg8: memref<1x32x32xbf16, #tpu.memory_space<vmem>>, %arg9: memref<1x1x32xf32, #tpu.memory_space<vmem>>, %arg10: memref<1x1x32xf32, #tpu.memory_space<vmem>>, %arg11: memref<1x1x32xf32, #tpu.memory_space<vmem>>, %arg12: memref<1x32x64xbf16, #tpu.memory_space<vmem>>, %arg13: memref<1x1x64xf32, #tpu.memory_space<vmem>>, %arg14: memref<1x64x32xbf16, #tpu.memory_space<vmem>>, %arg15: memref<1x1x32xf32, #tpu.memory_space<vmem>>, %arg16: memref<1x1x32xf32, #tpu.memory_space<vmem>>, %arg17: memref<1x1x32xf32, #tpu.memory_space<vmem>>, %arg18: memref<8x32xf32, #tpu.memory_space<vmem>>, %arg19: memref<8x32xf32, #tpu.memory_space<vmem>>, %arg20: memref<8x32xf32, #tpu.memory_space<vmem>>) attributes {dimension_semantics = [#tpu.dimension_semantics<parallel>, #tpu.dimension_semantics<arbitrary>], iteration_bounds = array<i64: 2, 2>, scalar_prefetch = 0 : i64, scratch_operands = 2 : i64, tpu.core_type = #tpu.core_type<tc>, window_params = [{transform_indices = @transform_0, window_bounds = array<i64: 8, 32>}, {transform_indices = @transform_1, window_bounds = array<i64: 1, 1, 8>}, {pipeline_mode = #tpu.pipeline_mode<synchronous>, transform_indices = @transform_2, window_bounds = array<i64: 1, 32>}, {pipeline_mode = #tpu.pipeline_mode<synchronous>, transform_indices = @transform_3, window_bounds = array<i64: 1, 32>}, {transform_indices = @transform_4, window_bounds = array<i64: 1, 32, 96>}, {transform_indices = @transform_5, window_bounds = array<i64: 1, 1, 96>}, {transform_indices = @transform_6, window_bounds = array<i64: 1, 32, 32>}, {transform_indices = @transform_7, window_bounds = array<i64: 1, 1, 32>}, {transform_indices = @transform_8, window_bounds = array<i64: 1, 1, 32>}, {transform_indices = @transform_9, window_bounds = array<i64: 1, 1, 32>}, {transform_indices = @transform_10, window_bounds = array<i64: 1, 32, 64>}, {transform_indices = @transform_11, window_bounds = array<i64: 1, 1, 64>}, {transform_indices = @transform_12, window_bounds = array<i64: 1, 64, 32>}, {transform_indices = @transform_13, window_bounds = array<i64: 1, 1, 32>}, {transform_indices = @transform_14, window_bounds = array<i64: 1, 1, 32>}, {transform_indices = @transform_15, window_bounds = array<i64: 1, 1, 32>}, {transform_indices = @transform_16, window_bounds = array<i64: 8, 32>}]} {
    %c0_i32 = arith.constant 0 : i32
    %0 = arith.cmpi eq, %arg1, %c0_i32 : i32
    %1 = arith.extui %0 : i1 to i32
    %c0_i32_0 = arith.constant 0 : i32
    %2 = arith.cmpi ne, %1, %c0_i32_0 : i32
    scf.if %2 {
      %c0_88 = arith.constant 0 : index
      %c0_89 = arith.constant 0 : index
      %194 = vector.load %arg2[%c0_88, %c0_89] : memref<8x32xf32, #tpu.memory_space<vmem>>, vector<8x32xf32>
      %c0_90 = arith.constant 0 : index
      %c0_91 = arith.constant 0 : index
      %195 = vector.load %arg4[%c0_90, %c0_91] : memref<1x32xf32, #tpu.memory_space<vmem>>, vector<1x32xf32>
      %c0_92 = arith.constant 0 : index
      %c0_93 = arith.constant 0 : index
      %196 = vector.load %arg5[%c0_92, %c0_93] : memref<1x32xf32, #tpu.memory_space<vmem>>, vector<1x32xf32>
      %cst_94 = arith.constant dense<0.000000e+00> : vector<8xf32>
      %197 = vector.multi_reduction <add>, %194, %cst_94 [1] : vector<8x32xf32> to vector<8xf32>
      %198 = vector.shape_cast %197 : vector<8xf32> to vector<8x1xf32>
      %cst_95 = arith.constant 3.200000e+01 : f32
      %199 = vector.broadcast %cst_95 : f32 to vector<8x1xf32>
      %200 = arith.divf %198, %199 : vector<8x1xf32>
      %201 = vector.broadcast %200 : vector<8x1xf32> to vector<8x32xf32>
      %202 = arith.subf %194, %201 : vector<8x32xf32>
      %203 = arith.mulf %202, %202 : vector<8x32xf32>
      %cst_96 = arith.constant dense<0.000000e+00> : vector<8xf32>
      %204 = vector.multi_reduction <add>, %203, %cst_96 [1] : vector<8x32xf32> to vector<8xf32>
      %205 = vector.shape_cast %204 : vector<8xf32> to vector<8x1xf32>
      %cst_97 = arith.constant 3.200000e+01 : f32
      %206 = vector.broadcast %cst_97 : f32 to vector<8x1xf32>
      %207 = arith.divf %205, %206 : vector<8x1xf32>
      %208 = vector.broadcast %200 : vector<8x1xf32> to vector<8x32xf32>
      %209 = arith.subf %194, %208 : vector<8x32xf32>
      %cst_98 = arith.constant 9.99999996E-13 : f32
      %210 = vector.broadcast %cst_98 : f32 to vector<8x1xf32>
      %211 = arith.addf %207, %210 : vector<8x1xf32>
      %212 = math.rsqrt %211 : vector<8x1xf32>
      %213 = vector.broadcast %212 : vector<8x1xf32> to vector<8x32xf32>
      %214 = arith.mulf %209, %213 : vector<8x32xf32>
      %215 = vector.broadcast %195 : vector<1x32xf32> to vector<8x32xf32>
      %216 = arith.mulf %214, %215 : vector<8x32xf32>
      %217 = vector.broadcast %196 : vector<1x32xf32> to vector<8x32xf32>
      %218 = arith.addf %216, %217 : vector<8x32xf32>
      %c0_99 = arith.constant 0 : index
      %c0_100 = arith.constant 0 : index
      %219 = vector.load %arg19[%c0_99, %c0_100] : memref<8x32xf32, #tpu.memory_space<vmem>>, vector<8x32xf32>
      tpu.vector_store %arg19[%c0_99, %c0_100], %218 {strides = array<i32>} : memref<8x32xf32, #tpu.memory_space<vmem>>, vector<8x32xf32>,
    } else {
    }
    %c0 = arith.constant 0 : index
    %c0_1 = arith.constant 0 : index
    %3 = vector.load %arg19[%c0, %c0_1] : memref<8x32xf32, #tpu.memory_space<vmem>>, vector<8x32xf32>
    %c0_2 = arith.constant 0 : index
    %c0_3 = arith.constant 0 : index
    %c0_4 = arith.constant 0 : index
    %4 = vector.load %arg3[%c0_2, %c0_3, %c0_4] : memref<1x1x8xf32, #tpu.memory_space<vmem>>, vector<1x1x8xf32>
    %5 = vector.shape_cast %4 : vector<1x1x8xf32> to vector<1x8xf32>
    %6 = arith.truncf %3 : vector<8x32xf32> to vector<8x32xbf16>
    %c0_5 = arith.constant 0 : index
    %c0_6 = arith.constant 0 : index
    %c0_7 = arith.constant 0 : index
    %7 = vector.load %arg6[%c0_5, %c0_6, %c0_7] : memref<1x32x96xbf16, #tpu.memory_space<vmem>>, vector<1x32x96xbf16>
    %8 = vector.shape_cast %7 : vector<1x32x96xbf16> to vector<32x96xbf16>
    %cst = arith.constant dense<0.000000e+00> : vector<8x96xf32>
    %9 = tpu.matmul %6, %8, %cst {dimension_numbers = #tpu.dot_dimension_numbers<[1], [0], [0], [1], [0, 0, 1, 1], [], []>} : vector<8x32xbf16>, vector<32x96xbf16>, vector<8x96xf32> -> vector<8x96xf32>
    %c0_8 = arith.constant 0 : index
    %c0_9 = arith.constant 0 : index
    %c0_10 = arith.constant 0 : index
    %10 = vector.load %arg7[%c0_8, %c0_9, %c0_10] : memref<1x1x96xf32, #tpu.memory_space<vmem>>, vector<1x1x96xf32>
    %11 = vector.shape_cast %10 : vector<1x1x96xf32> to vector<1x96xf32>
    %12 = vector.broadcast %11 : vector<1x96xf32> to vector<8x96xf32>
    %13 = arith.addf %9, %12 : vector<8x96xf32>
    %14 = vector.extract_strided_slice %13 {offsets = [0, 0], sizes = [8, 8], strides = [1, 1]} : vector<8x96xf32> to vector<8x8xf32>
    %15 = vector.extract_strided_slice %13 {offsets = [0, 32], sizes = [8, 8], strides = [1, 1]} : vector<8x96xf32> to vector<8x8xf32>
    %16 = vector.extract_strided_slice %13 {offsets = [0, 64], sizes = [8, 8], strides = [1, 1]} : vector<8x96xf32> to vector<8x8xf32>
    %17 = tpu.transpose %15, [1, 0] : vector<8x8xf32> -> vector<8x8xf32>
    %cst_11 = arith.constant dense<0.000000e+00> : vector<8x8xf32>
    %18 = tpu.matmul %14, %17, %cst_11 {dimension_numbers = #tpu.dot_dimension_numbers<[1], [0], [0], [1], [0, 0, 1, 1], [], []>} : vector<8x8xf32>, vector<8x8xf32>, vector<8x8xf32> -> vector<8x8xf32>
    %cst_12 = arith.constant 0.353553385 : f32
    %19 = vector.broadcast %cst_12 : f32 to vector<8x8xf32>
    %20 = arith.mulf %18, %19 : vector<8x8xf32>
    %21 = vector.broadcast %5 : vector<1x8xf32> to vector<8x8xf32>
    %22 = arith.addf %20, %21 : vector<8x8xf32>
    %cst_13 = arith.constant dense<0xFF800000> : vector<8xf32>
    %23 = vector.multi_reduction <maximumf>, %22, %cst_13 [1] : vector<8x8xf32> to vector<8xf32>
    %24 = vector.shape_cast %23 : vector<8xf32> to vector<8x1xf32>
    %25 = vector.broadcast %24 : vector<8x1xf32> to vector<8x8xf32>
    %26 = arith.subf %22, %25 : vector<8x8xf32>
    %27 = math.exp %26 : vector<8x8xf32>
    %cst_14 = arith.constant dense<0.000000e+00> : vector<8xf32>
    %28 = vector.multi_reduction <add>, %27, %cst_14 [1] : vector<8x8xf32> to vector<8xf32>
    %29 = vector.shape_cast %28 : vector<8xf32> to vector<8x1xf32>
    %30 = tpu.reciprocal %29 {approx = true} : vector<8x1xf32> -> vector<8x1xf32>
    %31 = vector.broadcast %30 : vector<8x1xf32> to vector<8x8xf32>
    %32 = arith.mulf %27, %31 : vector<8x8xf32>
    %cst_15 = arith.constant dense<0.000000e+00> : vector<8x8xf32>
    %33 = tpu.matmul %32, %16, %cst_15 {dimension_numbers = #tpu.dot_dimension_numbers<[1], [0], [0], [1], [0, 0, 1, 1], [], []>} : vector<8x8xf32>, vector<8x8xf32>, vector<8x8xf32> -> vector<8x8xf32>
    %c0_16 = arith.constant 0 : index
    %c0_17 = arith.constant 0 : index
    %34 = vector.load %arg20[%c0_16, %c0_17] : memref<8x32xf32, #tpu.memory_space<vmem>>, vector<8x8xf32>
    tpu.vector_store %arg20[%c0_16, %c0_17], %33 {strides = array<i32>} : memref<8x32xf32, #tpu.memory_space<vmem>>, vector<8x8xf32>,
    %35 = vector.extract_strided_slice %13 {offsets = [0, 8], sizes = [8, 8], strides = [1, 1]} : vector<8x96xf32> to vector<8x8xf32>
    %36 = vector.extract_strided_slice %13 {offsets = [0, 40], sizes = [8, 8], strides = [1, 1]} : vector<8x96xf32> to vector<8x8xf32>
    %37 = vector.extract_strided_slice %13 {offsets = [0, 72], sizes = [8, 8], strides = [1, 1]} : vector<8x96xf32> to vector<8x8xf32>
    %38 = tpu.transpose %36, [1, 0] : vector<8x8xf32> -> vector<8x8xf32>
    %cst_18 = arith.constant dense<0.000000e+00> : vector<8x8xf32>
    %39 = tpu.matmul %35, %38, %cst_18 {dimension_numbers = #tpu.dot_dimension_numbers<[1], [0], [0], [1], [0, 0, 1, 1], [], []>} : vector<8x8xf32>, vector<8x8xf32>, vector<8x8xf32> -> vector<8x8xf32>
    %cst_19 = arith.constant 0.353553385 : f32
    %40 = vector.broadcast %cst_19 : f32 to vector<8x8xf32>
    %41 = arith.mulf %39, %40 : vector<8x8xf32>
    %42 = vector.broadcast %5 : vector<1x8xf32> to vector<8x8xf32>
    %43 = arith.addf %41, %42 : vector<8x8xf32>
    %cst_20 = arith.constant dense<0xFF800000> : vector<8xf32>
    %44 = vector.multi_reduction <maximumf>, %43, %cst_20 [1] : vector<8x8xf32> to vector<8xf32>
    %45 = vector.shape_cast %44 : vector<8xf32> to vector<8x1xf32>
    %46 = vector.broadcast %45 : vector<8x1xf32> to vector<8x8xf32>
    %47 = arith.subf %43, %46 : vector<8x8xf32>
    %48 = math.exp %47 : vector<8x8xf32>
    %cst_21 = arith.constant dense<0.000000e+00> : vector<8xf32>
    %49 = vector.multi_reduction <add>, %48, %cst_21 [1] : vector<8x8xf32> to vector<8xf32>
    %50 = vector.shape_cast %49 : vector<8xf32> to vector<8x1xf32>
    %51 = tpu.reciprocal %50 {approx = true} : vector<8x1xf32> -> vector<8x1xf32>
    %52 = vector.broadcast %51 : vector<8x1xf32> to vector<8x8xf32>
    %53 = arith.mulf %48, %52 : vector<8x8xf32>
    %cst_22 = arith.constant dense<0.000000e+00> : vector<8x8xf32>
    %54 = tpu.matmul %53, %37, %cst_22 {dimension_numbers = #tpu.dot_dimension_numbers<[1], [0], [0], [1], [0, 0, 1, 1], [], []>} : vector<8x8xf32>, vector<8x8xf32>, vector<8x8xf32> -> vector<8x8xf32>
    %c0_23 = arith.constant 0 : index
    %c8 = arith.constant 8 : index
    %55 = vector.load %arg20[%c0_23, %c8] : memref<8x32xf32, #tpu.memory_space<vmem>>, vector<8x8xf32>
    tpu.vector_store %arg20[%c0_23, %c8], %54 {strides = array<i32>} : memref<8x32xf32, #tpu.memory_space<vmem>>, vector<8x8xf32>,
    %56 = vector.extract_strided_slice %13 {offsets = [0, 16], sizes = [8, 8], strides = [1, 1]} : vector<8x96xf32> to vector<8x8xf32>
    %57 = vector.extract_strided_slice %13 {offsets = [0, 48], sizes = [8, 8], strides = [1, 1]} : vector<8x96xf32> to vector<8x8xf32>
    %58 = vector.extract_strided_slice %13 {offsets = [0, 80], sizes = [8, 8], strides = [1, 1]} : vector<8x96xf32> to vector<8x8xf32>
    %59 = tpu.transpose %57, [1, 0] : vector<8x8xf32> -> vector<8x8xf32>
    %cst_24 = arith.constant dense<0.000000e+00> : vector<8x8xf32>
    %60 = tpu.matmul %56, %59, %cst_24 {dimension_numbers = #tpu.dot_dimension_numbers<[1], [0], [0], [1], [0, 0, 1, 1], [], []>} : vector<8x8xf32>, vector<8x8xf32>, vector<8x8xf32> -> vector<8x8xf32>
    %cst_25 = arith.constant 0.353553385 : f32
    %61 = vector.broadcast %cst_25 : f32 to vector<8x8xf32>
    %62 = arith.mulf %60, %61 : vector<8x8xf32>
    %63 = vector.broadcast %5 : vector<1x8xf32> to vector<8x8xf32>
    %64 = arith.addf %62, %63 : vector<8x8xf32>
    %cst_26 = arith.constant dense<0xFF800000> : vector<8xf32>
    %65 = vector.multi_reduction <maximumf>, %64, %cst_26 [1] : vector<8x8xf32> to vector<8xf32>
    %66 = vector.shape_cast %65 : vector<8xf32> to vector<8x1xf32>
    %67 = vector.broadcast %66 : vector<8x1xf32> to vector<8x8xf32>
    %68 = arith.subf %64, %67 : vector<8x8xf32>
    %69 = math.exp %68 : vector<8x8xf32>
    %cst_27 = arith.constant dense<0.000000e+00> : vector<8xf32>
    %70 = vector.multi_reduction <add>, %69, %cst_27 [1] : vector<8x8xf32> to vector<8xf32>
    %71 = vector.shape_cast %70 : vector<8xf32> to vector<8x1xf32>
    %72 = tpu.reciprocal %71 {approx = true} : vector<8x1xf32> -> vector<8x1xf32>
    %73 = vector.broadcast %72 : vector<8x1xf32> to vector<8x8xf32>
    %74 = arith.mulf %69, %73 : vector<8x8xf32>
    %cst_28 = arith.constant dense<0.000000e+00> : vector<8x8xf32>
    %75 = tpu.matmul %74, %58, %cst_28 {dimension_numbers = #tpu.dot_dimension_numbers<[1], [0], [0], [1], [0, 0, 1, 1], [], []>} : vector<8x8xf32>, vector<8x8xf32>, vector<8x8xf32> -> vector<8x8xf32>
    %c0_29 = arith.constant 0 : index
    %c16 = arith.constant 16 : index
    %76 = vector.load %arg20[%c0_29, %c16] : memref<8x32xf32, #tpu.memory_space<vmem>>, vector<8x8xf32>
    tpu.vector_store %arg20[%c0_29, %c16], %75 {strides = array<i32>} : memref<8x32xf32, #tpu.memory_space<vmem>>, vector<8x8xf32>,
    %77 = vector.extract_strided_slice %13 {offsets = [0, 24], sizes = [8, 8], strides = [1, 1]} : vector<8x96xf32> to vector<8x8xf32>
    %78 = vector.extract_strided_slice %13 {offsets = [0, 56], sizes = [8, 8], strides = [1, 1]} : vector<8x96xf32> to vector<8x8xf32>
    %79 = vector.extract_strided_slice %13 {offsets = [0, 88], sizes = [8, 8], strides = [1, 1]} : vector<8x96xf32> to vector<8x8xf32>
    %80 = tpu.transpose %78, [1, 0] : vector<8x8xf32> -> vector<8x8xf32>
    %cst_30 = arith.constant dense<0.000000e+00> : vector<8x8xf32>
    %81 = tpu.matmul %77, %80, %cst_30 {dimension_numbers = #tpu.dot_dimension_numbers<[1], [0], [0], [1], [0, 0, 1, 1], [], []>} : vector<8x8xf32>, vector<8x8xf32>, vector<8x8xf32> -> vector<8x8xf32>
    %cst_31 = arith.constant 0.353553385 : f32
    %82 = vector.broadcast %cst_31 : f32 to vector<8x8xf32>
    %83 = arith.mulf %81, %82 : vector<8x8xf32>
    %84 = vector.broadcast %5 : vector<1x8xf32> to vector<8x8xf32>
    %85 = arith.addf %83, %84 : vector<8x8xf32>
    %cst_32 = arith.constant dense<0xFF800000> : vector<8xf32>
    %86 = vector.multi_reduction <maximumf>, %85, %cst_32 [1] : vector<8x8xf32> to vector<8xf32>
    %87 = vector.shape_cast %86 : vector<8xf32> to vector<8x1xf32>
    %88 = vector.broadcast %87 : vector<8x1xf32> to vector<8x8xf32>
    %89 = arith.subf %85, %88 : vector<8x8xf32>
    %90 = math.exp %89 : vector<8x8xf32>
    %cst_33 = arith.constant dense<0.000000e+00> : vector<8xf32>
    %91 = vector.multi_reduction <add>, %90, %cst_33 [1] : vector<8x8xf32> to vector<8xf32>
    %92 = vector.shape_cast %91 : vector<8xf32> to vector<8x1xf32>
    %93 = tpu.reciprocal %92 {approx = true} : vector<8x1xf32> -> vector<8x1xf32>
    %94 = vector.broadcast %93 : vector<8x1xf32> to vector<8x8xf32>
    %95 = arith.mulf %90, %94 : vector<8x8xf32>
    %cst_34 = arith.constant dense<0.000000e+00> : vector<8x8xf32>
    %96 = tpu.matmul %95, %79, %cst_34 {dimension_numbers = #tpu.dot_dimension_numbers<[1], [0], [0], [1], [0, 0, 1, 1], [], []>} : vector<8x8xf32>, vector<8x8xf32>, vector<8x8xf32> -> vector<8x8xf32>
    %c0_35 = arith.constant 0 : index
    %c24 = arith.constant 24 : index
    %97 = vector.load %arg20[%c0_35, %c24] : memref<8x32xf32, #tpu.memory_space<vmem>>, vector<8x8xf32>
    tpu.vector_store %arg20[%c0_35, %c24], %96 {strides = array<i32>} : memref<8x32xf32, #tpu.memory_space<vmem>>, vector<8x8xf32>,
    %c0_36 = arith.constant 0 : index
    %c0_37 = arith.constant 0 : index
    %98 = vector.load %arg20[%c0_36, %c0_37] : memref<8x32xf32, #tpu.memory_space<vmem>>, vector<8x32xf32>
    %99 = arith.truncf %98 : vector<8x32xf32> to vector<8x32xbf16>
    %c0_38 = arith.constant 0 : index
    %c0_39 = arith.constant 0 : index
    %c0_40 = arith.constant 0 : index
    %100 = vector.load %arg8[%c0_38, %c0_39, %c0_40] : memref<1x32x32xbf16, #tpu.memory_space<vmem>>, vector<1x32x32xbf16>
    %101 = vector.shape_cast %100 : vector<1x32x32xbf16> to vector<32x32xbf16>
    %cst_41 = arith.constant dense<0.000000e+00> : vector<8x32xf32>
    %102 = tpu.matmul %99, %101, %cst_41 {dimension_numbers = #tpu.dot_dimension_numbers<[1], [0], [0], [1], [0, 0, 1, 1], [], []>} : vector<8x32xbf16>, vector<32x32xbf16>, vector<8x32xf32> -> vector<8x32xf32>
    %c0_42 = arith.constant 0 : index
    %c0_43 = arith.constant 0 : index
    %c0_44 = arith.constant 0 : index
    %103 = vector.load %arg9[%c0_42, %c0_43, %c0_44] : memref<1x1x32xf32, #tpu.memory_space<vmem>>, vector<1x1x32xf32>
    %104 = vector.shape_cast %103 : vector<1x1x32xf32> to vector<1x32xf32>
    %105 = vector.broadcast %104 : vector<1x32xf32> to vector<8x32xf32>
    %106 = arith.addf %102, %105 : vector<8x32xf32>
    %107 = arith.addf %106, %3 : vector<8x32xf32>
    %c0_45 = arith.constant 0 : index
    %c0_46 = arith.constant 0 : index
    %c0_47 = arith.constant 0 : index
    %108 = vector.load %arg10[%c0_45, %c0_46, %c0_47] : memref<1x1x32xf32, #tpu.memory_space<vmem>>, vector<1x1x32xf32>
    %109 = vector.shape_cast %108 : vector<1x1x32xf32> to vector<1x32xf32>
    %c0_48 = arith.constant 0 : index
    %c0_49 = arith.constant 0 : index
    %c0_50 = arith.constant 0 : index
    %110 = vector.load %arg11[%c0_48, %c0_49, %c0_50] : memref<1x1x32xf32, #tpu.memory_space<vmem>>, vector<1x1x32xf32>
    %111 = vector.shape_cast %110 : vector<1x1x32xf32> to vector<1x32xf32>
    %cst_51 = arith.constant dense<0.000000e+00> : vector<8xf32>
    %112 = vector.multi_reduction <add>, %107, %cst_51 [1] : vector<8x32xf32> to vector<8xf32>
    %113 = vector.shape_cast %112 : vector<8xf32> to vector<8x1xf32>
    %cst_52 = arith.constant 3.200000e+01 : f32
    %114 = vector.broadcast %cst_52 : f32 to vector<8x1xf32>
    %115 = arith.divf %113, %114 : vector<8x1xf32>
    %116 = vector.broadcast %115 : vector<8x1xf32> to vector<8x32xf32>
    %117 = arith.subf %107, %116 : vector<8x32xf32>
    %118 = arith.mulf %117, %117 : vector<8x32xf32>
    %cst_53 = arith.constant dense<0.000000e+00> : vector<8xf32>
    %119 = vector.multi_reduction <add>, %118, %cst_53 [1] : vector<8x32xf32> to vector<8xf32>
    %120 = vector.shape_cast %119 : vector<8xf32> to vector<8x1xf32>
    %cst_54 = arith.constant 3.200000e+01 : f32
    %121 = vector.broadcast %cst_54 : f32 to vector<8x1xf32>
    %122 = arith.divf %120, %121 : vector<8x1xf32>
    %123 = vector.broadcast %115 : vector<8x1xf32> to vector<8x32xf32>
    %124 = arith.subf %107, %123 : vector<8x32xf32>
    %cst_55 = arith.constant 9.99999996E-13 : f32
    %125 = vector.broadcast %cst_55 : f32 to vector<8x1xf32>
    %126 = arith.addf %122, %125 : vector<8x1xf32>
    %127 = math.rsqrt %126 : vector<8x1xf32>
    %128 = vector.broadcast %127 : vector<8x1xf32> to vector<8x32xf32>
    %129 = arith.mulf %124, %128 : vector<8x32xf32>
    %130 = vector.broadcast %109 : vector<1x32xf32> to vector<8x32xf32>
    %131 = arith.mulf %129, %130 : vector<8x32xf32>
    %132 = vector.broadcast %111 : vector<1x32xf32> to vector<8x32xf32>
    %133 = arith.addf %131, %132 : vector<8x32xf32>
    %134 = arith.truncf %133 : vector<8x32xf32> to vector<8x32xbf16>
    %c0_56 = arith.constant 0 : index
    %c0_57 = arith.constant 0 : index
    %c0_58 = arith.constant 0 : index
    %135 = vector.load %arg12[%c0_56, %c0_57, %c0_58] : memref<1x32x64xbf16, #tpu.memory_space<vmem>>, vector<1x32x64xbf16>
    %136 = vector.shape_cast %135 : vector<1x32x64xbf16> to vector<32x64xbf16>
    %cst_59 = arith.constant dense<0.000000e+00> : vector<8x64xf32>
    %137 = tpu.matmul %134, %136, %cst_59 {dimension_numbers = #tpu.dot_dimension_numbers<[1], [0], [0], [1], [0, 0, 1, 1], [], []>} : vector<8x32xbf16>, vector<32x64xbf16>, vector<8x64xf32> -> vector<8x64xf32>
    %c0_60 = arith.constant 0 : index
    %c0_61 = arith.constant 0 : index
    %c0_62 = arith.constant 0 : index
    %138 = vector.load %arg13[%c0_60, %c0_61, %c0_62] : memref<1x1x64xf32, #tpu.memory_space<vmem>>, vector<1x1x64xf32>
    %139 = vector.shape_cast %138 : vector<1x1x64xf32> to vector<1x64xf32>
    %140 = vector.broadcast %139 : vector<1x64xf32> to vector<8x64xf32>
    %141 = arith.addf %137, %140 : vector<8x64xf32>
    %142 = arith.mulf %141, %141 : vector<8x64xf32>
    %143 = arith.mulf %141, %142 : vector<8x64xf32>
    %cst_63 = arith.constant 4.471500e-02 : f32
    %144 = vector.broadcast %cst_63 : f32 to vector<8x64xf32>
    %145 = arith.mulf %144, %143 : vector<8x64xf32>
    %146 = arith.addf %141, %145 : vector<8x64xf32>
    %cst_64 = arith.constant 0.797884583 : f32
    %147 = vector.broadcast %cst_64 : f32 to vector<8x64xf32>
    %148 = arith.mulf %147, %146 : vector<8x64xf32>
    %149 = math.tanh %148 : vector<8x64xf32>
    %cst_65 = arith.constant 1.000000e+00 : f32
    %150 = vector.broadcast %cst_65 : f32 to vector<8x64xf32>
    %151 = arith.addf %150, %149 : vector<8x64xf32>
    %cst_66 = arith.constant 5.000000e-01 : f32
    %152 = vector.broadcast %cst_66 : f32 to vector<8x64xf32>
    %153 = arith.mulf %152, %151 : vector<8x64xf32>
    %154 = arith.mulf %141, %153 : vector<8x64xf32>
    %155 = arith.truncf %154 : vector<8x64xf32> to vector<8x64xbf16>
    %c0_67 = arith.constant 0 : index
    %c0_68 = arith.constant 0 : index
    %c0_69 = arith.constant 0 : index
    %156 = vector.load %arg14[%c0_67, %c0_68, %c0_69] : memref<1x64x32xbf16, #tpu.memory_space<vmem>>, vector<1x64x32xbf16>
    %157 = vector.shape_cast %156 : vector<1x64x32xbf16> to vector<64x32xbf16>
    %cst_70 = arith.constant dense<0.000000e+00> : vector<8x32xf32>
    %158 = tpu.matmul %155, %157, %cst_70 {dimension_numbers = #tpu.dot_dimension_numbers<[1], [0], [0], [1], [0, 0, 1, 1], [], []>} : vector<8x64xbf16>, vector<64x32xbf16>, vector<8x32xf32> -> vector<8x32xf32>
    %c0_71 = arith.constant 0 : index
    %c0_72 = arith.constant 0 : index
    %c0_73 = arith.constant 0 : index
    %159 = vector.load %arg15[%c0_71, %c0_72, %c0_73] : memref<1x1x32xf32, #tpu.memory_space<vmem>>, vector<1x1x32xf32>
    %160 = vector.shape_cast %159 : vector<1x1x32xf32> to vector<1x32xf32>
    %161 = vector.broadcast %160 : vector<1x32xf32> to vector<8x32xf32>
    %162 = arith.addf %158, %161 : vector<8x32xf32>
    %163 = arith.addf %162, %133 : vector<8x32xf32>
    %c0_74 = arith.constant 0 : index
    %c0_75 = arith.constant 0 : index
    %c0_76 = arith.constant 0 : index
    %164 = vector.load %arg16[%c0_74, %c0_75, %c0_76] : memref<1x1x32xf32, #tpu.memory_space<vmem>>, vector<1x1x32xf32>
    %165 = vector.shape_cast %164 : vector<1x1x32xf32> to vector<1x32xf32>
    %c0_77 = arith.constant 0 : index
    %c0_78 = arith.constant 0 : index
    %c0_79 = arith.constant 0 : index
    %166 = vector.load %arg17[%c0_77, %c0_78, %c0_79] : memref<1x1x32xf32, #tpu.memory_space<vmem>>, vector<1x1x32xf32>
    %167 = vector.shape_cast %166 : vector<1x1x32xf32> to vector<1x32xf32>
    %cst_80 = arith.constant dense<0.000000e+00> : vector<8xf32>
    %168 = vector.multi_reduction <add>, %163, %cst_80 [1] : vector<8x32xf32> to vector<8xf32>
    %169 = vector.shape_cast %168 : vector<8xf32> to vector<8x1xf32>
    %cst_81 = arith.constant 3.200000e+01 : f32
    %170 = vector.broadcast %cst_81 : f32 to vector<8x1xf32>
    %171 = arith.divf %169, %170 : vector<8x1xf32>
    %172 = vector.broadcast %171 : vector<8x1xf32> to vector<8x32xf32>
    %173 = arith.subf %163, %172 : vector<8x32xf32>
    %174 = arith.mulf %173, %173 : vector<8x32xf32>
    %cst_82 = arith.constant dense<0.000000e+00> : vector<8xf32>
    %175 = vector.multi_reduction <add>, %174, %cst_82 [1] : vector<8x32xf32> to vector<8xf32>
    %176 = vector.shape_cast %175 : vector<8xf32> to vector<8x1xf32>
    %cst_83 = arith.constant 3.200000e+01 : f32
    %177 = vector.broadcast %cst_83 : f32 to vector<8x1xf32>
    %178 = arith.divf %176, %177 : vector<8x1xf32>
    %179 = vector.broadcast %171 : vector<8x1xf32> to vector<8x32xf32>
    %180 = arith.subf %163, %179 : vector<8x32xf32>
    %cst_84 = arith.constant 9.99999996E-13 : f32
    %181 = vector.broadcast %cst_84 : f32 to vector<8x1xf32>
    %182 = arith.addf %178, %181 : vector<8x1xf32>
    %183 = math.rsqrt %182 : vector<8x1xf32>
    %184 = vector.broadcast %183 : vector<8x1xf32> to vector<8x32xf32>
    %185 = arith.mulf %180, %184 : vector<8x32xf32>
    %186 = vector.broadcast %165 : vector<1x32xf32> to vector<8x32xf32>
    %187 = arith.mulf %185, %186 : vector<8x32xf32>
    %188 = vector.broadcast %167 : vector<1x32xf32> to vector<8x32xf32>
    %189 = arith.addf %187, %188 : vector<8x32xf32>
    %c0_85 = arith.constant 0 : index
    %c0_86 = arith.constant 0 : index
    %190 = vector.load %arg19[%c0_85, %c0_86] : memref<8x32xf32, #tpu.memory_space<vmem>>, vector<8x32xf32>
    tpu.vector_store %arg19[%c0_85, %c0_86], %189 {strides = array<i32>} : memref<8x32xf32, #tpu.memory_space<vmem>>, vector<8x32xf32>,
    %c1_i32 = arith.constant 1 : i32
    %191 = arith.cmpi eq, %arg1, %c1_i32 : i32
    %192 = arith.extui %191 : i1 to i32
    %c0_i32_87 = arith.constant 0 : i32
    %193 = arith.cmpi ne, %192, %c0_i32_87 : i32
    scf.if %193 {
      %c0_88 = arith.constant 0 : index
      %c0_89 = arith.constant 0 : index
      %194 = vector.load %arg18[%c0_88, %c0_89] : memref<8x32xf32, #tpu.memory_space<vmem>>, vector<8x32xf32>
      tpu.vector_store %arg18[%c0_88, %c0_89], %189 {strides = array<i32>} : memref<8x32xf32, #tpu.memory_space<vmem>>, vector<8x32xf32>,
    } else {
    }
    return
  }
  func.func @transform_0(%arg0: i32, %arg1: i32) -> (i32, i32) {
    %c0_i32 = arith.constant 0 : i32
    %c0_i32_0 = arith.constant 0 : i32
    return %arg0, %c0_i32 : i32, i32
  }
  func.func @transform_1(%arg0: i32, %arg1: i32) -> (i32, i32, i32) {
    %c0_i32 = arith.constant 0 : i32
    %c0_i32_0 = arith.constant 0 : i32
    %c0_i32_1 = arith.constant 0 : i32
    return %arg0, %c0_i32, %c0_i32_0 : i32, i32, i32
  }
  func.func @transform_2(%arg0: i32, %arg1: i32) -> (i32, i32) {
    %c0_i32 = arith.constant 0 : i32
    %c0_i32_0 = arith.constant 0 : i32
    %c0_i32_1 = arith.constant 0 : i32
    return %c0_i32, %c0_i32_0 : i32, i32
  }
  func.func @transform_3(%arg0: i32, %arg1: i32) -> (i32, i32) {
    %c0_i32 = arith.constant 0 : i32
    %c0_i32_0 = arith.constant 0 : i32
    %c0_i32_1 = arith.constant 0 : i32
    return %c0_i32, %c0_i32_0 : i32, i32
  }
  func.func @transform_4(%arg0: i32, %arg1: i32) -> (i32, i32, i32) {
    %c0_i32 = arith.constant 0 : i32
    %c0_i32_0 = arith.constant 0 : i32
    %c0_i32_1 = arith.constant 0 : i32
    return %arg1, %c0_i32, %c0_i32_0 : i32, i32, i32
  }
  func.func @transform_5(%arg0: i32, %arg1: i32) -> (i32, i32, i32) {
    %c0_i32 = arith.constant 0 : i32
    %c0_i32_0 = arith.constant 0 : i32
    %c0_i32_1 = arith.constant 0 : i32
    return %arg1, %c0_i32, %c0_i32_0 : i32, i32, i32
  }
  func.func @transform_6(%arg0: i32, %arg1: i32) -> (i32, i32, i32) {
    %c0_i32 = arith.constant 0 : i32
    %c0_i32_0 = arith.constant 0 : i32
    %c0_i32_1 = arith.constant 0 : i32
    return %arg1, %c0_i32, %c0_i32_0 : i32, i32, i32
  }
  func.func @transform_7(%arg0: i32, %arg1: i32) -> (i32, i32, i32) {
    %c0_i32 = arith.constant 0 : i32
    %c0_i32_0 = arith.constant 0 : i32
    %c0_i32_1 = arith.constant 0 : i32
    return %arg1, %c0_i32, %c0_i32_0 : i32, i32, i32
  }
  func.func @transform_8(%arg0: i32, %arg1: i32) -> (i32, i32, i32) {
    %c0_i32 = arith.constant 0 : i32
    %c0_i32_0 = arith.constant 0 : i32
    %c0_i32_1 = arith.constant 0 : i32
    return %arg1, %c0_i32, %c0_i32_0 : i32, i32, i32
  }
  func.func @transform_9(%arg0: i32, %arg1: i32) -> (i32, i32, i32) {
    %c0_i32 = arith.constant 0 : i32
    %c0_i32_0 = arith.constant 0 : i32
    %c0_i32_1 = arith.constant 0 : i32
    return %arg1, %c0_i32, %c0_i32_0 : i32, i32, i32
  }
  func.func @transform_10(%arg0: i32, %arg1: i32) -> (i32, i32, i32) {
    %c0_i32 = arith.constant 0 : i32
    %c0_i32_0 = arith.constant 0 : i32
    %c0_i32_1 = arith.constant 0 : i32
    return %arg1, %c0_i32, %c0_i32_0 : i32, i32, i32
  }
  func.func @transform_11(%arg0: i32, %arg1: i32) -> (i32, i32, i32) {
    %c0_i32 = arith.constant 0 : i32
    %c0_i32_0 = arith.constant 0 : i32
    %c0_i32_1 = arith.constant 0 : i32
    return %arg1, %c0_i32, %c0_i32_0 : i32, i32, i32
  }
  func.func @transform_12(%arg0: i32, %arg1: i32) -> (i32, i32, i32) {
    %c0_i32 = arith.constant 0 : i32
    %c0_i32_0 = arith.constant 0 : i32
    %c0_i32_1 = arith.constant 0 : i32
    return %arg1, %c0_i32, %c0_i32_0 : i32, i32, i32
  }
  func.func @transform_13(%arg0: i32, %arg1: i32) -> (i32, i32, i32) {
    %c0_i32 = arith.constant 0 : i32
    %c0_i32_0 = arith.constant 0 : i32
    %c0_i32_1 = arith.constant 0 : i32
    return %arg1, %c0_i32, %c0_i32_0 : i32, i32, i32
  }
  func.func @transform_14(%arg0: i32, %arg1: i32) -> (i32, i32, i32) {
    %c0_i32 = arith.constant 0 : i32
    %c0_i32_0 = arith.constant 0 : i32
    %c0_i32_1 = arith.constant 0 : i32
    return %arg1, %c0_i32, %c0_i32_0 : i32, i32, i32
  }
  func.func @transform_15(%arg0: i32, %arg1: i32) -> (i32, i32, i32) {
    %c0_i32 = arith.constant 0 : i32
    %c0_i32_0 = arith.constant 0 : i32
    %c0_i32_1 = arith.constant 0 : i32
    return %arg1, %c0_i32, %c0_i32_0 : i32, i32, i32
  }
  func.func @transform_16(%arg0: i32, %arg1: i32) -> (i32, i32) {
    %c0_i32 = arith.constant 0 : i32
    %c0_i32_0 = arith.constant 0 : i32
    return %arg0, %c0_i32 : i32, i32
  }
}

</mosaic_0001>

<llo_original>
// kernel: bert_classifier_forward.3
$region0: #{bert_classifier_forward.3}
  #allocation0 [shape = 'u32[]', space=smem, size = 0x4, offset = 0x4, fixed_abs, tag = 'smem constant byte address 0x4 - core index']
  #allocation1 [shape = 'u32[144,128]{1,0:T(1,128)}', space=vmem, size = 0x12000, scoped, tag = 'internal scratch']
  %s0 = inlined_call_operand.vmem [shape: f32[2,32], index: 0, kind: input, shape index: {}]
  %s1 = inlined_call_operand.vmem [shape: bf16[32,32], index: 1, kind: input, shape index: {}]
  %s2 = inlined_call_operand.vmem [shape: f32[1,32], index: 2, kind: input, shape index: {}]
  %s3 = inlined_call_operand.vmem [shape: bf16[32,128], index: 3, kind: input, shape index: {}]
  %s4 = inlined_call_operand.vmem [shape: f32[1,128], index: 4, kind: input, shape index: {}]
  %s5 = inlined_call_operand.vmem [shape: bf16[128,128], index: 5, kind: input, shape index: {}]
  %s6 = inlined_call_operand.vmem [shape: f32[1,128], index: 6, kind: input, shape index: {}]
  %s7 = inlined_call_operand.vmem [shape: bf16[128,128], index: 7, kind: input, shape index: {}]
  %s8 = inlined_call_operand.vmem [shape: f32[1,128], index: 8, kind: input, shape index: {}]
  %s9 = inlined_call_operand.hbm [shape: f32[2,128], index: 9, kind: output, shape index: {0}]
  %s10 = inlined_call_operand.hbm [shape: f32[2,128], index: 10, kind: output, shape index: {1}]
  %11 = xla_tuple %s9, %s10
  %s12 = sld [smem:[#allocation0]]
  $region54: #{bert_classifier_forward.3} parent=0
    _
  %s14 = ssub.s32 1, %s12
  %s15 = scalar_select 0, %s14, %s12
  $region1: #{bert_classifier_forward.3} parent=0
    #allocation2 [shape = 'u8[1024]{0}', space=vmem, size = 0x400, scoped, tag = 'output window, operand 0, single buffered']
    #allocation3 [shape = 's32[1]{0}', space=sflag, size = 0x4, scoped, tag = 'scoped memory for bert_classifier_forward.3']
    #allocation4 [shape = 'u8[1024]{0}', space=vmem, size = 0x400, scoped, tag = 'output window, operand 1, single buffered']
    #allocation5 [shape = 's32[1]{0}', space=sflag, size = 0x4, scoped, tag = 'scoped memory for bert_classifier_forward.3']
    %16 = vsyncpa [#allocation3], 0
    %17 = vsyncpa [#allocation5], 0
    // Predicated region
    $region2: #{bert_classifier_forward.3} parent=1 // pred_check
      _
    $region3: #{bert_classifier_forward.3} parent=1 // pred_check_branch
      %19 = sbr.rel (0) target = $region5
    $region4: #{bert_classifier_forward.3} parent=1 // pred_region
      _
    $region5: #{bert_classifier_forward.3} parent=1 // pred_fallthru
      _
    // Predicated region
    $region6: #{bert_classifier_forward.3} parent=1 // pred_check
      _
    $region7: #{bert_classifier_forward.3} parent=1 // pred_check_branch
      %21 = sbr.rel (0) target = $region9
    $region8: #{bert_classifier_forward.3} parent=1 // pred_region
      _
    $region9: #{bert_classifier_forward.3} parent=1 // pred_fallthru
      _
    // Predicated region
    $region10: #{bert_classifier_forward.3} parent=1 // pred_check
      _
    $region11: #{bert_classifier_forward.3} parent=1 // pred_check_branch
      %23 = sbr.rel (0) target = $region13
    $region12: #{bert_classifier_forward.3} parent=1 // pred_region
      _
    $region13: #{bert_classifier_forward.3} parent=1 // pred_fallthru
      _
    // Predicated region
    $region14: #{bert_classifier_forward.3} parent=1 // pred_check
      _
    $region15: #{bert_classifier_forward.3} parent=1 // pred_check_branch
      %25 = sbr.rel (0) target = $region17
    $region16: #{bert_classifier_forward.3} parent=1 // pred_region
      _
    $region17: #{bert_classifier_forward.3} parent=1 // pred_fallthru
      _
    // Predicated region
    $region18: #{bert_classifier_forward.3} parent=1 // pred_check
      _
    $region19: #{bert_classifier_forward.3} parent=1 // pred_check_branch
      %27 = sbr.rel (0) target = $region21
    $region20: #{bert_classifier_forward.3} parent=1 // pred_region
      _
    $region21: #{bert_classifier_forward.3} parent=1 // pred_fallthru
      _
    // Predicated region
    $region22: #{bert_classifier_forward.3} parent=1 // pred_check
      _
    $region23: #{bert_classifier_forward.3} parent=1 // pred_check_branch
      %29 = sbr.rel (0) target = $region25
    $region24: #{bert_classifier_forward.3} parent=1 // pred_region
      _
    $region25: #{bert_classifier_forward.3} parent=1 // pred_fallthru
      _
    // Predicated region
    $region26: #{bert_classifier_forward.3} parent=1 // pred_check
      _
    $region27: #{bert_classifier_forward.3} parent=1 // pred_check_branch
      %31 = sbr.rel (0) target = $region29
    $region28: #{bert_classifier_forward.3} parent=1 // pred_region
      _
    $region29: #{bert_classifier_forward.3} parent=1 // pred_fallthru
      _
    // Predicated region
    $region30: #{bert_classifier_forward.3} parent=1 // pred_check
      _
    $region31: #{bert_classifier_forward.3} parent=1 // pred_check_branch
      %33 = sbr.rel (0) target = $region33
    $region32: #{bert_classifier_forward.3} parent=1 // pred_region
      _
    $region33: #{bert_classifier_forward.3} parent=1 // pred_fallthru
      _
    // Predicated region
    $region34: #{bert_classifier_forward.3} parent=1 // pred_check
      _
    $region35: #{bert_classifier_forward.3} parent=1 // pred_check_branch
      %35 = sbr.rel (0) target = $region37
    $region36: #{bert_classifier_forward.3} parent=1 // pred_region
      _
    $region37: #{bert_classifier_forward.3} parent=1 // pred_fallthru
      _
    %v37 = vld [vmem:[%s0] sm:$0x3]
    %v38 = vpack.c.bf16 %v37, %v37
    %v39 = vld [vmem:[%s1] sm:$0xf]
    %v40 = vld [vmem:[%s1 + $0x4] sm:$0xf]
    %v41 = vld [vmem:[%s1 + $0x8] sm:$0xf]
    %v42 = vld [vmem:[%s1 + $0xc] sm:$0xf]
    %v43 = vld [vmem:[%s2] sm:$0x1]
    %v45 = vlaneseq
    %v46 = vshrl.u32 %v45, 7
    %v47 = vsub.s32 0, %v46
    %v48 = vrot.slane %v43, %v47
    %v54 = vunpack.c.l.b16 %v39
    %v55 = vunpack.c.l.b16 %v40
    %v56 = vunpack.c.l.b16 %v41
    %v57 = vunpack.c.l.b16 %v42
    %v58 = vpack.c.b16 %v55, %v54
    %v59 = vpack.c.b16 %v57, %v56
    %vm62 = vcmask 261120
    %v64 = vsel %vm62, %v38, 0
    %66 = vmatprep.subr.bf16.mxu0 0
    %67 = vmatpush1.bf16.msra.mxu0 %v58
    %68 = vmatprep.subr.bf16.mxu0 0
    %69 = vmatpush1.bf16.msra.mxu0 %v59
    %70 = vmatprep.subr.bf16.mxu0 0
    %71 = vmatpush1.bf16.msra.mxu0 0
    %72 = vmatprep.subr.bf16.mxu0 0
    %73 = vmatpush1.bf16.msra.mxu0 0
    %74 = vmatprep.subr.bf16.mxu0 0
    %75 = vmatpush1.bf16.msra.mxu0 0
    %76 = vmatprep.subr.bf16.mxu0 0
    %77 = vmatpush1.bf16.msra.mxu0 0
    %78 = vmatprep.subr.bf16.mxu0 0
    %79 = vmatpush1.bf16.msra.mxu0 0
    %80 = vmatprep.subr.bf16.mxu0 0
    %81 = vmatpush1.bf16.msra.mxu0 0
    %82 = vmatprep.subr.bf16.mxu0 0
    %83 = vmatpush1.bf16.msra.mxu0 0
    %84 = vmatprep.subr.bf16.mxu0 0
    %85 = vmatpush1.bf16.msra.mxu0 0
    %86 = vmatprep.subr.bf16.mxu0 0
    %87 = vmatpush1.bf16.msra.mxu0 0
    %88 = vmatprep.subr.bf16.mxu0 0
    %89 = vmatpush1.bf16.msra.mxu0 0
    %90 = vmatprep.subr.bf16.mxu0 0
    %91 = vmatpush1.bf16.msra.mxu0 0
    %92 = vmatprep.subr.bf16.mxu0 0
    %93 = vmatpush1.bf16.msra.mxu0 0
    %94 = vmatprep.subr.bf16.mxu0 0
    %95 = vmatpush1.bf16.msra.mxu0 0
    %96 = vmatprep.subr.bf16.mxu0 0
    %97 = vmatpush1.bf16.msra.mxu0 0
    %98 = vmatprep.mubr.bf16.mxu0 0
    %99 = vmatmul.mubr.bf16.gmra.mrb[0].mxu0 %v64
    %v100 = vpop.f32.mrb[0].mxu0
    %v101 = vadd.f32 %v48, %v100
    %v102 = vpop.f32.mrb[0].mxu0
    %v103 = vpop.f32.mrb[0].mxu0
    %v104 = vpop.f32.mrb[0].mxu0
    %105 = vdwg.mxu0
    %v106 = vmax.f32 %v101, 0.0
    %v107 = vpack.c.bf16 %v106, %v106
    %v108 = vld [vmem:[%s3] sm:$0xf]
    %v109 = vld [vmem:[%s3 + $0x4] sm:$0xf]
    %v110 = vld [vmem:[%s3 + $0x8] sm:$0xf]
    %v111 = vld [vmem:[%s3 + $0xc] sm:$0xf]
    %v112 = vld [vmem:[%s4] sm:$0x1]
    %v114 = vlaneseq
    %v115 = vshrl.u32 %v114, 7
    %v116 = vsub.s32 0, %v115
    %v117 = vrot.slane %v112, %v116
    %v123 = vunpack.c.l.b16 %v108
    %v124 = vunpack.c.l.b16 %v109
    %v125 = vunpack.c.l.b16 %v110
    %v126 = vunpack.c.l.b16 %v111
    %v127 = vpack.c.b16 %v124, %v123
    %v128 = vpack.c.b16 %v126, %v125
    %v132 = vsel %vm62, %v107, 0
    %134 = vmatprep.subr.bf16.mxu0 0
    %135 = vmatpush1.bf16.msra.mxu0 %v127
    %136 = vmatprep.subr.bf16.mxu0 0
    %137 = vmatpush1.bf16.msra.mxu0 %v128
    %138 = vmatprep.subr.bf16.mxu0 0
    %139 = vmatpush1.bf16.msra.mxu0 0
    %140 = vmatprep.subr.bf16.mxu0 0
    %141 = vmatpush1.bf16.msra.mxu0 0
    %142 = vmatprep.subr.bf16.mxu0 0
    %143 = vmatpush1.bf16.msra.mxu0 0
    %144 = vmatprep.subr.bf16.mxu0 0
    %145 = vmatpush1.bf16.msra.mxu0 0
    %146 = vmatprep.subr.bf16.mxu0 0
    %147 = vmatpush1.bf16.msra.mxu0 0
    %148 = vmatprep.subr.bf16.mxu0 0
    %149 = vmatpush1.bf16.msra.mxu0 0
    %150 = vmatprep.subr.bf16.mxu0 0
    %151 = vmatpush1.bf16.msra.mxu0 0
    %152 = vmatprep.subr.bf16.mxu0 0
    %153 = vmatpush1.bf16.msra.mxu0 0
    %154 = vmatprep.subr.bf16.mxu0 0
    %155 = vmatpush1.bf16.msra.mxu0 0
    %156 = vmatprep.subr.bf16.mxu0 0
    %157 = vmatpush1.bf16.msra.mxu0 0
    %158 = vmatprep.subr.bf16.mxu0 0
    %159 = vmatpush1.bf16.msra.mxu0 0
    %160 = vmatprep.subr.bf16.mxu0 0
    %161 = vmatpush1.bf16.msra.mxu0 0
    %162 = vmatprep.subr.bf16.mxu0 0
    %163 = vmatpush1.bf16.msra.mxu0 0
    %164 = vmatprep.subr.bf16.mxu0 0
    %165 = vmatpush1.bf16.msra.mxu0 0
    %166 = vmatprep.mubr.bf16.mxu0 0
    %167 = vmatmul.mubr.bf16.gmra.mrb[0].mxu0 %v132
    %v168 = vpop.f32.mrb[0].mxu0
    %v169 = vadd.f32 %v117, %v168
    %v170 = vpop.f32.mrb[0].mxu0
    %v171 = vpop.f32.mrb[0].mxu0
    %v172 = vpop.f32.mrb[0].mxu0
    %173 = vdwg.mxu0
    %v174 = vpack.c.bf16 %v169, %v169
    %v175 = vld [vmem:[%s5] sm:$0xf]
    %v176 = vld [vmem:[%s5 + $0x4] sm:$0xf]
    %v177 = vld [vmem:[%s5 + $0x8] sm:$0xf]
    %v178 = vld [vmem:[%s5 + $0xc] sm:$0xf]
    %v179 = vld [vmem:[%s5 + $0x10] sm:$0xf]
    %v180 = vld [vmem:[%s5 + $0x14] sm:$0xf]
    %v181 = vld [vmem:[%s5 + $0x18] sm:$0xf]
    %v182 = vld [vmem:[%s5 + $0x1c] sm:$0xf]
    %v183 = vld [vmem:[%s5 + $0x20] sm:$0xf]
    %v184 = vld [vmem:[%s5 + $0x24] sm:$0xf]
    %v185 = vld [vmem:[%s5 + $0x28] sm:$0xf]
    %v186 = vld [vmem:[%s5 + $0x2c] sm:$0xf]
    %v187 = vld [vmem:[%s5 + $0x30] sm:$0xf]
    %v188 = vld [vmem:[%s5 + $0x34] sm:$0xf]
    %v189 = vld [vmem:[%s5 + $0x38] sm:$0xf]
    %v190 = vld [vmem:[%s5 + $0x3c] sm:$0xf]
    %v191 = vld [vmem:[%s6] sm:$0x1]
    %v193 = vlaneseq
    %v194 = vshrl.u32 %v193, 7
    %v195 = vsub.s32 0, %v194
    %v196 = vrot.slane %v191, %v195
    %v214 = vunpack.c.l.b16 %v175
    %v215 = vunpack.c.l.b16 %v176
    %v216 = vunpack.c.l.b16 %v177
    %v217 = vunpack.c.l.b16 %v178
    %v218 = vunpack.c.l.b16 %v179
    %v219 = vunpack.c.l.b16 %v180
    %v220 = vunpack.c.l.b16 %v181
    %v221 = vunpack.c.l.b16 %v182
    %v222 = vunpack.c.l.b16 %v183
    %v223 = vunpack.c.l.b16 %v184
    %v224 = vunpack.c.l.b16 %v185
    %v225 = vunpack.c.l.b16 %v186
    %v226 = vunpack.c.l.b16 %v187
    %v227 = vunpack.c.l.b16 %v188
    %v228 = vunpack.c.l.b16 %v189
    %v229 = vunpack.c.l.b16 %v190
    %v230 = vpack.c.b16 %v215, %v214
    %v231 = vpack.c.b16 %v217, %v216
    %v232 = vpack.c.b16 %v219, %v218
    %v233 = vpack.c.b16 %v221, %v220
    %v234 = vpack.c.b16 %v223, %v222
    %v235 = vpack.c.b16 %v225, %v224
    %v236 = vpack.c.b16 %v227, %v226
    %v237 = vpack.c.b16 %v229, %v228
    %246 = vmatprep.subr.bf16.mxu0 0
    %247 = vmatpush1.bf16.msra.mxu0 %v230
    %248 = vmatprep.subr.bf16.mxu0 0
    %249 = vmatpush1.bf16.msra.mxu0 %v231
    %250 = vmatprep.subr.bf16.mxu0 0
    %251 = vmatpush1.bf16.msra.mxu0 %v232
    %252 = vmatprep.subr.bf16.mxu0 0
    %253 = vmatpush1.bf16.msra.mxu0 %v233
    %254 = vmatprep.subr.bf16.mxu0 0
    %255 = vmatpush1.bf16.msra.mxu0 %v234
    %256 = vmatprep.subr.bf16.mxu0 0
    %257 = vmatpush1.bf16.msra.mxu0 %v235
    %258 = vmatprep.subr.bf16.mxu0 0
    %259 = vmatpush1.bf16.msra.mxu0 %v236
    %260 = vmatprep.subr.bf16.mxu0 0
    %261 = vmatpush1.bf16.msra.mxu0 %v237
    %262 = vmatprep.subr.bf16.mxu0 0
    %263 = vmatpush1.bf16.msra.mxu0 0
    %264 = vmatprep.subr.bf16.mxu0 0
    %265 = vmatpush1.bf16.msra.mxu0 0
    %266 = vmatprep.subr.bf16.mxu0 0
    %267 = vmatpush1.bf16.msra.mxu0 0
    %268 = vmatprep.subr.bf16.mxu0 0
    %269 = vmatpush1.bf16.msra.mxu0 0
    %270 = vmatprep.subr.bf16.mxu0 0
    %271 = vmatpush1.bf16.msra.mxu0 0
    %272 = vmatprep.subr.bf16.mxu0 0
    %273 = vmatpush1.bf16.msra.mxu0 0
    %274 = vmatprep.subr.bf16.mxu0 0
    %275 = vmatpush1.bf16.msra.mxu0 0
    %276 = vmatprep.subr.bf16.mxu0 0
    %277 = vmatpush1.bf16.msra.mxu0 0
    %278 = vmatprep.mubr.bf16.mxu0 0
    %279 = vmatmul.mubr.bf16.gmra.mrb[0].mxu0 %v174
    %v280 = vpop.f32.mrb[0].mxu0
    %v281 = vadd.f32 %v196, %v280
    %v282 = vpop.f32.mrb[0].mxu0
    %v283 = vpop.f32.mrb[0].mxu0
    %v284 = vpop.f32.mrb[0].mxu0
    %285 = vdwg.mxu0
    %286 = vst [vmem:[#allocation2] sm:$0x3] %v281
    %v287 = vld [vmem:[%s7] sm:$0xf]
    %v288 = vld [vmem:[%s7 + $0x4] sm:$0xf]
    %v289 = vld [vmem:[%s7 + $0x8] sm:$0xf]
    %v290 = vld [vmem:[%s7 + $0xc] sm:$0xf]
    %v291 = vld [vmem:[%s7 + $0x10] sm:$0xf]
    %v292 = vld [vmem:[%s7 + $0x14] sm:$0xf]
    %v293 = vld [vmem:[%s7 + $0x18] sm:$0xf]
    %v294 = vld [vmem:[%s7 + $0x1c] sm:$0xf]
    %v295 = vld [vmem:[%s7 + $0x20] sm:$0xf]
    %v296 = vld [vmem:[%s7 + $0x24] sm:$0xf]
    %v297 = vld [vmem:[%s7 + $0x28] sm:$0xf]
    %v298 = vld [vmem:[%s7 + $0x2c] sm:$0xf]
    %v299 = vld [vmem:[%s7 + $0x30] sm:$0xf]
    %v300 = vld [vmem:[%s7 + $0x34] sm:$0xf]
    %v301 = vld [vmem:[%s7 + $0x38] sm:$0xf]
    %v302 = vld [vmem:[%s7 + $0x3c] sm:$0xf]
    %v303 = vld [vmem:[%s8] sm:$0x1]
    %v305 = vlaneseq
    %v306 = vshrl.u32 %v305, 7
    %v307 = vsub.s32 0, %v306
    %v308 = vrot.slane %v303, %v307
    %v326 = vunpack.c.l.b16 %v287
    %v327 = vunpack.c.l.b16 %v288
    %v328 = vunpack.c.l.b16 %v289
    %v329 = vunpack.c.l.b16 %v290
    %v330 = vunpack.c.l.b16 %v291
    %v331 = vunpack.c.l.b16 %v292
    %v332 = vunpack.c.l.b16 %v293
    %v333 = vunpack.c.l.b16 %v294
    %v334 = vunpack.c.l.b16 %v295
    %v335 = vunpack.c.l.b16 %v296
    %v336 = vunpack.c.l.b16 %v297
    %v337 = vunpack.c.l.b16 %v298
    %v338 = vunpack.c.l.b16 %v299
    %v339 = vunpack.c.l.b16 %v300
    %v340 = vunpack.c.l.b16 %v301
    %v341 = vunpack.c.l.b16 %v302
    %v342 = vpack.c.b16 %v327, %v326
    %v343 = vpack.c.b16 %v329, %v328
    %v344 = vpack.c.b16 %v331, %v330
    %v345 = vpack.c.b16 %v333, %v332
    %v346 = vpack.c.b16 %v335, %v334
    %v347 = vpack.c.b16 %v337, %v336
    %v348 = vpack.c.b16 %v339, %v338
    %v349 = vpack.c.b16 %v341, %v340
    %358 = vmatprep.subr.bf16.mxu0 0
    %359 = vmatpush1.bf16.msra.mxu0 %v342
    %360 = vmatprep.subr.bf16.mxu0 0
    %361 = vmatpush1.bf16.msra.mxu0 %v343
    %362 = vmatprep.subr.bf16.mxu0 0
    %363 = vmatpush1.bf16.msra.mxu0 %v344
    %364 = vmatprep.subr.bf16.mxu0 0
    %365 = vmatpush1.bf16.msra.mxu0 %v345
    %366 = vmatprep.subr.bf16.mxu0 0
    %367 = vmatpush1.bf16.msra.mxu0 %v346
    %368 = vmatprep.subr.bf16.mxu0 0
    %369 = vmatpush1.bf16.msra.mxu0 %v347
    %370 = vmatprep.subr.bf16.mxu0 0
    %371 = vmatpush1.bf16.msra.mxu0 %v348
    %372 = vmatprep.subr.bf16.mxu0 0
    %373 = vmatpush1.bf16.msra.mxu0 %v349
    %374 = vmatprep.subr.bf16.mxu0 0
    %375 = vmatpush1.bf16.msra.mxu0 0
    %376 = vmatprep.subr.bf16.mxu0 0
    %377 = vmatpush1.bf16.msra.mxu0 0
    %378 = vmatprep.subr.bf16.mxu0 0
    %379 = vmatpush1.bf16.msra.mxu0 0
    %380 = vmatprep.subr.bf16.mxu0 0
    %381 = vmatpush1.bf16.msra.mxu0 0
    %382 = vmatprep.subr.bf16.mxu0 0
    %383 = vmatpush1.bf16.msra.mxu0 0
    %384 = vmatprep.subr.bf16.mxu0 0
    %385 = vmatpush1.bf16.msra.mxu0 0
    %386 = vmatprep.subr.bf16.mxu0 0
    %387 = vmatpush1.bf16.msra.mxu0 0
    %388 = vmatprep.subr.bf16.mxu0 0
    %389 = vmatpush1.bf16.msra.mxu0 0
    %390 = vmatprep.mubr.bf16.mxu0 0
    %391 = vmatmul.mubr.bf16.gmra.mrb[0].mxu0 %v174
    %v392 = vpop.f32.mrb[0].mxu0
    %v393 = vadd.f32 %v308, %v392
    %v394 = vpop.f32.mrb[0].mxu0
    %v395 = vpop.f32.mrb[0].mxu0
    %v396 = vpop.f32.mrb[0].mxu0
    %397 = vdwg.mxu0
    %398 = vst [vmem:[#allocation4] sm:$0x3] %v393
    // Predicated region
    $region38: #{bert_classifier_forward.3} parent=1 // pred_check
      _
    $region39: #{bert_classifier_forward.3} parent=1 // pred_check_branch
      %400 = sbr.rel (0) target = $region41
    $region40: #{bert_classifier_forward.3} parent=1 // pred_region
      %s402 = ssub.s32 32, 32
      %403 = vsyncadd [#allocation3], %s402
      %s405 = sshll.u32 [#allocation2], 4
      %s406 = int_to_ptr.vmem [resolvable:$true] %s405
      %408 = dma.vmem_to_hbm [thread:$0]  %s406, 32, %s9, [#allocation3]
    $region41: #{bert_classifier_forward.3} parent=1 // pred_fallthru
      _
    // Predicated region
    $region42: #{bert_classifier_forward.3} parent=1 // pred_check
      _
    $region43: #{bert_classifier_forward.3} parent=1 // pred_check_branch
      %410 = sbr.rel (0) target = $region45
    $region44: #{bert_classifier_forward.3} parent=1 // pred_region
      %s412 = ssub.s32 32, 32
      %413 = vsyncadd [#allocation5], %s412
      %s415 = sshll.u32 [#allocation4], 4
      %s416 = int_to_ptr.vmem [resolvable:$true] %s415
      %418 = dma.vmem_to_hbm [thread:$0]  %s416, 32, %s10, [#allocation5]
    $region45: #{bert_classifier_forward.3} parent=1 // pred_fallthru
      _
    // Predicated region
    $region46: #{bert_classifier_forward.3} parent=1 // pred_check
      _
    $region47: #{bert_classifier_forward.3} parent=1 // pred_check_branch
      %420 = sbr.rel (0) target = $region49
    $region48: #{bert_classifier_forward.3} parent=1 // pred_region
      %421 = dma.done [#allocation3], 32
    $region49: #{bert_classifier_forward.3} parent=1 // pred_fallthru
      _
    // Predicated region
    $region50: #{bert_classifier_forward.3} parent=1 // pred_check
      _
    $region51: #{bert_classifier_forward.3} parent=1 // pred_check_branch
      %423 = sbr.rel (0) target = $region53
    $region52: #{bert_classifier_forward.3} parent=1 // pred_region
      %424 = dma.done [#allocation5], 32
    $region53: #{bert_classifier_forward.3} parent=1 // pred_fallthru
      _
    %425 = vsyncpa [#allocation3], 1
    %426 = vsyncpa [#allocation5], 1

// kernel: bert_classifier_forward.2
$region0: #{bert_classifier_forward.2}
  #allocation0 [shape = 'u32[]', space=smem, size = 0x4, offset = 0x4, fixed_abs, tag = 'smem constant byte address 0x4 - core index']
  #allocation1 [shape = 'u32[144,128]{1,0:T(1,128)}', space=vmem, size = 0x12000, scoped, tag = 'internal scratch']
  #allocation2 [shape = 'f32[8,32]{1,0:T(8,128)}', space=vmem, size = 0x1000, scoped, tag = 'scratch operand']
  #allocation3 [shape = 'f32[8,32]{1,0:T(8,128)}', space=vmem, size = 0x1000, scoped, tag = 'scratch operand']
  %s0 = inlined_call_operand.vmem [shape: f32[16,32], index: 0, kind: input, shape index: {}]
  %s1 = inlined_call_operand.vmem [shape: f32[2,1,8], index: 1, kind: input, shape index: {}]
  %s2 = inlined_call_operand.vmem [shape: f32[1,32], index: 2, kind: input, shape index: {}]
  %s3 = inlined_call_operand.vmem [shape: f32[1,32], index: 3, kind: input, shape index: {}]
  %s4 = inlined_call_operand.vmem [shape: bf16[2,32,96], index: 4, kind: input, shape index: {}]
  %s5 = inlined_call_operand.vmem [shape: f32[2,1,96], index: 5, kind: input, shape index: {}]
  %s6 = inlined_call_operand.vmem [shape: bf16[2,32,32], index: 6, kind: input, shape index: {}]
  %s7 = inlined_call_operand.vmem [shape: f32[2,1,32], index: 7, kind: input, shape index: {}]
  %s8 = inlined_call_operand.vmem [shape: f32[2,1,32], index: 8, kind: input, shape index: {}]
  %s9 = inlined_call_operand.vmem [shape: f32[2,1,32], index: 9, kind: input, shape index: {}]
  %s10 = inlined_call_operand.vmem [shape: bf16[2,32,64], index: 10, kind: input, shape index: {}]
  %s11 = inlined_call_operand.vmem [shape: f32[2,1,64], index: 11, kind: input, shape index: {}]
  %s12 = inlined_call_operand.vmem [shape: bf16[2,64,32], index: 12, kind: input, shape index: {}]
  %s13 = inlined_call_operand.vmem [shape: f32[2,1,32], index: 13, kind: input, shape index: {}]
  %s14 = inlined_call_operand.vmem [shape: f32[2,1,32], index: 14, kind: input, shape index: {}]
  %s15 = inlined_call_operand.vmem [shape: f32[2,1,32], index: 15, kind: input, shape index: {}]
  %s16 = inlined_call_operand.vmem [shape: f32[16,32], index: 16, kind: output, shape index: {}]
  %s17 = sld [smem:[#allocation0]]
  $region105: #{bert_classifier_forward.2} parent=0
    _
  %s19 = ssub.s32 1, %s17
  %s20 = scalar_select 0, %s19, %s17
  loop: start=0, step=1, limit=6
  $region2: #{bert_classifier_forward.2} parent=0 // loop_pre_header
    _
  $region3: #{bert_classifier_forward.2} parent=0 // loop_header
    %s22 = sphi 0, %s26
    %p23 = scmp.ge.s32.totalorder %s22, 6
    %s29 = sphi 0, %s41
    %s30 = sphi 0, %s37
    %s31 = sphi 0, %s29
    %s32 = sphi 0, %s30
    %s33 = sphi 0, %s31
    %s34 = sphi 0, %s32
    %s44 = sphi 0, %s46
    %s47 = sphi 0, %s44
    %s48 = sphi 0, %s47
    %s64 = sphi 0, %s48
    %s70 = sphi 0, %s72
    %s73 = sphi 0, %s70
    %s74 = sphi 0, %s73
    %s90 = sphi 0, %s74
    %s94 = sphi 0, %s94
    %s96 = sphi 0, %s94
    %s97 = sphi 0, %s96
    %s111 = sphi 0, %s97
    %s115 = sphi 0, %s115
    %s117 = sphi 0, %s115
    %s118 = sphi 0, %s117
    %s132 = sphi 0, %s118
    %s138 = sphi 0, %s140
    %s141 = sphi 0, %s138
    %s142 = sphi 0, %s141
    %s158 = sphi 0, %s142
    %s164 = sphi 0, %s166
    %s167 = sphi 0, %s164
    %s168 = sphi 0, %s167
    %s184 = sphi 0, %s168
    %s190 = sphi 0, %s192
    %s193 = sphi 0, %s190
    %s194 = sphi 0, %s193
    %s210 = sphi 0, %s194
    %s216 = sphi 0, %s218
    %s219 = sphi 0, %s216
    %s220 = sphi 0, %s219
    %s236 = sphi 0, %s220
    %s242 = sphi 0, %s244
    %s245 = sphi 0, %s242
    %s246 = sphi 0, %s245
    %s262 = sphi 0, %s246
    %s268 = sphi 0, %s270
    %s271 = sphi 0, %s268
    %s272 = sphi 0, %s271
    %s288 = sphi 0, %s272
    %s294 = sphi 0, %s296
    %s297 = sphi 0, %s294
    %s298 = sphi 0, %s297
    %s314 = sphi 0, %s298
    %s320 = sphi 0, %s322
    %s323 = sphi 0, %s320
    %s324 = sphi 0, %s323
    %s340 = sphi 0, %s324
    %s346 = sphi 0, %s348
    %s349 = sphi 0, %s346
    %s350 = sphi 0, %s349
    %s366 = sphi 0, %s350
    %s372 = sphi 0, %s374
    %s375 = sphi 0, %s372
    %s376 = sphi 0, %s375
    %s392 = sphi 0, %s376
    %s398 = sphi 0, %s400
    %s401 = sphi 0, %s398
    %s402 = sphi 0, %s401
    %s418 = sphi 0, %s402
    %s424 = sphi 0, %s426
    %s427 = sphi 0, %s424
    %s428 = sphi 0, %s427
    %s444 = sphi 0, %s428
    %s450 = sphi 0, %s452
    %s453 = sphi 0, %s450
    %s454 = sphi 0, %s453
    %s470 = sphi 0, %s454
  $region4: #{bert_classifier_forward.2} parent=0 // loop_header_branch
    %25 = sbr.rel (%p23) target = $region8
  $region5: #{bert_classifier_forward.2} parent=0 // loop_body
    %s27 = ssub.s32 %s22, 1
    %s28 = ssub.s32 %s22, 2
    %s35 = sadd.s32 1, %s30
    %p36 = scmp.ge.s32.totalorder %s35, 2
    %s37 = scalar_select %p36, 0, %s35
    %s38 = sadd.s32 1, %s29
    %s39 = scalar_select %p36, %s38, %s29
    %p40 = scmp.ge.s32.totalorder %s39, 2
    %s41 = scalar_select %p40, 0, %s39
    %s42 = ssub.s32 %s29, %s41
    %p43 = scmp.eq.s32.totalorder %s42, 0
    %s45 = sadd.s32 %s44, 1
    %s46 = scalar_select %p43, %s44, %s45
    %p49 = pneg %p43
    %p50 = scmp.eq.s32.totalorder %s22, 3
    %p51 = por %p49, %p50
    %p52 = scmp.ne.s32.totalorder %s44, %s47
    %p53 = scmp.eq.s32.totalorder %s22, 0
    %p54 = por %p52, %p53
    %p55 = scmp.ne.s32.totalorder %s44, %s47
    %p56 = scmp.eq.s32.totalorder %s27, 3
    %p57 = por %p55, %p56
    %p58 = scmp.ne.s32.totalorder %s47, %s48
    %p59 = scmp.eq.s32.totalorder %s27, 0
    %p60 = por %p58, %p59
    %p61 = scmp.ne.s32.totalorder %s47, %s48
    %p62 = scmp.eq.s32.totalorder %s28, 3
    %p63 = por %p61, %p62
    %p65 = scmp.ne.s32.totalorder %s48, %s64
    %p66 = scmp.eq.s32.totalorder %s28, 0
    %p67 = por %p65, %p66
    %s68 = ssub.s32 %s29, %s41
    %p69 = scmp.eq.s32.totalorder %s68, 0
    %s71 = sadd.s32 %s70, 1
    %s72 = scalar_select %p69, %s70, %s71
    %p75 = pneg %p69
    %p76 = scmp.eq.s32.totalorder %s22, 3
    %p77 = por %p75, %p76
    %p78 = scmp.ne.s32.totalorder %s70, %s73
    %p79 = scmp.eq.s32.totalorder %s22, 0
    %p80 = por %p78, %p79
    %p81 = scmp.ne.s32.totalorder %s70, %s73
    %p82 = scmp.eq.s32.totalorder %s27, 3
    %p83 = por %p81, %p82
    %p84 = scmp.ne.s32.totalorder %s73, %s74
    %p85 = scmp.eq.s32.totalorder %s27, 0
    %p86 = por %p84, %p85
    %p87 = scmp.ne.s32.totalorder %s73, %s74
    %p88 = scmp.eq.s32.totalorder %s28, 3
    %p89 = por %p87, %p88
    %p91 = scmp.ne.s32.totalorder %s74, %s90
    %p92 = scmp.eq.s32.totalorder %s28, 0
    %p93 = por %p91, %p92
    %s95 = sadd.s32 %s94, 1
    %p98 = scmp.eq.s32.totalorder %s22, 3
    %p99 = scmp.ne.s32.totalorder %s94, %s96
    %p100 = scmp.eq.s32.totalorder %s22, 0
    %p101 = por %p99, %p100
    %p102 = scmp.ne.s32.totalorder %s94, %s96
    %p103 = scmp.eq.s32.totalorder %s27, 3
    %p104 = por %p102, %p103
    %p105 = scmp.ne.s32.totalorder %s96, %s97
    %p106 = scmp.eq.s32.totalorder %s27, 0
    %p107 = por %p105, %p106
    %p108 = scmp.ne.s32.totalorder %s96, %s97
    %p109 = scmp.eq.s32.totalorder %s28, 3
    %p110 = por %p108, %p109
    %p112 = scmp.ne.s32.totalorder %s97, %s111
    %p113 = scmp.eq.s32.totalorder %s28, 0
    %p114 = por %p112, %p113
    %s116 = sadd.s32 %s115, 1
    %p119 = scmp.eq.s32.totalorder %s22, 3
    %p120 = scmp.ne.s32.totalorder %s115, %s117
    %p121 = scmp.eq.s32.totalorder %s22, 0
    %p122 = por %p120, %p121
    %p123 = scmp.ne.s32.totalorder %s115, %s117
    %p124 = scmp.eq.s32.totalorder %s27, 3
    %p125 = por %p123, %p124
    %p126 = scmp.ne.s32.totalorder %s117, %s118
    %p127 = scmp.eq.s32.totalorder %s27, 0
    %p128 = por %p126, %p127
    %p129 = scmp.ne.s32.totalorder %s117, %s118
    %p130 = scmp.eq.s32.totalorder %s28, 3
    %p131 = por %p129, %p130
    %p133 = scmp.ne.s32.totalorder %s118, %s132
    %p134 = scmp.eq.s32.totalorder %s28, 0
    %p135 = por %p133, %p134
    %s136 = ssub.s32 %s30, %s37
    %p137 = scmp.eq.s32.totalorder %s136, 0
    %s139 = sadd.s32 %s138, 1
    %s140 = scalar_select %p137, %s138, %s139
    %p143 = pneg %p137
    %p144 = scmp.eq.s32.totalorder %s22, 3
    %p145 = por %p143, %p144
    %p146 = scmp.ne.s32.totalorder %s138, %s141
    %p147 = scmp.eq.s32.totalorder %s22, 0
    %p148 = por %p146, %p147
    %p149 = scmp.ne.s32.totalorder %s138, %s141
    %p150 = scmp.eq.s32.totalorder %s27, 3
    %p151 = por %p149, %p150
    %p152 = scmp.ne.s32.totalorder %s141, %s142
    %p153 = scmp.eq.s32.totalorder %s27, 0
    %p154 = por %p152, %p153
    %p155 = scmp.ne.s32.totalorder %s141, %s142
    %p156 = scmp.eq.s32.totalorder %s28, 3
    %p157 = por %p155, %p156
    %p159 = scmp.ne.s32.totalorder %s142, %s158
    %p160 = scmp.eq.s32.totalorder %s28, 0
    %p161 = por %p159, %p160
    %s162 = ssub.s32 %s30, %s37
    %p163 = scmp.eq.s32.totalorder %s162, 0
    %s165 = sadd.s32 %s164, 1
    %s166 = scalar_select %p163, %s164, %s165
    %p169 = pneg %p163
    %p170 = scmp.eq.s32.totalorder %s22, 3
    %p171 = por %p169, %p170
    %p172 = scmp.ne.s32.totalorder %s164, %s167
    %p173 = scmp.eq.s32.totalorder %s22, 0
    %p174 = por %p172, %p173
    %p175 = scmp.ne.s32.totalorder %s164, %s167
    %p176 = scmp.eq.s32.totalorder %s27, 3
    %p177 = por %p175, %p176
    %p178 = scmp.ne.s32.totalorder %s167, %s168
    %p179 = scmp.eq.s32.totalorder %s27, 0
    %p180 = por %p178, %p179
    %p181 = scmp.ne.s32.totalorder %s167, %s168
    %p182 = scmp.eq.s32.totalorder %s28, 3
    %p183 = por %p181, %p182
    %p185 = scmp.ne.s32.totalorder %s168, %s184
    %p186 = scmp.eq.s32.totalorder %s28, 0
    %p187 = por %p185, %p186
    %s188 = ssub.s32 %s30, %s37
    %p189 = scmp.eq.s32.totalorder %s188, 0
    %s191 = sadd.s32 %s190, 1
    %s192 = scalar_select %p189, %s190, %s191
    %p195 = pneg %p189
    %p196 = scmp.eq.s32.totalorder %s22, 3
    %p197 = por %p195, %p196
    %p198 = scmp.ne.s32.totalorder %s190, %s193
    %p199 = scmp.eq.s32.totalorder %s22, 0
    %p200 = por %p198, %p199
    %p201 = scmp.ne.s32.totalorder %s190, %s193
    %p202 = scmp.eq.s32.totalorder %s27, 3
    %p203 = por %p201, %p202
    %p204 = scmp.ne.s32.totalorder %s193, %s194
    %p205 = scmp.eq.s32.totalorder %s27, 0
    %p206 = por %p204, %p205
    %p207 = scmp.ne.s32.totalorder %s193, %s194
    %p208 = scmp.eq.s32.totalorder %s28, 3
    %p209 = por %p207, %p208
    %p211 = scmp.ne.s32.totalorder %s194, %s210
    %p212 = scmp.eq.s32.totalorder %s28, 0
    %p213 = por %p211, %p212
    %s214 = ssub.s32 %s30, %s37
    %p215 = scmp.eq.s32.totalorder %s214, 0
    %s217 = sadd.s32 %s216, 1
    %s218 = scalar_select %p215, %s216, %s217
    %p221 = pneg %p215
    %p222 = scmp.eq.s32.totalorder %s22, 3
    %p223 = por %p221, %p222
    %p224 = scmp.ne.s32.totalorder %s216, %s219
    %p225 = scmp.eq.s32.totalorder %s22, 0
    %p226 = por %p224, %p225
    %p227 = scmp.ne.s32.totalorder %s216, %s219
    %p228 = scmp.eq.s32.totalorder %s27, 3
    %p229 = por %p227, %p228
    %p230 = scmp.ne.s32.totalorder %s219, %s220
    %p231 = scmp.eq.s32.totalorder %s27, 0
    %p232 = por %p230, %p231
    %p233 = scmp.ne.s32.totalorder %s219, %s220
    %p234 = scmp.eq.s32.totalorder %s28, 3
    %p235 = por %p233, %p234
    %p237 = scmp.ne.s32.totalorder %s220, %s236
    %p238 = scmp.eq.s32.totalorder %s28, 0
    %p239 = por %p237, %p238
    %s240 = ssub.s32 %s30, %s37
    %p241 = scmp.eq.s32.totalorder %s240, 0
    %s243 = sadd.s32 %s242, 1
    %s244 = scalar_select %p241, %s242, %s243
    %p247 = pneg %p241
    %p248 = scmp.eq.s32.totalorder %s22, 3
    %p249 = por %p247, %p248
    %p250 = scmp.ne.s32.totalorder %s242, %s245
    %p251 = scmp.eq.s32.totalorder %s22, 0
    %p252 = por %p250, %p251
    %p253 = scmp.ne.s32.totalorder %s242, %s245
    %p254 = scmp.eq.s32.totalorder %s27, 3
    %p255 = por %p253, %p254
    %p256 = scmp.ne.s32.totalorder %s245, %s246
    %p257 = scmp.eq.s32.totalorder %s27, 0
    %p258 = por %p256, %p257
    %p259 = scmp.ne.s32.totalorder %s245, %s246
    %p260 = scmp.eq.s32.totalorder %s28, 3
    %p261 = por %p259, %p260
    %p263 = scmp.ne.s32.totalorder %s246, %s262
    %p264 = scmp.eq.s32.totalorder %s28, 0
    %p265 = por %p263, %p264
    %s266 = ssub.s32 %s30, %s37
    %p267 = scmp.eq.s32.totalorder %s266, 0
    %s269 = sadd.s32 %s268, 1
    %s270 = scalar_select %p267, %s268, %s269
    %p273 = pneg %p267
    %p274 = scmp.eq.s32.totalorder %s22, 3
    %p275 = por %p273, %p274
    %p276 = scmp.ne.s32.totalorder %s268, %s271
    %p277 = scmp.eq.s32.totalorder %s22, 0
    %p278 = por %p276, %p277
    %p279 = scmp.ne.s32.totalorder %s268, %s271
    %p280 = scmp.eq.s32.totalorder %s27, 3
    %p281 = por %p279, %p280
    %p282 = scmp.ne.s32.totalorder %s271, %s272
    %p283 = scmp.eq.s32.totalorder %s27, 0
    %p284 = por %p282, %p283
    %p285 = scmp.ne.s32.totalorder %s271, %s272
    %p286 = scmp.eq.s32.totalorder %s28, 3
    %p287 = por %p285, %p286
    %p289 = scmp.ne.s32.totalorder %s272, %s288
    %p290 = scmp.eq.s32.totalorder %s28, 0
    %p291 = por %p289, %p290
    %s292 = ssub.s32 %s30, %s37
    %p293 = scmp.eq.s32.totalorder %s292, 0
    %s295 = sadd.s32 %s294, 1
    %s296 = scalar_select %p293, %s294, %s295
    %p299 = pneg %p293
    %p300 = scmp.eq.s32.totalorder %s22, 3
    %p301 = por %p299, %p300
    %p302 = scmp.ne.s32.totalorder %s294, %s297
    %p303 = scmp.eq.s32.totalorder %s22, 0
    %p304 = por %p302, %p303
    %p305 = scmp.ne.s32.totalorder %s294, %s297
    %p306 = scmp.eq.s32.totalorder %s27, 3
    %p307 = por %p305, %p306
    %p308 = scmp.ne.s32.totalorder %s297, %s298
    %p309 = scmp.eq.s32.totalorder %s27, 0
    %p310 = por %p308, %p309
    %p311 = scmp.ne.s32.totalorder %s297, %s298
    %p312 = scmp.eq.s32.totalorder %s28, 3
    %p313 = por %p311, %p312
    %p315 = scmp.ne.s32.totalorder %s298, %s314
    %p316 = scmp.eq.s32.totalorder %s28, 0
    %p317 = por %p315, %p316
    %s318 = ssub.s32 %s30, %s37
    %p319 = scmp.eq.s32.totalorder %s318, 0
    %s321 = sadd.s32 %s320, 1
    %s322 = scalar_select %p319, %s320, %s321
    %p325 = pneg %p319
    %p326 = scmp.eq.s32.totalorder %s22, 3
    %p327 = por %p325, %p326
    %p328 = scmp.ne.s32.totalorder %s320, %s323
    %p329 = scmp.eq.s32.totalorder %s22, 0
    %p330 = por %p328, %p329
    %p331 = scmp.ne.s32.totalorder %s320, %s323
    %p332 = scmp.eq.s32.totalorder %s27, 3
    %p333 = por %p331, %p332
    %p334 = scmp.ne.s32.totalorder %s323, %s324
    %p335 = scmp.eq.s32.totalorder %s27, 0
    %p336 = por %p334, %p335
    %p337 = scmp.ne.s32.totalorder %s323, %s324
    %p338 = scmp.eq.s32.totalorder %s28, 3
    %p339 = por %p337, %p338
    %p341 = scmp.ne.s32.totalorder %s324, %s340
    %p342 = scmp.eq.s32.totalorder %s28, 0
    %p343 = por %p341, %p342
    %s344 = ssub.s32 %s30, %s37
    %p345 = scmp.eq.s32.totalorder %s344, 0
    %s347 = sadd.s32 %s346, 1
    %s348 = scalar_select %p345, %s346, %s347
    %p351 = pneg %p345
    %p352 = scmp.eq.s32.totalorder %s22, 3
    %p353 = por %p351, %p352
    %p354 = scmp.ne.s32.totalorder %s346, %s349
    %p355 = scmp.eq.s32.totalorder %s22, 0
    %p356 = por %p354, %p355
    %p357 = scmp.ne.s32.totalorder %s346, %s349
    %p358 = scmp.eq.s32.totalorder %s27, 3
    %p359 = por %p357, %p358
    %p360 = scmp.ne.s32.totalorder %s349, %s350
    %p361 = scmp.eq.s32.totalorder %s27, 0
    %p362 = por %p360, %p361
    %p363 = scmp.ne.s32.totalorder %s349, %s350
    %p364 = scmp.eq.s32.totalorder %s28, 3
    %p365 = por %p363, %p364
    %p367 = scmp.ne.s32.totalorder %s350, %s366
    %p368 = scmp.eq.s32.totalorder %s28, 0
    %p369 = por %p367, %p368
    %s370 = ssub.s32 %s30, %s37
    %p371 = scmp.eq.s32.totalorder %s370, 0
    %s373 = sadd.s32 %s372, 1
    %s374 = scalar_select %p371, %s372, %s373
    %p377 = pneg %p371
    %p378 = scmp.eq.s32.totalorder %s22, 3
    %p379 = por %p377, %p378
    %p380 = scmp.ne.s32.totalorder %s372, %s375
    %p381 = scmp.eq.s32.totalorder %s22, 0
    %p382 = por %p380, %p381
    %p383 = scmp.ne.s32.totalorder %s372, %s375
    %p384 = scmp.eq.s32.totalorder %s27, 3
    %p385 = por %p383, %p384
    %p386 = scmp.ne.s32.totalorder %s375, %s376
    %p387 = scmp.eq.s32.totalorder %s27, 0
    %p388 = por %p386, %p387
    %p389 = scmp.ne.s32.totalorder %s375, %s376
    %p390 = scmp.eq.s32.totalorder %s28, 3
    %p391 = por %p389, %p390
    %p393 = scmp.ne.s32.totalorder %s376, %s392
    %p394 = scmp.eq.s32.totalorder %s28, 0
    %p395 = por %p393, %p394
    %s396 = ssub.s32 %s30, %s37
    %p397 = scmp.eq.s32.totalorder %s396, 0
    %s399 = sadd.s32 %s398, 1
    %s400 = scalar_select %p397, %s398, %s399
    %p403 = pneg %p397
    %p404 = scmp.eq.s32.totalorder %s22, 3
    %p405 = por %p403, %p404
    %p406 = scmp.ne.s32.totalorder %s398, %s401
    %p407 = scmp.eq.s32.totalorder %s22, 0
    %p408 = por %p406, %p407
    %p409 = scmp.ne.s32.totalorder %s398, %s401
    %p410 = scmp.eq.s32.totalorder %s27, 3
    %p411 = por %p409, %p410
    %p412 = scmp.ne.s32.totalorder %s401, %s402
    %p413 = scmp.eq.s32.totalorder %s27, 0
    %p414 = por %p412, %p413
    %p415 = scmp.ne.s32.totalorder %s401, %s402
    %p416 = scmp.eq.s32.totalorder %s28, 3
    %p417 = por %p415, %p416
    %p419 = scmp.ne.s32.totalorder %s402, %s418
    %p420 = scmp.eq.s32.totalorder %s28, 0
    %p421 = por %p419, %p420
    %s422 = ssub.s32 %s30, %s37
    %p423 = scmp.eq.s32.totalorder %s422, 0
    %s425 = sadd.s32 %s424, 1
    %s426 = scalar_select %p423, %s424, %s425
    %p429 = pneg %p423
    %p430 = scmp.eq.s32.totalorder %s22, 3
    %p431 = por %p429, %p430
    %p432 = scmp.ne.s32.totalorder %s424, %s427
    %p433 = scmp.eq.s32.totalorder %s22, 0
    %p434 = por %p432, %p433
    %p435 = scmp.ne.s32.totalorder %s424, %s427
    %p436 = scmp.eq.s32.totalorder %s27, 3
    %p437 = por %p435, %p436
    %p438 = scmp.ne.s32.totalorder %s427, %s428
    %p439 = scmp.eq.s32.totalorder %s27, 0
    %p440 = por %p438, %p439
    %p441 = scmp.ne.s32.totalorder %s427, %s428
    %p442 = scmp.eq.s32.totalorder %s28, 3
    %p443 = por %p441, %p442
    %p445 = scmp.ne.s32.totalorder %s428, %s444
    %p446 = scmp.eq.s32.totalorder %s28, 0
    %p447 = por %p445, %p446
    %s448 = ssub.s32 %s29, %s41
    %p449 = scmp.eq.s32.totalorder %s448, 0
    %s451 = sadd.s32 %s450, 1
    %s452 = scalar_select %p449, %s450, %s451
    %p455 = pneg %p449
    %p456 = scmp.eq.s32.totalorder %s22, 3
    %p457 = por %p455, %p456
    %p458 = scmp.ne.s32.totalorder %s450, %s453
    %p459 = scmp.eq.s32.totalorder %s22, 0
    %p460 = por %p458, %p459
    %p461 = scmp.ne.s32.totalorder %s450, %s453
    %p462 = scmp.eq.s32.totalorder %s27, 3
    %p463 = por %p461, %p462
    %p464 = scmp.ne.s32.totalorder %s453, %s454
    %p465 = scmp.eq.s32.totalorder %s27, 0
    %p466 = por %p464, %p465
    %p467 = scmp.ne.s32.totalorder %s453, %s454
    %p468 = scmp.eq.s32.totalorder %s28, 3
    %p469 = por %p467, %p468
    %p471 = scmp.ne.s32.totalorder %s454, %s470
    %p472 = scmp.eq.s32.totalorder %s28, 0
    %p473 = por %p471, %p472
    %p474 = scmp.le.s32.totalorder 1, %s22
    %p475 = scmp.lt.s32.totalorder %s22, 5
    %p476 = pnand %p474, %p475
    %p477 = pneg %p476
    // Predicated region
    $region9: #{bert_classifier_forward.2} parent=5 // pred_check
      _
    $region10: #{bert_classifier_forward.2} parent=5 // pred_check_branch
      %479 = sbr.rel (%p476) target = $region12
    $region11: #{bert_classifier_forward.2} parent=5 // pred_region
      %s480 = ssub.s32 %s22, 1
      // Predicated region
      $region13: #{bert_classifier_forward.2} parent=11 // pred_check
        %p481 = pneg %p107
      $region14: #{bert_classifier_forward.2} parent=11 // pred_check_branch
        %483 = sbr.rel (%p481) target = $region16
      $region15: #{bert_classifier_forward.2} parent=11 // pred_region
        _
      $region16: #{bert_classifier_forward.2} parent=11 // pred_fallthru
        _
      // Predicated region
      $region17: #{bert_classifier_forward.2} parent=11 // pred_check
        %p484 = pneg %p128
      $region18: #{bert_classifier_forward.2} parent=11 // pred_check_branch
        %486 = sbr.rel (%p484) target = $region20
      $region19: #{bert_classifier_forward.2} parent=11 // pred_region
        _
      $region20: #{bert_classifier_forward.2} parent=11 // pred_fallthru
        _
    $region12: #{bert_classifier_forward.2} parent=5 // pred_fallthru
      _
    %p487 = scmp.lt.s32.totalorder %s22, 4
    // Predicated region
    $region21: #{bert_classifier_forward.2} parent=5 // pred_check
      %p488 = pneg %p487
    $region22: #{bert_classifier_forward.2} parent=5 // pred_check_branch
      %490 = sbr.rel (%p488) target = $region24
    $region23: #{bert_classifier_forward.2} parent=5 // pred_region
      // Predicated region
      $region25: #{bert_classifier_forward.2} parent=23 // pred_check
        %p491 = pneg %p54
      $region26: #{bert_classifier_forward.2} parent=23 // pred_check_branch
        %493 = sbr.rel (%p491) target = $region28
      $region27: #{bert_classifier_forward.2} parent=23 // pred_region
        %p494 = scmp.lt.s32.totalorder %s29, 1
        %s495 = scalar_select %p494, %s29, 1
        %s496 = smul.addr %s495, 8
        %s497 = scalar_lea.vmem %s0, %s496
      $region28: #{bert_classifier_forward.2} parent=23 // pred_fallthru
        _
      // Predicated region
      $region29: #{bert_classifier_forward.2} parent=23 // pred_check
        %p498 = pneg %p80
      $region30: #{bert_classifier_forward.2} parent=23 // pred_check_branch
        %500 = sbr.rel (%p498) target = $region32
      $region31: #{bert_classifier_forward.2} parent=23 // pred_region
        %p501 = scmp.lt.s32.totalorder %s29, 1
        %s502 = scalar_select %p501, %s29, 1
        %s503 = scalar_lea.vmem %s1, %s502
      $region32: #{bert_classifier_forward.2} parent=23 // pred_fallthru
        _
      // Predicated region
      $region33: #{bert_classifier_forward.2} parent=23 // pred_check
        %p504 = pneg %p148
      $region34: #{bert_classifier_forward.2} parent=23 // pred_check_branch
        %506 = sbr.rel (%p504) target = $region36
      $region35: #{bert_classifier_forward.2} parent=23 // pred_region
        %p507 = scmp.lt.s32.totalorder %s30, 1
        %s508 = scalar_select %p507, %s30, 1
        %s509 = smul.addr %s508, 4
        %s510 = smul.addr %s509, 4
        %s511 = scalar_lea.vmem %s4, %s510
      $region36: #{bert_classifier_forward.2} parent=23 // pred_fallthru
        _
      // Predicated region
      $region37: #{bert_classifier_forward.2} parent=23 // pred_check
        %p512 = pneg %p174
      $region38: #{bert_classifier_forward.2} parent=23 // pred_check_branch
        %514 = sbr.rel (%p512) target = $region40
      $region39: #{bert_classifier_forward.2} parent=23 // pred_region
        %p515 = scmp.lt.s32.totalorder %s30, 1
        %s516 = scalar_select %p515, %s30, 1
        %s517 = scalar_lea.vmem %s5, %s516
      $region40: #{bert_classifier_forward.2} parent=23 // pred_fallthru
        _
      // Predicated region
      $region41: #{bert_classifier_forward.2} parent=23 // pred_check
        %p518 = pneg %p200
      $region42: #{bert_classifier_forward.2} parent=23 // pred_check_branch
        %520 = sbr.rel (%p518) target = $region44
      $region43: #{bert_classifier_forward.2} parent=23 // pred_region
        %p521 = scmp.lt.s32.totalorder %s30, 1
        %s522 = scalar_select %p521, %s30, 1
        %s523 = smul.addr %s522, 4
        %s524 = smul.addr %s523, 4
        %s525 = scalar_lea.vmem %s6, %s524
      $region44: #{bert_classifier_forward.2} parent=23 // pred_fallthru
        _
      // Predicated region
      $region45: #{bert_classifier_forward.2} parent=23 // pred_check
        %p526 = pneg %p226
      $region46: #{bert_classifier_forward.2} parent=23 // pred_check_branch
        %528 = sbr.rel (%p526) target = $region48
      $region47: #{bert_classifier_forward.2} parent=23 // pred_region
        %p529 = scmp.lt.s32.totalorder %s30, 1
        %s530 = scalar_select %p529, %s30, 1
        %s531 = scalar_lea.vmem %s7, %s530
      $region48: #{bert_classifier_forward.2} parent=23 // pred_fallthru
        _
      // Predicated region
      $region49: #{bert_classifier_forward.2} parent=23 // pred_check
        %p532 = pneg %p252
      $region50: #{bert_classifier_forward.2} parent=23 // pred_check_branch
        %534 = sbr.rel (%p532) target = $region52
      $region51: #{bert_classifier_forward.2} parent=23 // pred_region
        %p535 = scmp.lt.s32.totalorder %s30, 1
        %s536 = scalar_select %p535, %s30, 1
        %s537 = scalar_lea.vmem %s8, %s536
      $region52: #{bert_classifier_forward.2} parent=23 // pred_fallthru
        _
      // Predicated region
      $region53: #{bert_classifier_forward.2} parent=23 // pred_check
        %p538 = pneg %p278
      $region54: #{bert_classifier_forward.2} parent=23 // pred_check_branch
        %540 = sbr.rel (%p538) target = $region56
      $region55: #{bert_classifier_forward.2} parent=23 // pred_region
        %p541 = scmp.lt.s32.totalorder %s30, 1
        %s542 = scalar_select %p541, %s30, 1
        %s543 = scalar_lea.vmem %s9, %s542
      $region56: #{bert_classifier_forward.2} parent=23 // pred_fallthru
        _
      // Predicated region
      $region57: #{bert_classifier_forward.2} parent=23 // pred_check
        %p544 = pneg %p304
      $region58: #{bert_classifier_forward.2} parent=23 // pred_check_branch
        %546 = sbr.rel (%p544) target = $region60
      $region59: #{bert_classifier_forward.2} parent=23 // pred_region
        %p547 = scmp.lt.s32.totalorder %s30, 1
        %s548 = scalar_select %p547, %s30, 1
        %s549 = smul.addr %s548, 4
        %s550 = smul.addr %s549, 4
        %s551 = scalar_lea.vmem %s10, %s550
      $region60: #{bert_classifier_forward.2} parent=23 // pred_fallthru
        _
      // Predicated region
      $region61: #{bert_classifier_forward.2} parent=23 // pred_check
        %p552 = pneg %p330
      $region62: #{bert_classifier_forward.2} parent=23 // pred_check_branch
        %554 = sbr.rel (%p552) target = $region64
      $region63: #{bert_classifier_forward.2} parent=23 // pred_region
        %p555 = scmp.lt.s32.totalorder %s30, 1
        %s556 = scalar_select %p555, %s30, 1
        %s557 = scalar_lea.vmem %s11, %s556
      $region64: #{bert_classifier_forward.2} parent=23 // pred_fallthru
        _
      // Predicated region
      $region65: #{bert_classifier_forward.2} parent=23 // pred_check
        %p558 = pneg %p356
      $region66: #{bert_classifier_forward.2} parent=23 // pred_check_branch
        %560 = sbr.rel (%p558) target = $region68
      $region67: #{bert_classifier_forward.2} parent=23 // pred_region
        %p561 = scmp.lt.s32.totalorder %s30, 1
        %s562 = scalar_select %p561, %s30, 1
        %s563 = smul.addr %s562, 8
        %s564 = smul.addr %s563, 4
        %s565 = scalar_lea.vmem %s12, %s564
      $region68: #{bert_classifier_forward.2} parent=23 // pred_fallthru
        _
      // Predicated region
      $region69: #{bert_classifier_forward.2} parent=23 // pred_check
        %p566 = pneg %p382
      $region70: #{bert_classifier_forward.2} parent=23 // pred_check_branch
        %568 = sbr.rel (%p566) target = $region72
      $region71: #{bert_classifier_forward.2} parent=23 // pred_region
        %p569 = scmp.lt.s32.totalorder %s30, 1
        %s570 = scalar_select %p569, %s30, 1
        %s571 = scalar_lea.vmem %s13, %s570
      $region72: #{bert_classifier_forward.2} parent=23 // pred_fallthru
        _
      // Predicated region
      $region73: #{bert_classifier_forward.2} parent=23 // pred_check
        %p572 = pneg %p408
      $region74: #{bert_classifier_forward.2} parent=23 // pred_check_branch
        %574 = sbr.rel (%p572) target = $region76
      $region75: #{bert_classifier_forward.2} parent=23 // pred_region
        %p575 = scmp.lt.s32.totalorder %s30, 1
        %s576 = scalar_select %p575, %s30, 1
        %s577 = scalar_lea.vmem %s14, %s576
      $region76: #{bert_classifier_forward.2} parent=23 // pred_fallthru
        _
      // Predicated region
      $region77: #{bert_classifier_forward.2} parent=23 // pred_check
        %p578 = pneg %p434
      $region78: #{bert_classifier_forward.2} parent=23 // pred_check_branch
        %580 = sbr.rel (%p578) target = $region80
      $region79: #{bert_classifier_forward.2} parent=23 // pred_region
        %p581 = scmp.lt.s32.totalorder %s30, 1
        %s582 = scalar_select %p581, %s30, 1
        %s583 = scalar_lea.vmem %s15, %s582
      $region80: #{bert_classifier_forward.2} parent=23 // pred_fallthru
        _
    $region24: #{bert_classifier_forward.2} parent=5 // pred_fallthru
      _
    %p584 = scmp.le.s32.totalorder 1, %s22
    %p585 = scmp.lt.s32.totalorder %s22, 5
    %p586 = pnand %p584, %p585
    %p587 = pneg %p586
    // Predicated region
    $region81: #{bert_classifier_forward.2} parent=5 // pred_check
      _
    $region82: #{bert_classifier_forward.2} parent=5 // pred_check_branch
      %589 = sbr.rel (%p586) target = $region84
    $region83: #{bert_classifier_forward.2} parent=5 // pred_region
      %s590 = ssub.s32 %s22, 1
      %p591 = scmp.lt.s32.totalorder %s31, 1
      %s592 = scalar_select %p591, %s31, 1
      %s593 = smul.addr %s592, 8
      %s594 = scalar_lea.vmem %s0, %s593
      %p595 = pneg %p60
      %p596 = pneg %p57
      %p597 = scmp.lt.s32.totalorder %s31, 1
      %s598 = scalar_select %p597, %s31, 1
      %s599 = scalar_lea.vmem %s1, %s598
      %p600 = pneg %p86
      %p601 = pneg %p83
      %p602 = pneg %p107
      %p603 = pneg %p104
      %p604 = pneg %p128
      %p605 = pneg %p125
      %p606 = scmp.lt.s32.totalorder %s32, 1
      %s607 = scalar_select %p606, %s32, 1
      %s608 = smul.addr %s607, 4
      %s609 = smul.addr %s608, 4
      %s610 = scalar_lea.vmem %s4, %s609
      %p611 = pneg %p154
      %p612 = pneg %p151
      %p613 = scmp.lt.s32.totalorder %s32, 1
      %s614 = scalar_select %p613, %s32, 1
      %s615 = scalar_lea.vmem %s5, %s614
      %p616 = pneg %p180
      %p617 = pneg %p177
      %p618 = scmp.lt.s32.totalorder %s32, 1
      %s619 = scalar_select %p618, %s32, 1
      %s620 = smul.addr %s619, 4
      %s621 = smul.addr %s620, 4
      %s622 = scalar_lea.vmem %s6, %s621
      %p623 = pneg %p206
      %p624 = pneg %p203
      %p625 = scmp.lt.s32.totalorder %s32, 1
      %s626 = scalar_select %p625, %s32, 1
      %s627 = scalar_lea.vmem %s7, %s626
      %p628 = pneg %p232
      %p629 = pneg %p229
      %p630 = scmp.lt.s32.totalorder %s32, 1
      %s631 = scalar_select %p630, %s32, 1
      %s632 = scalar_lea.vmem %s8, %s631
      %p633 = pneg %p258
      %p634 = pneg %p255
      %p635 = scmp.lt.s32.totalorder %s32, 1
      %s636 = scalar_select %p635, %s32, 1
      %s637 = scalar_lea.vmem %s9, %s636
      %p638 = pneg %p284
      %p639 = pneg %p281
      %p640 = scmp.lt.s32.totalorder %s32, 1
      %s641 = scalar_select %p640, %s32, 1
      %s642 = smul.addr %s641, 4
      %s643 = smul.addr %s642, 4
      %s644 = scalar_lea.vmem %s10, %s643
      %p645 = pneg %p310
      %p646 = pneg %p307
      %p647 = scmp.lt.s32.totalorder %s32, 1
      %s648 = scalar_select %p647, %s32, 1
      %s649 = scalar_lea.vmem %s11, %s648
      %p650 = pneg %p336
      %p651 = pneg %p333
      %p652 = scmp.lt.s32.totalorder %s32, 1
      %s653 = scalar_select %p652, %s32, 1
      %s654 = smul.addr %s653, 8
      %s655 = smul.addr %s654, 4
      %s656 = scalar_lea.vmem %s12, %s655
      %p657 = pneg %p362
      %p658 = pneg %p359
      %p659 = scmp.lt.s32.totalorder %s32, 1
      %s660 = scalar_select %p659, %s32, 1
      %s661 = scalar_lea.vmem %s13, %s660
      %p662 = pneg %p388
      %p663 = pneg %p385
      %p664 = scmp.lt.s32.totalorder %s32, 1
      %s665 = scalar_select %p664, %s32, 1
      %s666 = scalar_lea.vmem %s14, %s665
      %p667 = pneg %p414
      %p668 = pneg %p411
      %p669 = scmp.lt.s32.totalorder %s32, 1
      %s670 = scalar_select %p669, %s32, 1
      %s671 = scalar_lea.vmem %s15, %s670
      %p672 = pneg %p440
      %p673 = pneg %p437
      %p674 = pneg %p466
      %p675 = pneg %p463
      %p676 = scmp.lt.s32.totalorder %s31, 1
      %s677 = scalar_select %p676, %s31, 1
      %s678 = smul.addr %s677, 8
      %s679 = scalar_lea.vmem %s16, %s678
      %p680 = scmp.lt.s32.totalorder %s31, 1
      %s681 = scalar_select %p680, %s31, 1
      %s682 = smul.addr %s681, 8
      %s683 = scalar_lea.vmem %s0, %s682
      %p684 = scmp.lt.s32.totalorder %s31, 1
      %s685 = scalar_select %p684, %s31, 1
      %s686 = scalar_lea.vmem %s1, %s685
      %p687 = scmp.lt.s32.totalorder %s32, 1
      %s688 = scalar_select %p687, %s32, 1
      %s689 = smul.addr %s688, 4
      %s690 = smul.addr %s689, 4
      %s691 = scalar_lea.vmem %s4, %s690
      %p692 = scmp.lt.s32.totalorder %s32, 1
      %s693 = scalar_select %p692, %s32, 1
      %s694 = scalar_lea.vmem %s5, %s693
      %p695 = scmp.lt.s32.totalorder %s32, 1
      %s696 = scalar_select %p695, %s32, 1
      %s697 = smul.addr %s696, 4
      %s698 = smul.addr %s697, 4
      %s699 = scalar_lea.vmem %s6, %s698
      %p700 = scmp.lt.s32.totalorder %s32, 1
      %s701 = scalar_select %p700, %s32, 1
      %s702 = scalar_lea.vmem %s7, %s701
      %p703 = scmp.lt.s32.totalorder %s32, 1
      %s704 = scalar_select %p703, %s32, 1
      %s705 = scalar_lea.vmem %s8, %s704
      %p706 = scmp.lt.s32.totalorder %s32, 1
      %s707 = scalar_select %p706, %s32, 1
      %s708 = scalar_lea.vmem %s9, %s707
      %p709 = scmp.lt.s32.totalorder %s32, 1
      %s710 = scalar_select %p709, %s32, 1
      %s711 = smul.addr %s710, 4
      %s712 = smul.addr %s711, 4
      %s713 = scalar_lea.vmem %s10, %s712
      %p714 = scmp.lt.s32.totalorder %s32, 1
      %s715 = scalar_select %p714, %s32, 1
      %s716 = scalar_lea.vmem %s11, %s715
      %p717 = scmp.lt.s32.totalorder %s32, 1
      %s718 = scalar_select %p717, %s32, 1
      %s719 = smul.addr %s718, 8
      %s720 = smul.addr %s719, 4
      %s721 = scalar_lea.vmem %s12, %s720
      %p722 = scmp.lt.s32.totalorder %s32, 1
      %s723 = scalar_select %p722, %s32, 1
      %s724 = scalar_lea.vmem %s13, %s723
      %p725 = scmp.lt.s32.totalorder %s32, 1
      %s726 = scalar_select %p725, %s32, 1
      %s727 = scalar_lea.vmem %s14, %s726
      %p728 = scmp.lt.s32.totalorder %s32, 1
      %s729 = scalar_select %p728, %s32, 1
      %s730 = scalar_lea.vmem %s15, %s729
      %p731 = scmp.lt.s32.totalorder %s31, 1
      %s732 = scalar_select %p731, %s31, 1
      %s733 = smul.addr %s732, 8
      %s734 = scalar_lea.vmem %s16, %s733
      %p736 = scmp.eq.s32.totalorder %s32, 0
      // Predicated region
      $region85: #{bert_classifier_forward.2} parent=83 // pred_check
        %p737 = pneg %p736
      $region86: #{bert_classifier_forward.2} parent=83 // pred_check_branch
        %739 = sbr.rel (%p737) target = $region88
      $region87: #{bert_classifier_forward.2} parent=83 // pred_region
        %v740 = vld [vmem:[%s683] sm:$0xff]
        %v741 = vld [vmem:[%s2] sm:$0x1]
        %v742 = vld [vmem:[%s3] sm:$0x1]
        %vm743 = vcmask 261120
        %v744 = vsel %vm743, %v740, 0.0
        %745 = vadd.xlane.f32.xlu0 %v744
        %v746 = vpop.xlane.xlu0 %745
        %v747 = vrcp.pop 32.0
        %v748 = vmul.f32 %v746, %v747
        %v749 = vsub.f32 %v740, %v748
        %v750 = vmul.f32 %v749, %v749
        %v751 = vsel %vm743, %v750, 0.0
        %752 = vadd.xlane.f32.xlu0 %v751
        %v753 = vpop.xlane.xlu0 %752
        %v754 = vmul.f32 %v753, %v747
        %v755 = vadd.f32 %v754, 1e-12
        %v756 = vrsqrt.pop %v755
        %v757 = vmul.f32 %v749, %v756
        %v759 = vlaneseq
        %v760 = vshrl.u32 %v759, 7
        %v761 = vsub.s32 0, %v760
        %v762 = vrot.slane %v741, %v761
        %v764 = vmul.f32 %v757, %v762
        %v766 = vlaneseq
        %v767 = vshrl.u32 %v766, 7
        %v768 = vsub.s32 0, %v767
        %v769 = vrot.slane %v742, %v768
        %v771 = vadd.f32 %v764, %v769
        %772 = vst.msk [vmem:[#allocation2] sm:$0xff] %vm743, %v771
      $region88: #{bert_classifier_forward.2} parent=83 // pred_fallthru
        _
      %v773 = vld [vmem:[#allocation2] sm:$0xff]
      %v774 = vld [vmem:[%s686] sm:$0x1]
      %v775 = vpack.c.bf16 %v773, %v773
      %v776 = vld [vmem:[%s691] sm:$0xf]
      %v777 = vld [vmem:[%s691 + $0x4] sm:$0xf]
      %v778 = vld [vmem:[%s691 + $0x8] sm:$0xf]
      %v779 = vld [vmem:[%s691 + $0xc] sm:$0xf]
      %v780 = vld [vmem:[%s694] sm:$0x1]
      %v782 = vlaneseq
      %v783 = vshrl.u32 %v782, 7
      %v784 = vsub.s32 0, %v783
      %v785 = vrot.slane %v780, %v784
      %v791 = vunpack.c.l.b16 %v776
      %v792 = vunpack.c.l.b16 %v777
      %v793 = vunpack.c.l.b16 %v778
      %v794 = vunpack.c.l.b16 %v779
      %v795 = vpack.c.b16 %v792, %v791
      %v796 = vpack.c.b16 %v794, %v793
      %vm799 = vcmask 261120
      %v801 = vsel %vm799, %v775, 0
      %803 = vmatprep.subr.bf16.mxu0 0
      %804 = vmatpush1.bf16.msra.mxu0 %v795
      %805 = vmatprep.subr.bf16.mxu0 0
      %806 = vmatpush1.bf16.msra.mxu0 %v796
      %807 = vmatprep.subr.bf16.mxu0 0
      %808 = vmatpush1.bf16.msra.mxu0 0
      %809 = vmatprep.subr.bf16.mxu0 0
      %810 = vmatpush1.bf16.msra.mxu0 0
      %811 = vmatprep.subr.bf16.mxu0 0
      %812 = vmatpush1.bf16.msra.mxu0 0
      %813 = vmatprep.subr.bf16.mxu0 0
      %814 = vmatpush1.bf16.msra.mxu0 0
      %815 = vmatprep.subr.bf16.mxu0 0
      %816 = vmatpush1.bf16.msra.mxu0 0
      %817 = vmatprep.subr.bf16.mxu0 0
      %818 = vmatpush1.bf16.msra.mxu0 0
      %819 = vmatprep.subr.bf16.mxu0 0
      %820 = vmatpush1.bf16.msra.mxu0 0
      %821 = vmatprep.subr.bf16.mxu0 0
      %822 = vmatpush1.bf16.msra.mxu0 0
      %823 = vmatprep.subr.bf16.mxu0 0
      %824 = vmatpush1.bf16.msra.mxu0 0
      %825 = vmatprep.subr.bf16.mxu0 0
      %826 = vmatpush1.bf16.msra.mxu0 0
      %827 = vmatprep.subr.bf16.mxu0 0
      %828 = vmatpush1.bf16.msra.mxu0 0
      %829 = vmatprep.subr.bf16.mxu0 0
      %830 = vmatpush1.bf16.msra.mxu0 0
      %831 = vmatprep.subr.bf16.mxu0 0
      %832 = vmatpush1.bf16.msra.mxu0 0
      %833 = vmatprep.subr.bf16.mxu0 0
      %834 = vmatpush1.bf16.msra.mxu0 0
      %835 = vmatprep.mubr.bf16.mxu0 0
      %836 = vmatmul.mubr.bf16.gmra.mrb[0].mxu0 %v801
      %v837 = vpop.f32.mrb[0].mxu0
      %v838 = vadd.f32 %v785, %v837
      %v839 = vpop.f32.mrb[0].mxu0
      %v840 = vpop.f32.mrb[0].mxu0
      %v841 = vpop.f32.mrb[0].mxu0
      %842 = vdwg.mxu0
      %844 = vrot.lane.b32.xlu0 %v838, 96
      %v845 = vpop.permute.xlu0 %844
      %vm846 = vcmask 64512
      %v847 = vsel %vm846, %v838, 0
      %v849 = vsel %vm846, %v845, 0
      %851 = vmatprep.subr.mxu0 0.0
      %852 = vmatpush1.xpose.msra.mxu0 %v849
      %853 = vmatprep.subr.mxu0 0.0
      %854 = vmatpush1.xpose.msra.mxu0 0.0
      %855 = vmatprep.subr.mxu0 0.0
      %856 = vmatpush1.xpose.msra.mxu0 0.0
      %857 = vmatprep.subr.mxu0 0.0
      %858 = vmatpush1.xpose.msra.mxu0 0.0
      %859 = vmatprep.subr.mxu0 0.0
      %860 = vmatpush1.xpose.msra.mxu0 0.0
      %861 = vmatprep.subr.mxu0 0.0
      %862 = vmatpush1.xpose.msra.mxu0 0.0
      %863 = vmatprep.subr.mxu0 0.0
      %864 = vmatpush1.xpose.msra.mxu0 0.0
      %865 = vmatprep.subr.mxu0 0.0
      %866 = vmatpush1.xpose.msra.mxu0 0.0
      %867 = vmatprep.subr.mxu0 0.0
      %868 = vmatpush1.xpose.msra.mxu0 0.0
      %869 = vmatprep.subr.mxu0 0.0
      %870 = vmatpush1.xpose.msra.mxu0 0.0
      %871 = vmatprep.subr.mxu0 0.0
      %872 = vmatpush1.xpose.msra.mxu0 0.0
      %873 = vmatprep.subr.mxu0 0.0
      %874 = vmatpush1.xpose.msra.mxu0 0.0
      %875 = vmatprep.subr.mxu0 0.0
      %876 = vmatpush1.xpose.msra.mxu0 0.0
      %877 = vmatprep.subr.mxu0 0.0
      %878 = vmatpush1.xpose.msra.mxu0 0.0
      %879 = vmatprep.subr.mxu0 0.0
      %880 = vmatpush1.xpose.msra.mxu0 0.0
      %881 = vmatprep.subr.mxu0 0.0
      %882 = vmatpush1.xpose.msra.mxu0 0.0
      %883 = vmatprep.subr.mxu0 0.0
      %884 = vmatpush1.xpose.msra.mxu0 0.0
      %885 = vmatprep.subr.mxu0 0.0
      %886 = vmatpush1.xpose.msra.mxu0 0.0
      %887 = vmatprep.subr.mxu0 0.0
      %888 = vmatpush1.xpose.msra.mxu0 0.0
      %889 = vmatprep.subr.mxu0 0.0
      %890 = vmatpush1.xpose.msra.mxu0 0.0
      %891 = vmatprep.subr.mxu0 0.0
      %892 = vmatpush1.xpose.msra.mxu0 0.0
      %893 = vmatprep.subr.mxu0 0.0
      %894 = vmatpush1.xpose.msra.mxu0 0.0
      %895 = vmatprep.subr.mxu0 0.0
      %896 = vmatpush1.xpose.msra.mxu0 0.0
      %897 = vmatprep.subr.mxu0 0.0
      %898 = vmatpush1.xpose.msra.mxu0 0.0
      %899 = vmatprep.subr.mxu0 0.0
      %900 = vmatpush1.xpose.msra.mxu0 0.0
      %901 = vmatprep.subr.mxu0 0.0
      %902 = vmatpush1.xpose.msra.mxu0 0.0
      %903 = vmatprep.subr.mxu0 0.0
      %904 = vmatpush1.xpose.msra.mxu0 0.0
      %905 = vmatprep.subr.mxu0 0.0
      %906 = vmatpush1.xpose.msra.mxu0 0.0
      %907 = vmatprep.subr.mxu0 0.0
      %908 = vmatpush1.xpose.msra.mxu0 0.0
      %909 = vmatprep.subr.mxu0 0.0
      %910 = vmatpush1.xpose.msra.mxu0 0.0
      %911 = vmatprep.subr.mxu0 0.0
      %912 = vmatpush1.xpose.msra.mxu0 0.0
      %913 = vmatprep.subr.mxu0 0.0
      %914 = vmatpush1.xpose.msra.mxu0 0.0
      %915 = vmatprep.mubr.f32.mxu0 0.0
      %916 = vmatmul.mubr.f32.gmra.mrb[0].mxu0 %v847
      %v917 = vpop.f32.mrb[0].mxu0
      %v918 = vadd.f32 0.0, %v917
      %v919 = vpop.f32.mrb[0].mxu0
      %920 = vdwg.mxu0
      %v921 = vmul.f32 %v918, 0.35355338
      %v923 = vlaneseq
      %v924 = vshrl.u32 %v923, 7
      %v925 = vsub.s32 0, %v924
      %v926 = vrot.slane %v774, %v925
      %v928 = vadd.f32 %v921, %v926
      %v929 = vsel %vm846, %v928, -inf
      %930 = vmax.xlane.f32.xlu0 %v929
      %v931 = vpop.xlane.xlu0 %930
      %v932 = vsub.f32 %v928, %v931
      %v933 = vmul.f32 %v932, 1.442695
      %v934 = vpow.pop %v933
      %v935 = vsel %vm846, %v934, 0.0
      %936 = vadd.xlane.f32.xlu0 %v935
      %v937 = vpop.xlane.xlu0 %936
      %v938 = vrcp.pop %v937
      %v939 = vmul.f32 %v934, %v938
      %940 = vrot.lane.b32.xlu0 %v838, 64
      %v941 = vpop.permute.xlu0 %940
      %v944 = vsel %vm846, %v939, 0
      %946 = vmatprep.subr.mxu0 0.0
      %947 = vmatpush1.msra.mxu0 %v941
      %948 = vmatprep.subr.mxu0 0.0
      %949 = vmatpush1.msra.mxu0 0.0
      %950 = vmatprep.subr.mxu0 0.0
      %951 = vmatpush1.msra.mxu0 0.0
      %952 = vmatprep.subr.mxu0 0.0
      %953 = vmatpush1.msra.mxu0 0.0
      %954 = vmatprep.subr.mxu0 0.0
      %955 = vmatpush1.msra.mxu0 0.0
      %956 = vmatprep.subr.mxu0 0.0
      %957 = vmatpush1.msra.mxu0 0.0
      %958 = vmatprep.subr.mxu0 0.0
      %959 = vmatpush1.msra.mxu0 0.0
      %960 = vmatprep.subr.mxu0 0.0
      %961 = vmatpush1.msra.mxu0 0.0
      %962 = vmatprep.subr.mxu0 0.0
      %963 = vmatpush1.msra.mxu0 0.0
      %964 = vmatprep.subr.mxu0 0.0
      %965 = vmatpush1.msra.mxu0 0.0
      %966 = vmatprep.subr.mxu0 0.0
      %967 = vmatpush1.msra.mxu0 0.0
      %968 = vmatprep.subr.mxu0 0.0
      %969 = vmatpush1.msra.mxu0 0.0
      %970 = vmatprep.subr.mxu0 0.0
      %971 = vmatpush1.msra.mxu0 0.0
      %972 = vmatprep.subr.mxu0 0.0
      %973 = vmatpush1.msra.mxu0 0.0
      %974 = vmatprep.subr.mxu0 0.0
      %975 = vmatpush1.msra.mxu0 0.0
      %976 = vmatprep.subr.mxu0 0.0
      %977 = vmatpush1.msra.mxu0 0.0
      %978 = vmatprep.subr.mxu0 0.0
      %979 = vmatpush1.msra.mxu0 0.0
      %980 = vmatprep.subr.mxu0 0.0
      %981 = vmatpush1.msra.mxu0 0.0
      %982 = vmatprep.subr.mxu0 0.0
      %983 = vmatpush1.msra.mxu0 0.0
      %984 = vmatprep.subr.mxu0 0.0
      %985 = vmatpush1.msra.mxu0 0.0
      %986 = vmatprep.subr.mxu0 0.0
      %987 = vmatpush1.msra.mxu0 0.0
      %988 = vmatprep.subr.mxu0 0.0
      %989 = vmatpush1.msra.mxu0 0.0
      %990 = vmatprep.subr.mxu0 0.0
      %991 = vmatpush1.msra.mxu0 0.0
      %992 = vmatprep.subr.mxu0 0.0
      %993 = vmatpush1.msra.mxu0 0.0
      %994 = vmatprep.subr.mxu0 0.0
      %995 = vmatpush1.msra.mxu0 0.0
      %996 = vmatprep.subr.mxu0 0.0
      %997 = vmatpush1.msra.mxu0 0.0
      %998 = vmatprep.subr.mxu0 0.0
      %999 = vmatpush1.msra.mxu0 0.0
      %1000 = vmatprep.subr.mxu0 0.0
      %1001 = vmatpush1.msra.mxu0 0.0
      %1002 = vmatprep.subr.mxu0 0.0
      %1003 = vmatpush1.msra.mxu0 0.0
      %1004 = vmatprep.subr.mxu0 0.0
      %1005 = vmatpush1.msra.mxu0 0.0
      %1006 = vmatprep.subr.mxu0 0.0
      %1007 = vmatpush1.msra.mxu0 0.0
      %1008 = vmatprep.subr.mxu0 0.0
      %1009 = vmatpush1.msra.mxu0 0.0
      %1010 = vmatprep.mubr.f32.mxu0 0.0
      %1011 = vmatmul.mubr.f32.gmra.mrb[0].mxu0 %v944
      %v1012 = vpop.f32.mrb[0].mxu0
      %v1013 = vadd.f32 0.0, %v1012
      %v1014 = vpop.f32.mrb[0].mxu0
      %1015 = vdwg.mxu0
      %1016 = vst.msk [vmem:[#allocation3] sm:$0xff] %vm846, %v1013
      %1017 = vrot.lane.b32.xlu0 %v838, 120
      %v1018 = vpop.permute.xlu0 %1017
      %1019 = vrot.lane.b32.xlu0 %v838, 88
      %v1020 = vpop.permute.xlu0 %1019
      %v1021 = vsel %vm846, %v1018, 0
      %v1023 = vsel %vm846, %v1020, 0
      %1025 = vmatprep.subr.mxu0 0.0
      %1026 = vmatpush1.xpose.msra.mxu0 %v1023
      %1027 = vmatprep.subr.mxu0 0.0
      %1028 = vmatpush1.xpose.msra.mxu0 0.0
      %1029 = vmatprep.subr.mxu0 0.0
      %1030 = vmatpush1.xpose.msra.mxu0 0.0
      %1031 = vmatprep.subr.mxu0 0.0
      %1032 = vmatpush1.xpose.msra.mxu0 0.0
      %1033 = vmatprep.subr.mxu0 0.0
      %1034 = vmatpush1.xpose.msra.mxu0 0.0
      %1035 = vmatprep.subr.mxu0 0.0
      %1036 = vmatpush1.xpose.msra.mxu0 0.0
      %1037 = vmatprep.subr.mxu0 0.0
      %1038 = vmatpush1.xpose.msra.mxu0 0.0
      %1039 = vmatprep.subr.mxu0 0.0
      %1040 = vmatpush1.xpose.msra.mxu0 0.0
      %1041 = vmatprep.subr.mxu0 0.0
      %1042 = vmatpush1.xpose.msra.mxu0 0.0
      %1043 = vmatprep.subr.mxu0 0.0
      %1044 = vmatpush1.xpose.msra.mxu0 0.0
      %1045 = vmatprep.subr.mxu0 0.0
      %1046 = vmatpush1.xpose.msra.mxu0 0.0
      %1047 = vmatprep.subr.mxu0 0.0
      %1048 = vmatpush1.xpose.msra.mxu0 0.0
      %1049 = vmatprep.subr.mxu0 0.0
      %1050 = vmatpush1.xpose.msra.mxu0 0.0
      %1051 = vmatprep.subr.mxu0 0.0
      %1052 = vmatpush1.xpose.msra.mxu0 0.0
      %1053 = vmatprep.subr.mxu0 0.0
      %1054 = vmatpush1.xpose.msra.mxu0 0.0
      %1055 = vmatprep.subr.mxu0 0.0
      %1056 = vmatpush1.xpose.msra.mxu0 0.0
      %1057 = vmatprep.subr.mxu0 0.0
      %1058 = vmatpush1.xpose.msra.mxu0 0.0
      %1059 = vmatprep.subr.mxu0 0.0
      %1060 = vmatpush1.xpose.msra.mxu0 0.0
      %1061 = vmatprep.subr.mxu0 0.0
      %1062 = vmatpush1.xpose.msra.mxu0 0.0
      %1063 = vmatprep.subr.mxu0 0.0
      %1064 = vmatpush1.xpose.msra.mxu0 0.0
      %1065 = vmatprep.subr.mxu0 0.0
      %1066 = vmatpush1.xpose.msra.mxu0 0.0
      %1067 = vmatprep.subr.mxu0 0.0
      %1068 = vmatpush1.xpose.msra.mxu0 0.0
      %1069 = vmatprep.subr.mxu0 0.0
      %1070 = vmatpush1.xpose.msra.mxu0 0.0
      %1071 = vmatprep.subr.mxu0 0.0
      %1072 = vmatpush1.xpose.msra.mxu0 0.0
      %1073 = vmatprep.subr.mxu0 0.0
      %1074 = vmatpush1.xpose.msra.mxu0 0.0
      %1075 = vmatprep.subr.mxu0 0.0
      %1076 = vmatpush1.xpose.msra.mxu0 0.0
      %1077 = vmatprep.subr.mxu0 0.0
      %1078 = vmatpush1.xpose.msra.mxu0 0.0
      %1079 = vmatprep.subr.mxu0 0.0
      %1080 = vmatpush1.xpose.msra.mxu0 0.0
      %1081 = vmatprep.subr.mxu0 0.0
      %1082 = vmatpush1.xpose.msra.mxu0 0.0
      %1083 = vmatprep.subr.mxu0 0.0
      %1084 = vmatpush1.xpose.msra.mxu0 0.0
      %1085 = vmatprep.subr.mxu0 0.0
      %1086 = vmatpush1.xpose.msra.mxu0 0.0
      %1087 = vmatprep.subr.mxu0 0.0
      %1088 = vmatpush1.xpose.msra.mxu0 0.0
      %1089 = vmatprep.mubr.f32.mxu0 0.0
      %1090 = vmatmul.mubr.f32.gmra.mrb[0].mxu0 %v1021
      %v1091 = vpop.f32.mrb[0].mxu0
      %v1092 = vadd.f32 0.0, %v1091
      %v1093 = vpop.f32.mrb[0].mxu0
      %1094 = vdwg.mxu0
      %v1095 = vmul.f32 %v1092, 0.35355338
      %v1096 = vadd.f32 %v1095, %v926
      %v1097 = vsel %vm846, %v1096, -inf
      %1098 = vmax.xlane.f32.xlu0 %v1097
      %v1099 = vpop.xlane.xlu0 %1098
      %v1100 = vsub.f32 %v1096, %v1099
      %v1101 = vmul.f32 %v1100, 1.442695
      %v1102 = vpow.pop %v1101
      %v1103 = vsel %vm846, %v1102, 0.0
      %1104 = vadd.xlane.f32.xlu0 %v1103
      %v1105 = vpop.xlane.xlu0 %1104
      %v1106 = vrcp.pop %v1105
      %v1107 = vmul.f32 %v1102, %v1106
      %1108 = vrot.lane.b32.xlu0 %v838, 56
      %v1109 = vpop.permute.xlu0 %1108
      %v1112 = vsel %vm846, %v1107, 0
      %1114 = vmatprep.subr.mxu0 0.0
      %1115 = vmatpush1.msra.mxu0 %v1109
      %1116 = vmatprep.subr.mxu0 0.0
      %1117 = vmatpush1.msra.mxu0 0.0
      %1118 = vmatprep.subr.mxu0 0.0
      %1119 = vmatpush1.msra.mxu0 0.0
      %1120 = vmatprep.subr.mxu0 0.0
      %1121 = vmatpush1.msra.mxu0 0.0
      %1122 = vmatprep.subr.mxu0 0.0
      %1123 = vmatpush1.msra.mxu0 0.0
      %1124 = vmatprep.subr.mxu0 0.0
      %1125 = vmatpush1.msra.mxu0 0.0
      %1126 = vmatprep.subr.mxu0 0.0
      %1127 = vmatpush1.msra.mxu0 0.0
      %1128 = vmatprep.subr.mxu0 0.0
      %1129 = vmatpush1.msra.mxu0 0.0
      %1130 = vmatprep.subr.mxu0 0.0
      %1131 = vmatpush1.msra.mxu0 0.0
      %1132 = vmatprep.subr.mxu0 0.0
      %1133 = vmatpush1.msra.mxu0 0.0
      %1134 = vmatprep.subr.mxu0 0.0
      %1135 = vmatpush1.msra.mxu0 0.0
      %1136 = vmatprep.subr.mxu0 0.0
      %1137 = vmatpush1.msra.mxu0 0.0
      %1138 = vmatprep.subr.mxu0 0.0
      %1139 = vmatpush1.msra.mxu0 0.0
      %1140 = vmatprep.subr.mxu0 0.0
      %1141 = vmatpush1.msra.mxu0 0.0
      %1142 = vmatprep.subr.mxu0 0.0
      %1143 = vmatpush1.msra.mxu0 0.0
      %1144 = vmatprep.subr.mxu0 0.0
      %1145 = vmatpush1.msra.mxu0 0.0
      %1146 = vmatprep.subr.mxu0 0.0
      %1147 = vmatpush1.msra.mxu0 0.0
      %1148 = vmatprep.subr.mxu0 0.0
      %1149 = vmatpush1.msra.mxu0 0.0
      %1150 = vmatprep.subr.mxu0 0.0
      %1151 = vmatpush1.msra.mxu0 0.0
      %1152 = vmatprep.subr.mxu0 0.0
      %1153 = vmatpush1.msra.mxu0 0.0
      %1154 = vmatprep.subr.mxu0 0.0
      %1155 = vmatpush1.msra.mxu0 0.0
      %1156 = vmatprep.subr.mxu0 0.0
      %1157 = vmatpush1.msra.mxu0 0.0
      %1158 = vmatprep.subr.mxu0 0.0
      %1159 = vmatpush1.msra.mxu0 0.0
      %1160 = vmatprep.subr.mxu0 0.0
      %1161 = vmatpush1.msra.mxu0 0.0
      %1162 = vmatprep.subr.mxu0 0.0
      %1163 = vmatpush1.msra.mxu0 0.0
      %1164 = vmatprep.subr.mxu0 0.0
      %1165 = vmatpush1.msra.mxu0 0.0
      %1166 = vmatprep.subr.mxu0 0.0
      %1167 = vmatpush1.msra.mxu0 0.0
      %1168 = vmatprep.subr.mxu0 0.0
      %1169 = vmatpush1.msra.mxu0 0.0
      %1170 = vmatprep.subr.mxu0 0.0
      %1171 = vmatpush1.msra.mxu0 0.0
      %1172 = vmatprep.subr.mxu0 0.0
      %1173 = vmatpush1.msra.mxu0 0.0
      %1174 = vmatprep.subr.mxu0 0.0
      %1175 = vmatpush1.msra.mxu0 0.0
      %1176 = vmatprep.subr.mxu0 0.0
      %1177 = vmatpush1.msra.mxu0 0.0
      %1178 = vmatprep.mubr.f32.mxu0 0.0
      %1179 = vmatmul.mubr.f32.gmra.mrb[0].mxu0 %v1112
      %v1180 = vpop.f32.mrb[0].mxu0
      %v1181 = vadd.f32 0.0, %v1180
      %v1182 = vpop.f32.mrb[0].mxu0
      %1183 = vdwg.mxu0
      %1185 = vrot.lane.b32.xlu0 %v1181, 8
      %v1186 = vpop.permute.xlu0 %1185
      %vm1188 = vcmask 130112
      %1189 = vst.msk [vmem:[#allocation3] sm:$0xff] %vm1188, %v1186
      %1190 = vrot.lane.b32.xlu0 %v838, 112
      %v1191 = vpop.permute.xlu0 %1190
      %1192 = vrot.lane.b32.xlu0 %v838, 80
      %v1193 = vpop.permute.xlu0 %1192
      %v1194 = vsel %vm846, %v1191, 0
      %v1196 = vsel %vm846, %v1193, 0
      %1198 = vmatprep.subr.mxu0 0.0
      %1199 = vmatpush1.xpose.msra.mxu0 %v1196
      %1200 = vmatprep.subr.mxu0 0.0
      %1201 = vmatpush1.xpose.msra.mxu0 0.0
      %1202 = vmatprep.subr.mxu0 0.0
      %1203 = vmatpush1.xpose.msra.mxu0 0.0
      %1204 = vmatprep.subr.mxu0 0.0
      %1205 = vmatpush1.xpose.msra.mxu0 0.0
      %1206 = vmatprep.subr.mxu0 0.0
      %1207 = vmatpush1.xpose.msra.mxu0 0.0
      %1208 = vmatprep.subr.mxu0 0.0
      %1209 = vmatpush1.xpose.msra.mxu0 0.0
      %1210 = vmatprep.subr.mxu0 0.0
      %1211 = vmatpush1.xpose.msra.mxu0 0.0
      %1212 = vmatprep.subr.mxu0 0.0
      %1213 = vmatpush1.xpose.msra.mxu0 0.0
      %1214 = vmatprep.subr.mxu0 0.0
      %1215 = vmatpush1.xpose.msra.mxu0 0.0
      %1216 = vmatprep.subr.mxu0 0.0
      %1217 = vmatpush1.xpose.msra.mxu0 0.0
      %1218 = vmatprep.subr.mxu0 0.0
      %1219 = vmatpush1.xpose.msra.mxu0 0.0
      %1220 = vmatprep.subr.mxu0 0.0
      %1221 = vmatpush1.xpose.msra.mxu0 0.0
      %1222 = vmatprep.subr.mxu0 0.0
      %1223 = vmatpush1.xpose.msra.mxu0 0.0
      %1224 = vmatprep.subr.mxu0 0.0
      %1225 = vmatpush1.xpose.msra.mxu0 0.0
      %1226 = vmatprep.subr.mxu0 0.0
      %1227 = vmatpush1.xpose.msra.mxu0 0.0
      %1228 = vmatprep.subr.mxu0 0.0
      %1229 = vmatpush1.xpose.msra.mxu0 0.0
      %1230 = vmatprep.subr.mxu0 0.0
      %1231 = vmatpush1.xpose.msra.mxu0 0.0
      %1232 = vmatprep.subr.mxu0 0.0
      %1233 = vmatpush1.xpose.msra.mxu0 0.0
      %1234 = vmatprep.subr.mxu0 0.0
      %1235 = vmatpush1.xpose.msra.mxu0 0.0
      %1236 = vmatprep.subr.mxu0 0.0
      %1237 = vmatpush1.xpose.msra.mxu0 0.0
      %1238 = vmatprep.subr.mxu0 0.0
      %1239 = vmatpush1.xpose.msra.mxu0 0.0
      %1240 = vmatprep.subr.mxu0 0.0
      %1241 = vmatpush1.xpose.msra.mxu0 0.0
      %1242 = vmatprep.subr.mxu0 0.0
      %1243 = vmatpush1.xpose.msra.mxu0 0.0
      %1244 = vmatprep.subr.mxu0 0.0
      %1245 = vmatpush1.xpose.msra.mxu0 0.0
      %1246 = vmatprep.subr.mxu0 0.0
      %1247 = vmatpush1.xpose.msra.mxu0 0.0
      %1248 = vmatprep.subr.mxu0 0.0
      %1249 = vmatpush1.xpose.msra.mxu0 0.0
      %1250 = vmatprep.subr.mxu0 0.0
      %1251 = vmatpush1.xpose.msra.mxu0 0.0
      %1252 = vmatprep.subr.mxu0 0.0
      %1253 = vmatpush1.xpose.msra.mxu0 0.0
      %1254 = vmatprep.subr.mxu0 0.0
      %1255 = vmatpush1.xpose.msra.mxu0 0.0
      %1256 = vmatprep.subr.mxu0 0.0
      %1257 = vmatpush1.xpose.msra.mxu0 0.0
      %1258 = vmatprep.subr.mxu0 0.0
      %1259 = vmatpush1.xpose.msra.mxu0 0.0
      %1260 = vmatprep.subr.mxu0 0.0
      %1261 = vmatpush1.xpose.msra.mxu0 0.0
      %1262 = vmatprep.mubr.f32.mxu0 0.0
      %1263 = vmatmul.mubr.f32.gmra.mrb[0].mxu0 %v1194
      %v1264 = vpop.f32.mrb[0].mxu0
      %v1265 = vadd.f32 0.0, %v1264
      %v1266 = vpop.f32.mrb[0].mxu0
      %1267 = vdwg.mxu0
      %v1268 = vmul.f32 %v1265, 0.35355338
      %v1269 = vadd.f32 %v1268, %v926
      %v1270 = vsel %vm846, %v1269, -inf
      %1271 = vmax.xlane.f32.xlu0 %v1270
      %v1272 = vpop.xlane.xlu0 %1271
      %v1273 = vsub.f32 %v1269, %v1272
      %v1274 = vmul.f32 %v1273, 1.442695
      %v1275 = vpow.pop %v1274
      %v1276 = vsel %vm846, %v1275, 0.0
      %1277 = vadd.xlane.f32.xlu0 %v1276
      %v1278 = vpop.xlane.xlu0 %1277
      %v1279 = vrcp.pop %v1278
      %v1280 = vmul.f32 %v1275, %v1279
      %1281 = vrot.lane.b32.xlu0 %v838, 48
      %v1282 = vpop.permute.xlu0 %1281
      %v1285 = vsel %vm846, %v1280, 0
      %1287 = vmatprep.subr.mxu0 0.0
      %1288 = vmatpush1.msra.mxu0 %v1282
      %1289 = vmatprep.subr.mxu0 0.0
      %1290 = vmatpush1.msra.mxu0 0.0
      %1291 = vmatprep.subr.mxu0 0.0
      %1292 = vmatpush1.msra.mxu0 0.0
      %1293 = vmatprep.subr.mxu0 0.0
      %1294 = vmatpush1.msra.mxu0 0.0
      %1295 = vmatprep.subr.mxu0 0.0
      %1296 = vmatpush1.msra.mxu0 0.0
      %1297 = vmatprep.subr.mxu0 0.0
      %1298 = vmatpush1.msra.mxu0 0.0
      %1299 = vmatprep.subr.mxu0 0.0
      %1300 = vmatpush1.msra.mxu0 0.0
      %1301 = vmatprep.subr.mxu0 0.0
      %1302 = vmatpush1.msra.mxu0 0.0
      %1303 = vmatprep.subr.mxu0 0.0
      %1304 = vmatpush1.msra.mxu0 0.0
      %1305 = vmatprep.subr.mxu0 0.0
      %1306 = vmatpush1.msra.mxu0 0.0
      %1307 = vmatprep.subr.mxu0 0.0
      %1308 = vmatpush1.msra.mxu0 0.0
      %1309 = vmatprep.subr.mxu0 0.0
      %1310 = vmatpush1.msra.mxu0 0.0
      %1311 = vmatprep.subr.mxu0 0.0
      %1312 = vmatpush1.msra.mxu0 0.0
      %1313 = vmatprep.subr.mxu0 0.0
      %1314 = vmatpush1.msra.mxu0 0.0
      %1315 = vmatprep.subr.mxu0 0.0
      %1316 = vmatpush1.msra.mxu0 0.0
      %1317 = vmatprep.subr.mxu0 0.0
      %1318 = vmatpush1.msra.mxu0 0.0
      %1319 = vmatprep.subr.mxu0 0.0
      %1320 = vmatpush1.msra.mxu0 0.0
      %1321 = vmatprep.subr.mxu0 0.0
      %1322 = vmatpush1.msra.mxu0 0.0
      %1323 = vmatprep.subr.mxu0 0.0
      %1324 = vmatpush1.msra.mxu0 0.0
      %1325 = vmatprep.subr.mxu0 0.0
      %1326 = vmatpush1.msra.mxu0 0.0
      %1327 = vmatprep.subr.mxu0 0.0
      %1328 = vmatpush1.msra.mxu0 0.0
      %1329 = vmatprep.subr.mxu0 0.0
      %1330 = vmatpush1.msra.mxu0 0.0
      %1331 = vmatprep.subr.mxu0 0.0
      %1332 = vmatpush1.msra.mxu0 0.0
      %1333 = vmatprep.subr.mxu0 0.0
      %1334 = vmatpush1.msra.mxu0 0.0
      %1335 = vmatprep.subr.mxu0 0.0
      %1336 = vmatpush1.msra.mxu0 0.0
      %1337 = vmatprep.subr.mxu0 0.0
      %1338 = vmatpush1.msra.mxu0 0.0
      %1339 = vmatprep.subr.mxu0 0.0
      %1340 = vmatpush1.msra.mxu0 0.0
      %1341 = vmatprep.subr.mxu0 0.0
      %1342 = vmatpush1.msra.mxu0 0.0
      %1343 = vmatprep.subr.mxu0 0.0
      %1344 = vmatpush1.msra.mxu0 0.0
      %1345 = vmatprep.subr.mxu0 0.0
      %1346 = vmatpush1.msra.mxu0 0.0
      %1347 = vmatprep.subr.mxu0 0.0
      %1348 = vmatpush1.msra.mxu0 0.0
      %1349 = vmatprep.subr.mxu0 0.0
      %1350 = vmatpush1.msra.mxu0 0.0
      %1351 = vmatprep.mubr.f32.mxu0 0.0
      %1352 = vmatmul.mubr.f32.gmra.mrb[0].mxu0 %v1285
      %v1353 = vpop.f32.mrb[0].mxu0
      %v1354 = vadd.f32 0.0, %v1353
      %v1355 = vpop.f32.mrb[0].mxu0
      %1356 = vdwg.mxu0
      %1358 = vrot.lane.b32.xlu0 %v1354, 16
      %v1359 = vpop.permute.xlu0 %1358
      %vm1361 = vcmask 195712
      %1362 = vst.msk [vmem:[#allocation3] sm:$0xff] %vm1361, %v1359
      %1363 = vrot.lane.b32.xlu0 %v838, 104
      %v1364 = vpop.permute.xlu0 %1363
      %1365 = vrot.lane.b32.xlu0 %v838, 72
      %v1366 = vpop.permute.xlu0 %1365
      %v1367 = vsel %vm846, %v1364, 0
      %v1369 = vsel %vm846, %v1366, 0
      %1371 = vmatprep.subr.mxu0 0.0
      %1372 = vmatpush1.xpose.msra.mxu0 %v1369
      %1373 = vmatprep.subr.mxu0 0.0
      %1374 = vmatpush1.xpose.msra.mxu0 0.0
      %1375 = vmatprep.subr.mxu0 0.0
      %1376 = vmatpush1.xpose.msra.mxu0 0.0
      %1377 = vmatprep.subr.mxu0 0.0
      %1378 = vmatpush1.xpose.msra.mxu0 0.0
      %1379 = vmatprep.subr.mxu0 0.0
      %1380 = vmatpush1.xpose.msra.mxu0 0.0
      %1381 = vmatprep.subr.mxu0 0.0
      %1382 = vmatpush1.xpose.msra.mxu0 0.0
      %1383 = vmatprep.subr.mxu0 0.0
      %1384 = vmatpush1.xpose.msra.mxu0 0.0
      %1385 = vmatprep.subr.mxu0 0.0
      %1386 = vmatpush1.xpose.msra.mxu0 0.0
      %1387 = vmatprep.subr.mxu0 0.0
      %1388 = vmatpush1.xpose.msra.mxu0 0.0
      %1389 = vmatprep.subr.mxu0 0.0
      %1390 = vmatpush1.xpose.msra.mxu0 0.0
      %1391 = vmatprep.subr.mxu0 0.0
      %1392 = vmatpush1.xpose.msra.mxu0 0.0
      %1393 = vmatprep.subr.mxu0 0.0
      %1394 = vmatpush1.xpose.msra.mxu0 0.0
      %1395 = vmatprep.subr.mxu0 0.0
      %1396 = vmatpush1.xpose.msra.mxu0 0.0
      %1397 = vmatprep.subr.mxu0 0.0
      %1398 = vmatpush1.xpose.msra.mxu0 0.0
      %1399 = vmatprep.subr.mxu0 0.0
      %1400 = vmatpush1.xpose.msra.mxu0 0.0
      %1401 = vmatprep.subr.mxu0 0.0
      %1402 = vmatpush1.xpose.msra.mxu0 0.0
      %1403 = vmatprep.subr.mxu0 0.0
      %1404 = vmatpush1.xpose.msra.mxu0 0.0
      %1405 = vmatprep.subr.mxu0 0.0
      %1406 = vmatpush1.xpose.msra.mxu0 0.0
      %1407 = vmatprep.subr.mxu0 0.0
      %1408 = vmatpush1.xpose.msra.mxu0 0.0
      %1409 = vmatprep.subr.mxu0 0.0
      %1410 = vmatpush1.xpose.msra.mxu0 0.0
      %1411 = vmatprep.subr.mxu0 0.0
      %1412 = vmatpush1.xpose.msra.mxu0 0.0
      %1413 = vmatprep.subr.mxu0 0.0
      %1414 = vmatpush1.xpose.msra.mxu0 0.0
      %1415 = vmatprep.subr.mxu0 0.0
      %1416 = vmatpush1.xpose.msra.mxu0 0.0
      %1417 = vmatprep.subr.mxu0 0.0
      %1418 = vmatpush1.xpose.msra.mxu0 0.0
      %1419 = vmatprep.subr.mxu0 0.0
      %1420 = vmatpush1.xpose.msra.mxu0 0.0
      %1421 = vmatprep.subr.mxu0 0.0
      %1422 = vmatpush1.xpose.msra.mxu0 0.0
      %1423 = vmatprep.subr.mxu0 0.0
      %1424 = vmatpush1.xpose.msra.mxu0 0.0
      %1425 = vmatprep.subr.mxu0 0.0
      %1426 = vmatpush1.xpose.msra.mxu0 0.0
      %1427 = vmatprep.subr.mxu0 0.0
      %1428 = vmatpush1.xpose.msra.mxu0 0.0
      %1429 = vmatprep.subr.mxu0 0.0
      %1430 = vmatpush1.xpose.msra.mxu0 0.0
      %1431 = vmatprep.subr.mxu0 0.0
      %1432 = vmatpush1.xpose.msra.mxu0 0.0
      %1433 = vmatprep.subr.mxu0 0.0
      %1434 = vmatpush1.xpose.msra.mxu0 0.0
      %1435 = vmatprep.mubr.f32.mxu0 0.0
      %1436 = vmatmul.mubr.f32.gmra.mrb[0].mxu0 %v1367
      %v1437 = vpop.f32.mrb[0].mxu0
      %v1438 = vadd.f32 0.0, %v1437
      %v1439 = vpop.f32.mrb[0].mxu0
      %1440 = vdwg.mxu0
      %v1441 = vmul.f32 %v1438, 0.35355338
      %v1442 = vadd.f32 %v1441, %v926
      %v1443 = vsel %vm846, %v1442, -inf
      %1444 = vmax.xlane.f32.xlu0 %v1443
      %v1445 = vpop.xlane.xlu0 %1444
      %v1446 = vsub.f32 %v1442, %v1445
      %v1447 = vmul.f32 %v1446, 1.442695
      %v1448 = vpow.pop %v1447
      %v1449 = vsel %vm846, %v1448, 0.0
      %1450 = vadd.xlane.f32.xlu0 %v1449
      %v1451 = vpop.xlane.xlu0 %1450
      %v1452 = vrcp.pop %v1451
      %v1453 = vmul.f32 %v1448, %v1452
      %1454 = vrot.lane.b32.xlu0 %v838, 40
      %v1455 = vpop.permute.xlu0 %1454
      %v1458 = vsel %vm846, %v1453, 0
      %1460 = vmatprep.subr.mxu0 0.0
      %1461 = vmatpush1.msra.mxu0 %v1455
      %1462 = vmatprep.subr.mxu0 0.0
      %1463 = vmatpush1.msra.mxu0 0.0
      %1464 = vmatprep.subr.mxu0 0.0
      %1465 = vmatpush1.msra.mxu0 0.0
      %1466 = vmatprep.subr.mxu0 0.0
      %1467 = vmatpush1.msra.mxu0 0.0
      %1468 = vmatprep.subr.mxu0 0.0
      %1469 = vmatpush1.msra.mxu0 0.0
      %1470 = vmatprep.subr.mxu0 0.0
      %1471 = vmatpush1.msra.mxu0 0.0
      %1472 = vmatprep.subr.mxu0 0.0
      %1473 = vmatpush1.msra.mxu0 0.0
      %1474 = vmatprep.subr.mxu0 0.0
      %1475 = vmatpush1.msra.mxu0 0.0
      %1476 = vmatprep.subr.mxu0 0.0
      %1477 = vmatpush1.msra.mxu0 0.0
      %1478 = vmatprep.subr.mxu0 0.0
      %1479 = vmatpush1.msra.mxu0 0.0
      %1480 = vmatprep.subr.mxu0 0.0
      %1481 = vmatpush1.msra.mxu0 0.0
      %1482 = vmatprep.subr.mxu0 0.0
      %1483 = vmatpush1.msra.mxu0 0.0
      %1484 = vmatprep.subr.mxu0 0.0
      %1485 = vmatpush1.msra.mxu0 0.0
      %1486 = vmatprep.subr.mxu0 0.0
      %1487 = vmatpush1.msra.mxu0 0.0
      %1488 = vmatprep.subr.mxu0 0.0
      %1489 = vmatpush1.msra.mxu0 0.0
      %1490 = vmatprep.subr.mxu0 0.0
      %1491 = vmatpush1.msra.mxu0 0.0
      %1492 = vmatprep.subr.mxu0 0.0
      %1493 = vmatpush1.msra.mxu0 0.0
      %1494 = vmatprep.subr.mxu0 0.0
      %1495 = vmatpush1.msra.mxu0 0.0
      %1496 = vmatprep.subr.mxu0 0.0
      %1497 = vmatpush1.msra.mxu0 0.0
      %1498 = vmatprep.subr.mxu0 0.0
      %1499 = vmatpush1.msra.mxu0 0.0
      %1500 = vmatprep.subr.mxu0 0.0
      %1501 = vmatpush1.msra.mxu0 0.0
      %1502 = vmatprep.subr.mxu0 0.0
      %1503 = vmatpush1.msra.mxu0 0.0
      %1504 = vmatprep.subr.mxu0 0.0
      %1505 = vmatpush1.msra.mxu0 0.0
      %1506 = vmatprep.subr.mxu0 0.0
      %1507 = vmatpush1.msra.mxu0 0.0
      %1508 = vmatprep.subr.mxu0 0.0
      %1509 = vmatpush1.msra.mxu0 0.0
      %1510 = vmatprep.subr.mxu0 0.0
      %1511 = vmatpush1.msra.mxu0 0.0
      %1512 = vmatprep.subr.mxu0 0.0
      %1513 = vmatpush1.msra.mxu0 0.0
      %1514 = vmatprep.subr.mxu0 0.0
      %1515 = vmatpush1.msra.mxu0 0.0
      %1516 = vmatprep.subr.mxu0 0.0
      %1517 = vmatpush1.msra.mxu0 0.0
      %1518 = vmatprep.subr.mxu0 0.0
      %1519 = vmatpush1.msra.mxu0 0.0
      %1520 = vmatprep.subr.mxu0 0.0
      %1521 = vmatpush1.msra.mxu0 0.0
      %1522 = vmatprep.subr.mxu0 0.0
      %1523 = vmatpush1.msra.mxu0 0.0
      %1524 = vmatprep.mubr.f32.mxu0 0.0
      %1525 = vmatmul.mubr.f32.gmra.mrb[0].mxu0 %v1458
      %v1526 = vpop.f32.mrb[0].mxu0
      %v1527 = vadd.f32 0.0, %v1526
      %v1528 = vpop.f32.mrb[0].mxu0
      %1529 = vdwg.mxu0
      %1531 = vrot.lane.b32.xlu0 %v1527, 24
      %v1532 = vpop.permute.xlu0 %1531
      %vm1534 = vcmask 261312
      %1535 = vst.msk [vmem:[#allocation3] sm:$0xff] %vm1534, %v1532
      %v1536 = vld [vmem:[#allocation3] sm:$0xff]
      %v1537 = vpack.c.bf16 %v1536, %v1536
      %v1538 = vld [vmem:[%s699] sm:$0xf]
      %v1539 = vld [vmem:[%s699 + $0x4] sm:$0xf]
      %v1540 = vld [vmem:[%s699 + $0x8] sm:$0xf]
      %v1541 = vld [vmem:[%s699 + $0xc] sm:$0xf]
      %v1542 = vld [vmem:[%s702] sm:$0x1]
      %v1544 = vlaneseq
      %v1545 = vshrl.u32 %v1544, 7
      %v1546 = vsub.s32 0, %v1545
      %v1547 = vrot.slane %v1542, %v1546
      %v1553 = vunpack.c.l.b16 %v1538
      %v1554 = vunpack.c.l.b16 %v1539
      %v1555 = vunpack.c.l.b16 %v1540
      %v1556 = vunpack.c.l.b16 %v1541
      %v1557 = vpack.c.b16 %v1554, %v1553
      %v1558 = vpack.c.b16 %v1556, %v1555
      %v1562 = vsel %vm799, %v1537, 0
      %1564 = vmatprep.subr.bf16.mxu0 0
      %1565 = vmatpush1.bf16.msra.mxu0 %v1557
      %1566 = vmatprep.subr.bf16.mxu0 0
      %1567 = vmatpush1.bf16.msra.mxu0 %v1558
      %1568 = vmatprep.subr.bf16.mxu0 0
      %1569 = vmatpush1.bf16.msra.mxu0 0
      %1570 = vmatprep.subr.bf16.mxu0 0
      %1571 = vmatpush1.bf16.msra.mxu0 0
      %1572 = vmatprep.subr.bf16.mxu0 0
      %1573 = vmatpush1.bf16.msra.mxu0 0
      %1574 = vmatprep.subr.bf16.mxu0 0
      %1575 = vmatpush1.bf16.msra.mxu0 0
      %1576 = vmatprep.subr.bf16.mxu0 0
      %1577 = vmatpush1.bf16.msra.mxu0 0
      %1578 = vmatprep.subr.bf16.mxu0 0
      %1579 = vmatpush1.bf16.msra.mxu0 0
      %1580 = vmatprep.subr.bf16.mxu0 0
      %1581 = vmatpush1.bf16.msra.mxu0 0
      %1582 = vmatprep.subr.bf16.mxu0 0
      %1583 = vmatpush1.bf16.msra.mxu0 0
      %1584 = vmatprep.subr.bf16.mxu0 0
      %1585 = vmatpush1.bf16.msra.mxu0 0
      %1586 = vmatprep.subr.bf16.mxu0 0
      %1587 = vmatpush1.bf16.msra.mxu0 0
      %1588 = vmatprep.subr.bf16.mxu0 0
      %1589 = vmatpush1.bf16.msra.mxu0 0
      %1590 = vmatprep.subr.bf16.mxu0 0
      %1591 = vmatpush1.bf16.msra.mxu0 0
      %1592 = vmatprep.subr.bf16.mxu0 0
      %1593 = vmatpush1.bf16.msra.mxu0 0
      %1594 = vmatprep.subr.bf16.mxu0 0
      %1595 = vmatpush1.bf16.msra.mxu0 0
      %1596 = vmatprep.mubr.bf16.mxu0 0
      %1597 = vmatmul.mubr.bf16.gmra.mrb[0].mxu0 %v1562
      %v1598 = vpop.f32.mrb[0].mxu0
      %v1599 = vadd.f32 %v1547, %v1598
      %v1600 = vpop.f32.mrb[0].mxu0
      %v1601 = vpop.f32.mrb[0].mxu0
      %v1602 = vpop.f32.mrb[0].mxu0
      %1603 = vdwg.mxu0
      %v1604 = vadd.f32 %v1599, %v773
      %v1605 = vld [vmem:[%s705] sm:$0x1]
      %v1606 = vld [vmem:[%s708] sm:$0x1]
      %v1607 = vsel %vm799, %v1604, 0.0
      %1608 = vadd.xlane.f32.xlu0 %v1607
      %v1609 = vpop.xlane.xlu0 %1608
      %v1610 = vrcp.pop 32.0
      %v1611 = vmul.f32 %v1609, %v1610
      %v1612 = vsub.f32 %v1604, %v1611
      %v1613 = vmul.f32 %v1612, %v1612
      %v1614 = vsel %vm799, %v1613, 0.0
      %1615 = vadd.xlane.f32.xlu0 %v1614
      %v1616 = vpop.xlane.xlu0 %1615
      %v1617 = vmul.f32 %v1616, %v1610
      %v1618 = vadd.f32 %v1617, 1e-12
      %v1619 = vrsqrt.pop %v1618
      %v1620 = vmul.f32 %v1612, %v1619
      %v1622 = vlaneseq
      %v1623 = vshrl.u32 %v1622, 7
      %v1624 = vsub.s32 0, %v1623
      %v1625 = vrot.slane %v1605, %v1624
      %v1627 = vmul.f32 %v1620, %v1625
      %v1629 = vlaneseq
      %v1630 = vshrl.u32 %v1629, 7
      %v1631 = vsub.s32 0, %v1630
      %v1632 = vrot.slane %v1606, %v1631
      %v1634 = vadd.f32 %v1627, %v1632
      %v1635 = vpack.c.bf16 %v1634, %v1634
      %v1636 = vld [vmem:[%s713] sm:$0xf]
      %v1637 = vld [vmem:[%s713 + $0x4] sm:$0xf]
      %v1638 = vld [vmem:[%s713 + $0x8] sm:$0xf]
      %v1639 = vld [vmem:[%s713 + $0xc] sm:$0xf]
      %v1640 = vld [vmem:[%s716] sm:$0x1]
      %v1642 = vlaneseq
      %v1643 = vshrl.u32 %v1642, 7
      %v1644 = vsub.s32 0, %v1643
      %v1645 = vrot.slane %v1640, %v1644
      %v1651 = vunpack.c.l.b16 %v1636
      %v1652 = vunpack.c.l.b16 %v1637
      %v1653 = vunpack.c.l.b16 %v1638
      %v1654 = vunpack.c.l.b16 %v1639
      %v1655 = vpack.c.b16 %v1652, %v1651
      %v1656 = vpack.c.b16 %v1654, %v1653
      %v1660 = vsel %vm799, %v1635, 0
      %1662 = vmatprep.subr.bf16.mxu0 0
      %1663 = vmatpush1.bf16.msra.mxu0 %v1655
      %1664 = vmatprep.subr.bf16.mxu0 0
      %1665 = vmatpush1.bf16.msra.mxu0 %v1656
      %1666 = vmatprep.subr.bf16.mxu0 0
      %1667 = vmatpush1.bf16.msra.mxu0 0
      %1668 = vmatprep.subr.bf16.mxu0 0
      %1669 = vmatpush1.bf16.msra.mxu0 0
      %1670 = vmatprep.subr.bf16.mxu0 0
      %1671 = vmatpush1.bf16.msra.mxu0 0
      %1672 = vmatprep.subr.bf16.mxu0 0
      %1673 = vmatpush1.bf16.msra.mxu0 0
      %1674 = vmatprep.subr.bf16.mxu0 0
      %1675 = vmatpush1.bf16.msra.mxu0 0
      %1676 = vmatprep.subr.bf16.mxu0 0
      %1677 = vmatpush1.bf16.msra.mxu0 0
      %1678 = vmatprep.subr.bf16.mxu0 0
      %1679 = vmatpush1.bf16.msra.mxu0 0
      %1680 = vmatprep.subr.bf16.mxu0 0
      %1681 = vmatpush1.bf16.msra.mxu0 0
      %1682 = vmatprep.subr.bf16.mxu0 0
      %1683 = vmatpush1.bf16.msra.mxu0 0
      %1684 = vmatprep.subr.bf16.mxu0 0
      %1685 = vmatpush1.bf16.msra.mxu0 0
      %1686 = vmatprep.subr.bf16.mxu0 0
      %1687 = vmatpush1.bf16.msra.mxu0 0
      %1688 = vmatprep.subr.bf16.mxu0 0
      %1689 = vmatpush1.bf16.msra.mxu0 0
      %1690 = vmatprep.subr.bf16.mxu0 0
      %1691 = vmatpush1.bf16.msra.mxu0 0
      %1692 = vmatprep.subr.bf16.mxu0 0
      %1693 = vmatpush1.bf16.msra.mxu0 0
      %1694 = vmatprep.mubr.bf16.mxu0 0
      %1695 = vmatmul.mubr.bf16.gmra.mrb[0].mxu0 %v1660
      %v1696 = vpop.f32.mrb[0].mxu0
      %v1697 = vadd.f32 %v1645, %v1696
      %v1698 = vpop.f32.mrb[0].mxu0
      %v1699 = vpop.f32.mrb[0].mxu0
      %v1700 = vpop.f32.mrb[0].mxu0
      %1701 = vdwg.mxu0
      %v1702 = vmul.f32 %v1697, %v1697
      %v1703 = vmul.f32 %v1697, %v1702
      %v1704 = vmul.f32 %v1703, 0.044715
      %v1705 = vadd.f32 %v1697, %v1704
      %v1706 = vmul.f32 %v1705, 0.7978846
      %v1707 = vtanh.pop %v1706
      %v1708 = vadd.f32 %v1707, 1.0
      %v1709 = vmul.f32 %v1708, 0.5
      %v1710 = vmul.f32 %v1697, %v1709
      %v1711 = vpack.c.bf16 %v1710, %v1710
      %v1712 = vld [vmem:[%s721] sm:$0xf]
      %v1713 = vld [vmem:[%s721 + $0x4] sm:$0xf]
      %v1714 = vld [vmem:[%s721 + $0x8] sm:$0xf]
      %v1715 = vld [vmem:[%s721 + $0xc] sm:$0xf]
      %v1716 = vld [vmem:[%s721 + $0x10] sm:$0xf]
      %v1717 = vld [vmem:[%s721 + $0x14] sm:$0xf]
      %v1718 = vld [vmem:[%s721 + $0x18] sm:$0xf]
      %v1719 = vld [vmem:[%s721 + $0x1c] sm:$0xf]
      %v1720 = vld [vmem:[%s724] sm:$0x1]
      %v1722 = vlaneseq
      %v1723 = vshrl.u32 %v1722, 7
      %v1724 = vsub.s32 0, %v1723
      %v1725 = vrot.slane %v1720, %v1724
      %v1735 = vunpack.c.l.b16 %v1712
      %v1736 = vunpack.c.l.b16 %v1713
      %v1737 = vunpack.c.l.b16 %v1714
      %v1738 = vunpack.c.l.b16 %v1715
      %v1739 = vunpack.c.l.b16 %v1716
      %v1740 = vunpack.c.l.b16 %v1717
      %v1741 = vunpack.c.l.b16 %v1718
      %v1742 = vunpack.c.l.b16 %v1719
      %v1743 = vpack.c.b16 %v1736, %v1735
      %v1744 = vpack.c.b16 %v1738, %v1737
      %v1745 = vpack.c.b16 %v1740, %v1739
      %v1746 = vpack.c.b16 %v1742, %v1741
      %vm1751 = vcmask 523264
      %v1753 = vsel %vm1751, %v1711, 0
      %1755 = vmatprep.subr.bf16.mxu0 0
      %1756 = vmatpush1.bf16.msra.mxu0 %v1743
      %1757 = vmatprep.subr.bf16.mxu0 0
      %1758 = vmatpush1.bf16.msra.mxu0 %v1744
      %1759 = vmatprep.subr.bf16.mxu0 0
      %1760 = vmatpush1.bf16.msra.mxu0 %v1745
      %1761 = vmatprep.subr.bf16.mxu0 0
      %1762 = vmatpush1.bf16.msra.mxu0 %v1746
      %1763 = vmatprep.subr.bf16.mxu0 0
      %1764 = vmatpush1.bf16.msra.mxu0 0
      %1765 = vmatprep.subr.bf16.mxu0 0
      %1766 = vmatpush1.bf16.msra.mxu0 0
      %1767 = vmatprep.subr.bf16.mxu0 0
      %1768 = vmatpush1.bf16.msra.mxu0 0
      %1769 = vmatprep.subr.bf16.mxu0 0
      %1770 = vmatpush1.bf16.msra.mxu0 0
      %1771 = vmatprep.subr.bf16.mxu0 0
      %1772 = vmatpush1.bf16.msra.mxu0 0
      %1773 = vmatprep.subr.bf16.mxu0 0
      %1774 = vmatpush1.bf16.msra.mxu0 0
      %1775 = vmatprep.subr.bf16.mxu0 0
      %1776 = vmatpush1.bf16.msra.mxu0 0
      %1777 = vmatprep.subr.bf16.mxu0 0
      %1778 = vmatpush1.bf16.msra.mxu0 0
      %1779 = vmatprep.subr.bf16.mxu0 0
      %1780 = vmatpush1.bf16.msra.mxu0 0
      %1781 = vmatprep.subr.bf16.mxu0 0
      %1782 = vmatpush1.bf16.msra.mxu0 0
      %1783 = vmatprep.subr.bf16.mxu0 0
      %1784 = vmatpush1.bf16.msra.mxu0 0
      %1785 = vmatprep.subr.bf16.mxu0 0
      %1786 = vmatpush1.bf16.msra.mxu0 0
      %1787 = vmatprep.mubr.bf16.mxu0 0
      %1788 = vmatmul.mubr.bf16.gmra.mrb[0].mxu0 %v1753
      %v1789 = vpop.f32.mrb[0].mxu0
      %v1790 = vadd.f32 %v1725, %v1789
      %v1791 = vpop.f32.mrb[0].mxu0
      %v1792 = vpop.f32.mrb[0].mxu0
      %v1793 = vpop.f32.mrb[0].mxu0
      %1794 = vdwg.mxu0
      %v1795 = vadd.f32 %v1790, %v1634
      %v1796 = vld [vmem:[%s727] sm:$0x1]
      %v1797 = vld [vmem:[%s730] sm:$0x1]
      %v1798 = vsel %vm799, %v1795, 0.0
      %1799 = vadd.xlane.f32.xlu0 %v1798
      %v1800 = vpop.xlane.xlu0 %1799
      %v1801 = vmul.f32 %v1800, %v1610
      %v1802 = vsub.f32 %v1795, %v1801
      %v1803 = vmul.f32 %v1802, %v1802
      %v1804 = vsel %vm799, %v1803, 0.0
      %1805 = vadd.xlane.f32.xlu0 %v1804
      %v1806 = vpop.xlane.xlu0 %1805
      %v1807 = vmul.f32 %v1806, %v1610
      %v1808 = vadd.f32 %v1807, 1e-12
      %v1809 = vrsqrt.pop %v1808
      %v1810 = vmul.f32 %v1802, %v1809
      %v1812 = vlaneseq
      %v1813 = vshrl.u32 %v1812, 7
      %v1814 = vsub.s32 0, %v1813
      %v1815 = vrot.slane %v1796, %v1814
      %v1817 = vmul.f32 %v1810, %v1815
      %v1819 = vlaneseq
      %v1820 = vshrl.u32 %v1819, 7
      %v1821 = vsub.s32 0, %v1820
      %v1822 = vrot.slane %v1797, %v1821
      %v1824 = vadd.f32 %v1817, %v1822
      %1825 = vst.msk [vmem:[#allocation2] sm:$0xff] %vm799, %v1824
      %p1826 = scmp.eq.s32.totalorder %s32, 1
      // Predicated region
      $region89: #{bert_classifier_forward.2} parent=83 // pred_check
        %p1827 = pneg %p1826
      $region90: #{bert_classifier_forward.2} parent=83 // pred_check_branch
        %1829 = sbr.rel (%p1827) target = $region92
      $region91: #{bert_classifier_forward.2} parent=83 // pred_region
        %1830 = vst.msk [vmem:[%s734] sm:$0xff] %vm799, %v1824
      $region92: #{bert_classifier_forward.2} parent=83 // pred_fallthru
        _
      %p1831 = scmp.lt.s32.totalorder %s31, 1
      %s1832 = scalar_select %p1831, %s31, 1
      %s1833 = smul.addr %s1832, 8
      %s1834 = scalar_lea.vmem %s16, %s1833
      // Predicated region
      $region93: #{bert_classifier_forward.2} parent=83 // pred_check
        %p1835 = pneg %p463
      $region94: #{bert_classifier_forward.2} parent=83 // pred_check_branch
        %1837 = sbr.rel (%p1835) target = $region96
      $region95: #{bert_classifier_forward.2} parent=83 // pred_region
        _
      $region96: #{bert_classifier_forward.2} parent=83 // pred_fallthru
        _
    $region84: #{bert_classifier_forward.2} parent=5 // pred_fallthru
      _
    %p1838 = scmp.le.s32.totalorder 2, %s22
    // Predicated region
    $region97: #{bert_classifier_forward.2} parent=5 // pred_check
      %p1839 = pneg %p1838
    $region98: #{bert_classifier_forward.2} parent=5 // pred_check_branch
      %1841 = sbr.rel (%p1839) target = $region100
    $region99: #{bert_classifier_forward.2} parent=5 // pred_region
      %s1842 = ssub.s32 %s22, 2
      // Predicated region
      $region101: #{bert_classifier_forward.2} parent=99 // pred_check
        %p1843 = pneg %p469
      $region102: #{bert_classifier_forward.2} parent=99 // pred_check_branch
        %1845 = sbr.rel (%p1843) target = $region104
      $region103: #{bert_classifier_forward.2} parent=99 // pred_region
        %p1846 = scmp.lt.s32.totalorder %s33, 1
        %s1847 = scalar_select %p1846, %s33, 1
        %s1848 = smul.addr %s1847, 8
        %s1849 = scalar_lea.vmem %s16, %s1848
      $region104: #{bert_classifier_forward.2} parent=99 // pred_fallthru
        _
    $region100: #{bert_classifier_forward.2} parent=5 // pred_fallthru
      _
  $region6: #{bert_classifier_forward.2} parent=0 // loop_footer
    %s26 = sadd.s32 1, %s22
  $region7: #{bert_classifier_forward.2} parent=0 // loop_footer_branch
    %21 = sbr.rel target = $region3
  $region8: #{bert_classifier_forward.2} parent=0 // loop_exit
    _

</llo_original>
